<compile_context>
chip_gen: v5e
topology: v5e:2x2
jax: 0.10.0
libtpu: 0.0.40
codegen_flags: <defaults>
</compile_context>

<pallas_src>
import functools

import jax
import jax.numpy as jnp
from jax import lax
from jax.experimental import pallas as pl
from jax.experimental.pallas import tpu as pltpu


# ----------------------------------------------------------------------------
# helpers
# ----------------------------------------------------------------------------
def _ceil_to(a: int, m: int) -> int:
    return ((a + m - 1) // m) * m


def _vmem_bytes(entries):
    """Rough VMEM footprint: sum of (shape, bytes/elem, #buffers), with the
    minor two dims rounded up to the (8, 128) sublane/lane tiling."""
    total = 0
    for shape, esize, copies in entries:
        dims = list(shape)
        if len(dims) == 1:
            dims = [1] + dims
        lead = 1
        for d in dims[:-2]:
            lead *= d
        total += lead * _ceil_to(dims[-2], 8) * _ceil_to(dims[-1], 128) * esize * copies
    return total


def _vmem_limit(estimated_bytes: int) -> int:
    # Review: derive the scoped-VMEM budget from actual buffer sizes.
    # Floor at 32 MiB (headroom for Mosaic-internal scratch), cap at 64 MiB so
    # the budget also fits v7x's 64 MiB per-TensorCore VMEM.
    return int(min(max(2 * estimated_bytes + (4 << 20), 32 << 20), 64 << 20))


# ----------------------------------------------------------------------------
# kernels
# ----------------------------------------------------------------------------
def _qkv_proj_kernel(x_ref, w_ref, o_ref):
    # (TQ, C) @ (C, 3C) with f32 accumulation, cast to bf16 immediately so no
    # full-sequence f32 QKV transient is ever materialized.
    o_ref[0] = jnp.dot(x_ref[0], w_ref[...],
                       preferred_element_type=jnp.float32).astype(o_ref.dtype)


def _mhsa_proj_kernel(q_ref, k_ref, v_ref, wp_ref, bp_ref, o_ref, *,
                      num_heads, n_valid):
    """One (batch, query-tile) step: batched-over-heads SDPA + output proj."""
    H = num_heads
    _, _, TQ, hd = q_ref.shape
    n_keys = k_ref.shape[2]
    C = o_ref.shape[2]

    q = q_ref[0]          # (H, TQ, hd)   bf16, pre-scaled via the QKV weight
    k = k_ref[0]          # (H, Npad, hd) bf16
    v = v_ref[0]          # (H, Npad, hd) bf16

    # Batched-over-heads QK^T: single lane-dense MXU contraction, f32 scores.
    s = jnp.einsum('hqd,hkd->hqk', q, k, preferred_element_type=jnp.float32)

    # Key-side padding mask (static condition: emitted only when N was padded).
    if n_valid < n_keys:
        key_idx = lax.broadcasted_iota(jnp.int32, s.shape, dimension=2)
        s = jnp.where(key_idx < n_valid, s, -1e30)

    # f32 softmax; denominator reciprocal on the EUP (approx, ~free slot).
    s = s - jnp.max(s, axis=-1, keepdims=True)
    p = jnp.exp(s)
    p = p * pl.reciprocal(jnp.sum(p, axis=-1, keepdims=True), approx=True)

    # Batched-over-heads P @ V -> per-head context (f32 accumulation).
    ctx = jnp.einsum('hqk,hkd->hqd', p.astype(jnp.bfloat16), v,
                     preferred_element_type=jnp.float32)      # (H, TQ, hd)
    ctx_b = ctx.astype(jnp.bfloat16)

    # Output projection accumulated per head: ctx[h] (TQ, hd) @ wp[h] (hd, C).
    # Leading-axis slices are lane-dense (C / hd full-width rows); avoids both
    # the old bf16 acc_scr slab and any in-kernel (H,TQ,hd)->(TQ,C) transpose.
    acc = jnp.zeros((TQ, C), jnp.float32)
    for h in range(H):                 # static unroll; H is small (4..16)
        acc = acc + jnp.dot(ctx_b[h], wp_ref[h],
                            preferred_element_type=jnp.float32)

    o_ref[0] = (acc + bp_ref[...]).astype(o_ref.dtype)

    # TODO(synk): attn_drop / proj_drop are identity at p=0.0 (eval); no RNG.


# ----------------------------------------------------------------------------
# wrapper
# ----------------------------------------------------------------------------
@functools.partial(jax.jit, static_argnames=("num_heads", "q_tile"))
def attention_forward(x, w_qkv, w_proj, b_proj, *, num_heads, q_tile=None):
    """DINOv2 Attention.forward.

    x: (B, N, C).  w_qkv: (3C, C) torch nn.Linear layout (qkv_bias=False).
    w_proj: (C, C).  b_proj: (C,).
    """
    B, N, C = x.shape
    assert C % num_heads == 0, "C must be divisible by num_heads"
    H = num_heads
    hd = C // H
    scale = hd ** -0.5            # == module's self.scale == SDPA default

    if q_tile is None:
        # 128 is safe on every generation; on v6e/v7x with large N, 256 fills
        # the 2x256^2 MXU better (re-check VMEM on v7x before raising).
        q_tile = 128
    n_pad = _ceil_to(max(N, 8), q_tile)
    num_q_tiles = n_pad // q_tile

    # --- parameters: torch Linear weights are (out, in); transpose so kernels
    # compute x @ W.  Fold the attention scale into the Q columns (exact, f32)
    # and ship all weights to VMEM in bf16 (MXU-native).
    wqkv = jnp.asarray(w_qkv, jnp.float32).T                        # (C, 3C)
    wqkv = wqkv.at[:, :C].multiply(scale).astype(jnp.bfloat16)
    wp_h = jnp.asarray(w_proj, jnp.float32).T.reshape(H, hd, C).astype(jnp.bfloat16)
    bp = jnp.asarray(b_proj, jnp.float32).reshape(1, C)

    # --- x: bf16 (halves the HBM->VMEM DMA); zero-pad N to a tile multiple.
    xb = x.astype(jnp.bfloat16)
    if n_pad != N:
        xb = jnp.pad(xb, ((0, 0), (0, n_pad - N), (0, 0)))

    # ------------------------------------------------------------------ QKV
    qkv_cost = pl.CostEstimate(
        flops=2 * B * n_pad * C * 3 * C,
        transcendentals=0,
        bytes_accessed=(B * n_pad * C * 2 + C * 3 * C * 2 + B * n_pad * 3 * C * 2))
    qkv_vmem = _vmem_bytes([
        ((q_tile, C), 2, 2),            # x block (double-buffered)
        ((C, 3 * C), 2, 1),             # wqkv (single-buffered)
        ((q_tile, 3 * C), 2, 2),        # out block
        ((q_tile, 3 * C), 4, 1),        # f32 matmul transient
    ])
    qkv = pl.pallas_call(
        _qkv_proj_kernel,
        out_shape=jax.ShapeDtypeStruct((B, n_pad, 3 * C), jnp.bfloat16),
        grid_spec=pltpu.PrefetchScalarGridSpec(
            num_scalar_prefetch=0,
            grid=(B, num_q_tiles),
            in_specs=[
                pl.BlockSpec((1, q_tile, C), lambda b, i: (b, i, 0)),
                pl.BlockSpec((C, 3 * C), lambda b, i: (0, 0),
                             pipeline_mode=pl.Buffered(1)),
            ],
            out_specs=pl.BlockSpec((1, q_tile, 3 * C), lambda b, i: (b, i, 0)),
        ),
        compiler_params=pltpu.CompilerParams(
            dimension_semantics=("parallel", "parallel"),
            vmem_limit_bytes=_vmem_limit(qkv_vmem)),
        cost_estimate=qkv_cost,
    )(xb, wqkv)

    # Head split: cheap XLA layout ops between the two pallas_calls.
    qkv = qkv.reshape(B, n_pad, 3, H, hd)
    q = jnp.transpose(qkv[:, :, 0], (0, 2, 1, 3))    # (B, H, Npad, hd), scaled
    k = jnp.transpose(qkv[:, :, 1], (0, 2, 1, 3))
    v = jnp.transpose(qkv[:, :, 2], (0, 2, 1, 3))

    # ------------------------------------------------- attention + projection
    out_isize = jnp.dtype(x.dtype).itemsize
    attn_cost = pl.CostEstimate(
        flops=4 * B * H * n_pad * n_pad * hd + 2 * B * n_pad * C * C,
        transcendentals=B * H * n_pad * n_pad,
        bytes_accessed=(3 * B * H * n_pad * hd * 2 + C * C * 2 + C * 4
                        + B * n_pad * C * out_isize))
    attn_vmem = _vmem_bytes([
        ((H, q_tile, hd), 2, 2),        # q block
        ((H, n_pad, hd), 2, 4),         # k + v blocks (double-buffered)
        ((H, hd, C), 2, 1),             # proj weight (single-buffered)
        ((1, C), 4, 1),                 # proj bias
        ((q_tile, C), out_isize, 2),    # out block
        ((H, q_tile, n_pad), 4, 1),     # f32 scores
        ((H, q_tile, n_pad), 2, 1),     # bf16 probs
        ((H, q_tile, hd), 4, 1),        # f32 context
        ((q_tile, C), 4, 1),            # f32 projection accumulator
    ])
    kernel = functools.partial(_mhsa_proj_kernel, num_heads=H, n_valid=N)
    out = pl.pallas_call(
        kernel,
        out_shape=jax.ShapeDtypeStruct((B, n_pad, C), x.dtype),
        grid_spec=pltpu.PrefetchScalarGridSpec(
            num_scalar_prefetch=0,
            grid=(B, num_q_tiles),
            in_specs=[
                pl.BlockSpec((1, H, q_tile, hd), lambda b, i: (b, 0, i, 0)),
                pl.BlockSpec((1, H, n_pad, hd), lambda b, i: (b, 0, 0, 0)),
                pl.BlockSpec((1, H, n_pad, hd), lambda b, i: (b, 0, 0, 0)),
                pl.BlockSpec((H, hd, C), lambda b, i: (0, 0, 0),
                             pipeline_mode=pl.Buffered(1)),
                pl.BlockSpec((1, C), lambda b, i: (0, 0),
                             pipeline_mode=pl.Buffered(1)),
            ],
            out_specs=pl.BlockSpec((1, q_tile, C), lambda b, i: (b, i, 0)),
        ),
        compiler_params=pltpu.CompilerParams(
            # No cross-iteration scratch anymore -> both axes shard across
            # TensorCores (v7x: 2 TCs/chip even at B=1).
            dimension_semantics=("parallel", "parallel"),
            vmem_limit_bytes=_vmem_limit(attn_vmem)),
        cost_estimate=attn_cost,
    )(q, k, v, wp_h, bp)

    if n_pad != N:
        out = out[:, :N, :]
    return out


# ----------------------------------------------------------------------------
# plain-JAX f32 reference (mirrors the PyTorch forward) for self-check
# ----------------------------------------------------------------------------
def _reference_forward(x, w_qkv, w_proj, b_proj, num_heads):
    B, N, C = x.shape
    hd = C // num_heads
    qkv = jnp.einsum('bnc,oc->bno', x, w_qkv)                      # (B, N, 3C)
    qkv = qkv.reshape(B, N, 3, num_heads, hd).transpose(2, 0, 3, 1, 4)
    q, k, v = qkv[0], qkv[1], qkv[2]                               # (B, H, N, hd)
    s = jnp.einsum('bhqd,bhkd->bhqk', q, k) * (hd ** -0.5)
    p = jax.nn.softmax(s, axis=-1)
    o = jnp.einsum('bhqk,bhkd->bhqd', p, v)
    o = o.transpose(0, 2, 1, 3).reshape(B, N, C)
    return jnp.einsum('bnc,oc->bno', o, w_proj) + b_proj


if __name__ == "__main__":
    B, C, H = 2, 128, 4                 # head_dim = 32

    key = jax.random.PRNGKey(0)
    k_x, k_qkv, k_pw, k_pb = jax.random.split(key, 4)

    # Deterministic synthetic parameters (torch nn.Linear weight layout: (out, in)).
    w_qkv = jax.random.normal(k_qkv, (3 * C, C), dtype=jnp.float32) * 0.05
    w_proj = jax.random.normal(k_pw, (C, C), dtype=jnp.float32) * 0.05
    b_proj = jax.random.normal(k_pb, (C,), dtype=jnp.float32) * 0.05

    # N=128 exercises the tile-aligned path; N=100 exercises key-pad masking.
    for N in (128, 100):
        x = jax.random.normal(k_x, (B, N, C), dtype=jnp.float32)

        out = attention_forward(x, w_qkv, w_proj, b_proj, num_heads=H)
        out = jax.block_until_ready(out)

        ref = _reference_forward(x, w_qkv, w_proj, b_proj, H)
        assert out.shape == (B, N, C)
        max_err = float(jnp.max(jnp.abs(out - ref)))
        # bf16 MXU inputs (f32 accumulation) + approx reciprocal -> loose tol.
        assert jnp.allclose(out, ref, atol=3e-2, rtol=3e-2), \
            f"N={N}: mismatch vs reference (max abs err {max_err})"

    print("KERNEL_OK")
</pallas_src>

<mosaic_0001>
module attributes {stable_mosaic.version = 11 : i64} {
  func.func @_qkv_proj_kernel(%arg0: i32, %arg1: i32, %arg2: memref<1x128x128xbf16, #tpu.memory_space<vmem>>, %arg3: memref<128x384xbf16, #tpu.memory_space<vmem>>, %arg4: memref<1x128x384xbf16, #tpu.memory_space<vmem>>) attributes {dimension_semantics = [#tpu.dimension_semantics<parallel>, #tpu.dimension_semantics<parallel>], iteration_bounds = array<i64: 2, 1>, scalar_prefetch = 0 : i64, scratch_operands = 0 : i64, tpu.core_type = #tpu.core_type<tc>, window_params = [{transform_indices = @transform_0, window_bounds = array<i64: 1, 128, 128>}, {pipeline_mode = #tpu.pipeline_mode<synchronous>, transform_indices = @transform_1, window_bounds = array<i64: 128, 384>}, {transform_indices = @transform_2, window_bounds = array<i64: 1, 128, 384>}]} {
    %c0 = arith.constant 0 : index
    %c0_0 = arith.constant 0 : index
    %c0_1 = arith.constant 0 : index
    %0 = vector.load %arg2[%c0, %c0_0, %c0_1] : memref<1x128x128xbf16, #tpu.memory_space<vmem>>, vector<1x128x128xbf16>
    %1 = vector.shape_cast %0 : vector<1x128x128xbf16> to vector<128x128xbf16>
    %c0_2 = arith.constant 0 : index
    %c0_3 = arith.constant 0 : index
    %2 = vector.load %arg3[%c0_2, %c0_3] : memref<128x384xbf16, #tpu.memory_space<vmem>>, vector<128x384xbf16>
    %cst = arith.constant dense<0.000000e+00> : vector<128x384xf32>
    %3 = tpu.matmul %1, %2, %cst {dimension_numbers = #tpu.dot_dimension_numbers<[1], [0], [0], [1], [0, 0, 1, 1], [], []>} : vector<128x128xbf16>, vector<128x384xbf16>, vector<128x384xf32> -> vector<128x384xf32>
    %4 = arith.truncf %3 : vector<128x384xf32> to vector<128x384xbf16>
    %c0_4 = arith.constant 0 : index
    %c0_5 = arith.constant 0 : index
    %c0_6 = arith.constant 0 : index
    %5 = vector.load %arg4[%c0_4, %c0_5, %c0_6] : memref<1x128x384xbf16, #tpu.memory_space<vmem>>, vector<1x128x384xbf16>
    %6 = vector.shape_cast %5 : vector<1x128x384xbf16> to vector<128x384xbf16>
    %7 = vector.shape_cast %4 : vector<128x384xbf16> to vector<1x128x384xbf16>
    tpu.vector_store %arg4[%c0_4, %c0_5, %c0_6], %7 {strides = array<i32>} : memref<1x128x384xbf16, #tpu.memory_space<vmem>>, vector<1x128x384xbf16>,
    return
  }
  func.func @transform_0(%arg0: i32, %arg1: i32) -> (i32, i32, i32) {
    %c0_i32 = arith.constant 0 : i32
    %c0_i32_0 = arith.constant 0 : i32
    return %arg0, %arg1, %c0_i32 : i32, i32, i32
  }
  func.func @transform_1(%arg0: i32, %arg1: i32) -> (i32, i32) {
    %c0_i32 = arith.constant 0 : i32
    %c0_i32_0 = arith.constant 0 : i32
    %c0_i32_1 = arith.constant 0 : i32
    return %c0_i32, %c0_i32_0 : i32, i32
  }
  func.func @transform_2(%arg0: i32, %arg1: i32) -> (i32, i32, i32) {
    %c0_i32 = arith.constant 0 : i32
    %c0_i32_0 = arith.constant 0 : i32
    return %arg0, %arg1, %c0_i32 : i32, i32, i32
  }
}

module attributes {stable_mosaic.version = 11 : i64} {
  func.func @_mhsa_proj_kernel(%arg0: i32, %arg1: i32, %arg2: memref<1x4x128x32xbf16, #tpu.memory_space<vmem>>, %arg3: memref<1x4x128x32xbf16, #tpu.memory_space<vmem>>, %arg4: memref<1x4x128x32xbf16, #tpu.memory_space<vmem>>, %arg5: memref<4x32x128xbf16, #tpu.memory_space<vmem>>, %arg6: memref<1x128xf32, #tpu.memory_space<vmem>>, %arg7: memref<1x128x128xf32, #tpu.memory_space<vmem>>) attributes {dimension_semantics = [#tpu.dimension_semantics<parallel>, #tpu.dimension_semantics<parallel>], iteration_bounds = array<i64: 2, 1>, scalar_prefetch = 0 : i64, scratch_operands = 0 : i64, tpu.core_type = #tpu.core_type<tc>, window_params = [{transform_indices = @transform_0, window_bounds = array<i64: 1, 4, 128, 32>}, {transform_indices = @transform_1, window_bounds = array<i64: 1, 4, 128, 32>}, {transform_indices = @transform_2, window_bounds = array<i64: 1, 4, 128, 32>}, {pipeline_mode = #tpu.pipeline_mode<synchronous>, transform_indices = @transform_3, window_bounds = array<i64: 4, 32, 128>}, {pipeline_mode = #tpu.pipeline_mode<synchronous>, transform_indices = @transform_4, window_bounds = array<i64: 1, 128>}, {transform_indices = @transform_5, window_bounds = array<i64: 1, 128, 128>}]} {
    %c0 = arith.constant 0 : index
    %c0_0 = arith.constant 0 : index
    %c0_1 = arith.constant 0 : index
    %c0_2 = arith.constant 0 : index
    %0 = vector.load %arg2[%c0, %c0_0, %c0_1, %c0_2] : memref<1x4x128x32xbf16, #tpu.memory_space<vmem>>, vector<1x4x128x32xbf16>
    %1 = vector.shape_cast %0 : vector<1x4x128x32xbf16> to vector<4x128x32xbf16>
    %c0_3 = arith.constant 0 : index
    %c0_4 = arith.constant 0 : index
    %c0_5 = arith.constant 0 : index
    %c0_6 = arith.constant 0 : index
    %2 = vector.load %arg3[%c0_3, %c0_4, %c0_5, %c0_6] : memref<1x4x128x32xbf16, #tpu.memory_space<vmem>>, vector<1x4x128x32xbf16>
    %3 = vector.shape_cast %2 : vector<1x4x128x32xbf16> to vector<4x128x32xbf16>
    %c0_7 = arith.constant 0 : index
    %c0_8 = arith.constant 0 : index
    %c0_9 = arith.constant 0 : index
    %c0_10 = arith.constant 0 : index
    %4 = vector.load %arg4[%c0_7, %c0_8, %c0_9, %c0_10] : memref<1x4x128x32xbf16, #tpu.memory_space<vmem>>, vector<1x4x128x32xbf16>
    %5 = vector.shape_cast %4 : vector<1x4x128x32xbf16> to vector<4x128x32xbf16>
    "tpu.trace_start"() <{level = 10 : i32, message = "hqd,hkd->hqk"}> : () -> ()
    %cst = arith.constant dense<0.000000e+00> : vector<4x128x128xf32>
    %6 = tpu.matmul %1, %3, %cst {dimension_numbers = #tpu.dot_dimension_numbers<[2], [2], [1], [1], [0, 0, 0, 1, 1, 1], [0], [0]>} : vector<4x128x32xbf16>, vector<4x128x32xbf16>, vector<4x128x128xf32> -> vector<4x128x128xf32>
    "tpu.trace_stop"() : () -> ()
    %cst_11 = arith.constant dense<0xFF800000> : vector<4x128xf32>
    %7 = vector.multi_reduction <maximumf>, %6, %cst_11 [2] : vector<4x128x128xf32> to vector<4x128xf32>
    %8 = vector.shape_cast %7 : vector<4x128xf32> to vector<4x128x1xf32>
    %9 = vector.broadcast %8 : vector<4x128x1xf32> to vector<4x128x128xf32>
    %10 = arith.subf %6, %9 : vector<4x128x128xf32>
    %11 = math.exp %10 : vector<4x128x128xf32>
    %cst_12 = arith.constant dense<0.000000e+00> : vector<4x128xf32>
    %12 = vector.multi_reduction <add>, %11, %cst_12 [2] : vector<4x128x128xf32> to vector<4x128xf32>
    %13 = vector.shape_cast %12 : vector<4x128xf32> to vector<4x128x1xf32>
    %14 = tpu.reciprocal %13 {approx = true} : vector<4x128x1xf32> -> vector<4x128x1xf32>
    %15 = vector.broadcast %14 : vector<4x128x1xf32> to vector<4x128x128xf32>
    %16 = arith.mulf %11, %15 : vector<4x128x128xf32>
    %17 = arith.truncf %16 : vector<4x128x128xf32> to vector<4x128x128xbf16>
    "tpu.trace_start"() <{level = 10 : i32, message = "hqk,hkd->hqd"}> : () -> ()
    %cst_13 = arith.constant dense<0.000000e+00> : vector<4x128x32xf32>
    %18 = tpu.matmul %17, %5, %cst_13 {dimension_numbers = #tpu.dot_dimension_numbers<[2], [1], [1], [2], [0, 0, 0, 1, 1, 2], [0], [0]>} : vector<4x128x128xbf16>, vector<4x128x32xbf16>, vector<4x128x32xf32> -> vector<4x128x32xf32>
    "tpu.trace_stop"() : () -> ()
    %19 = arith.truncf %18 : vector<4x128x32xf32> to vector<4x128x32xbf16>
    %cst_14 = arith.constant 0.000000e+00 : f32
    %20 = vector.broadcast %cst_14 : f32 to vector<128x128xf32>
    %21 = vector.extract_strided_slice %19 {offsets = [0, 0, 0], sizes = [1, 128, 32], strides = [1, 1, 1]} : vector<4x128x32xbf16> to vector<1x128x32xbf16>
    %22 = vector.shape_cast %21 : vector<1x128x32xbf16> to vector<128x32xbf16>
    %c0_15 = arith.constant 0 : index
    %c0_16 = arith.constant 0 : index
    %c0_17 = arith.constant 0 : index
    %23 = vector.load %arg5[%c0_15, %c0_16, %c0_17] : memref<4x32x128xbf16, #tpu.memory_space<vmem>>, vector<1x32x128xbf16>
    %24 = vector.shape_cast %23 : vector<1x32x128xbf16> to vector<32x128xbf16>
    %cst_18 = arith.constant dense<0.000000e+00> : vector<128x128xf32>
    %25 = tpu.matmul %22, %24, %cst_18 {dimension_numbers = #tpu.dot_dimension_numbers<[1], [0], [0], [1], [0, 0, 1, 1], [], []>} : vector<128x32xbf16>, vector<32x128xbf16>, vector<128x128xf32> -> vector<128x128xf32>
    %26 = arith.addf %20, %25 : vector<128x128xf32>
    %27 = vector.extract_strided_slice %19 {offsets = [1, 0, 0], sizes = [1, 128, 32], strides = [1, 1, 1]} : vector<4x128x32xbf16> to vector<1x128x32xbf16>
    %28 = vector.shape_cast %27 : vector<1x128x32xbf16> to vector<128x32xbf16>
    %c1 = arith.constant 1 : index
    %c0_19 = arith.constant 0 : index
    %c0_20 = arith.constant 0 : index
    %29 = vector.load %arg5[%c1, %c0_19, %c0_20] : memref<4x32x128xbf16, #tpu.memory_space<vmem>>, vector<1x32x128xbf16>
    %30 = vector.shape_cast %29 : vector<1x32x128xbf16> to vector<32x128xbf16>
    %cst_21 = arith.constant dense<0.000000e+00> : vector<128x128xf32>
    %31 = tpu.matmul %28, %30, %cst_21 {dimension_numbers = #tpu.dot_dimension_numbers<[1], [0], [0], [1], [0, 0, 1, 1], [], []>} : vector<128x32xbf16>, vector<32x128xbf16>, vector<128x128xf32> -> vector<128x128xf32>
    %32 = arith.addf %26, %31 : vector<128x128xf32>
    %33 = vector.extract_strided_slice %19 {offsets = [2, 0, 0], sizes = [1, 128, 32], strides = [1, 1, 1]} : vector<4x128x32xbf16> to vector<1x128x32xbf16>
    %34 = vector.shape_cast %33 : vector<1x128x32xbf16> to vector<128x32xbf16>
    %c2 = arith.constant 2 : index
    %c0_22 = arith.constant 0 : index
    %c0_23 = arith.constant 0 : index
    %35 = vector.load %arg5[%c2, %c0_22, %c0_23] : memref<4x32x128xbf16, #tpu.memory_space<vmem>>, vector<1x32x128xbf16>
    %36 = vector.shape_cast %35 : vector<1x32x128xbf16> to vector<32x128xbf16>
    %cst_24 = arith.constant dense<0.000000e+00> : vector<128x128xf32>
    %37 = tpu.matmul %34, %36, %cst_24 {dimension_numbers = #tpu.dot_dimension_numbers<[1], [0], [0], [1], [0, 0, 1, 1], [], []>} : vector<128x32xbf16>, vector<32x128xbf16>, vector<128x128xf32> -> vector<128x128xf32>
    %38 = arith.addf %32, %37 : vector<128x128xf32>
    %39 = vector.extract_strided_slice %19 {offsets = [3, 0, 0], sizes = [1, 128, 32], strides = [1, 1, 1]} : vector<4x128x32xbf16> to vector<1x128x32xbf16>
    %40 = vector.shape_cast %39 : vector<1x128x32xbf16> to vector<128x32xbf16>
    %c3 = arith.constant 3 : index
    %c0_25 = arith.constant 0 : index
    %c0_26 = arith.constant 0 : index
    %41 = vector.load %arg5[%c3, %c0_25, %c0_26] : memref<4x32x128xbf16, #tpu.memory_space<vmem>>, vector<1x32x128xbf16>
    %42 = vector.shape_cast %41 : vector<1x32x128xbf16> to vector<32x128xbf16>
    %cst_27 = arith.constant dense<0.000000e+00> : vector<128x128xf32>
    %43 = tpu.matmul %40, %42, %cst_27 {dimension_numbers = #tpu.dot_dimension_numbers<[1], [0], [0], [1], [0, 0, 1, 1], [], []>} : vector<128x32xbf16>, vector<32x128xbf16>, vector<128x128xf32> -> vector<128x128xf32>
    %44 = arith.addf %38, %43 : vector<128x128xf32>
    %c0_28 = arith.constant 0 : index
    %c0_29 = arith.constant 0 : index
    %45 = vector.load %arg6[%c0_28, %c0_29] : memref<1x128xf32, #tpu.memory_space<vmem>>, vector<1x128xf32>
    %46 = vector.broadcast %45 : vector<1x128xf32> to vector<128x128xf32>
    %47 = arith.addf %44, %46 : vector<128x128xf32>
    %c0_30 = arith.constant 0 : index
    %c0_31 = arith.constant 0 : index
    %c0_32 = arith.constant 0 : index
    %48 = vector.load %arg7[%c0_30, %c0_31, %c0_32] : memref<1x128x128xf32, #tpu.memory_space<vmem>>, vector<1x128x128xf32>
    %49 = vector.shape_cast %48 : vector<1x128x128xf32> to vector<128x128xf32>
    %50 = vector.shape_cast %47 : vector<128x128xf32> to vector<1x128x128xf32>
    tpu.vector_store %arg7[%c0_30, %c0_31, %c0_32], %50 {strides = array<i32>} : memref<1x128x128xf32, #tpu.memory_space<vmem>>, vector<1x128x128xf32>,
    return
  }
  func.func @transform_0(%arg0: i32, %arg1: i32) -> (i32, i32, i32, i32) {
    %c0_i32 = arith.constant 0 : i32
    %c0_i32_0 = arith.constant 0 : i32
    %c0_i32_1 = arith.constant 0 : i32
    return %arg0, %c0_i32, %arg1, %c0_i32_0 : i32, i32, i32, i32
  }
  func.func @transform_1(%arg0: i32, %arg1: i32) -> (i32, i32, i32, i32) {
    %c0_i32 = arith.constant 0 : i32
    %c0_i32_0 = arith.constant 0 : i32
    %c0_i32_1 = arith.constant 0 : i32
    %c0_i32_2 = arith.constant 0 : i32
    return %arg0, %c0_i32, %c0_i32_0, %c0_i32_1 : i32, i32, i32, i32
  }
  func.func @transform_2(%arg0: i32, %arg1: i32) -> (i32, i32, i32, i32) {
    %c0_i32 = arith.constant 0 : i32
    %c0_i32_0 = arith.constant 0 : i32
    %c0_i32_1 = arith.constant 0 : i32
    %c0_i32_2 = arith.constant 0 : i32
    return %arg0, %c0_i32, %c0_i32_0, %c0_i32_1 : i32, i32, i32, i32
  }
  func.func @transform_3(%arg0: i32, %arg1: i32) -> (i32, i32, i32) {
    %c0_i32 = arith.constant 0 : i32
    %c0_i32_0 = arith.constant 0 : i32
    %c0_i32_1 = arith.constant 0 : i32
    %c0_i32_2 = arith.constant 0 : i32
    return %c0_i32, %c0_i32_0, %c0_i32_1 : i32, i32, i32
  }
  func.func @transform_4(%arg0: i32, %arg1: i32) -> (i32, i32) {
    %c0_i32 = arith.constant 0 : i32
    %c0_i32_0 = arith.constant 0 : i32
    %c0_i32_1 = arith.constant 0 : i32
    return %c0_i32, %c0_i32_0 : i32, i32
  }
  func.func @transform_5(%arg0: i32, %arg1: i32) -> (i32, i32, i32) {
    %c0_i32 = arith.constant 0 : i32
    %c0_i32_0 = arith.constant 0 : i32
    return %arg0, %arg1, %c0_i32 : i32, i32, i32
  }
}

</mosaic_0001>

<llo_original>
// kernel: attention_forward.2
$region0: #{attention_forward.2}
  #allocation0 [shape = 'u32[]', space=smem, size = 0x4, offset = 0x4, fixed_abs, tag = 'smem constant byte address 0x4 - core index']
  #allocation1 [shape = 'u32[72,128]{1,0:T(1,128)}', space=vmem, size = 0x9000, scoped, tag = 'internal scratch']
  %s0 = inlined_call_operand.vmem [shape: bf16[2,128,128], index: 0, kind: input, shape index: {}]
  %s1 = inlined_call_operand.vmem [shape: bf16[128,384], index: 1, kind: input, shape index: {}]
  %s2 = inlined_call_operand.vmem [shape: bf16[2,128,384], index: 2, kind: output, shape index: {}]
  %s3 = sld [smem:[#allocation0]]
  $region41: #{attention_forward.2} parent=0
    _
  %s5 = ssub.s32 1, %s3
  %s6 = scalar_select 0, %s5, %s3
  loop: start=0, step=1, limit=4
  $region2: #{attention_forward.2} parent=0 // loop_pre_header
    _
  $region3: #{attention_forward.2} parent=0 // loop_header
    %s8 = sphi 0, %s12
    %p9 = scmp.ge.s32.totalorder %s8, 4
    %s15 = sphi 0, %s27
    %s16 = sphi 0, %s23
    %s17 = sphi 0, %s15
    %s18 = sphi 0, %s16
    %s19 = sphi 0, %s17
    %s20 = sphi 0, %s18
    %s32 = sphi 0, %s34
    %s35 = sphi 0, %s32
    %s36 = sphi 0, %s35
    %s52 = sphi 0, %s36
    %s56 = sphi 0, %s56
    %s58 = sphi 0, %s56
    %s59 = sphi 0, %s58
    %s73 = sphi 0, %s59
    %s81 = sphi 0, %s83
    %s84 = sphi 0, %s81
    %s85 = sphi 0, %s84
    %s101 = sphi 0, %s85
  $region4: #{attention_forward.2} parent=0 // loop_header_branch
    %11 = sbr.rel (%p9) target = $region8
  $region5: #{attention_forward.2} parent=0 // loop_body
    %s13 = ssub.s32 %s8, 1
    %s14 = ssub.s32 %s8, 2
    %s21 = sadd.s32 1, %s16
    %p22 = scmp.ge.s32.totalorder %s21, 1
    %s23 = scalar_select %p22, 0, %s21
    %s24 = sadd.s32 1, %s15
    %s25 = scalar_select %p22, %s24, %s15
    %p26 = scmp.ge.s32.totalorder %s25, 2
    %s27 = scalar_select %p26, 0, %s25
    %s28 = ssub.s32 %s15, %s27
    %s29 = ssub.s32 %s16, %s23
    %s30 = sor.u32 %s28, %s29
    %p31 = scmp.eq.s32.totalorder %s30, 0
    %s33 = sadd.s32 %s32, 1
    %s34 = scalar_select %p31, %s32, %s33
    %p37 = pneg %p31
    %p38 = scmp.eq.s32.totalorder %s8, 1
    %p39 = por %p37, %p38
    %p40 = scmp.ne.s32.totalorder %s32, %s35
    %p41 = scmp.eq.s32.totalorder %s8, 0
    %p42 = por %p40, %p41
    %p43 = scmp.ne.s32.totalorder %s32, %s35
    %p44 = scmp.eq.s32.totalorder %s13, 1
    %p45 = por %p43, %p44
    %p46 = scmp.ne.s32.totalorder %s35, %s36
    %p47 = scmp.eq.s32.totalorder %s13, 0
    %p48 = por %p46, %p47
    %p49 = scmp.ne.s32.totalorder %s35, %s36
    %p50 = scmp.eq.s32.totalorder %s14, 1
    %p51 = por %p49, %p50
    %p53 = scmp.ne.s32.totalorder %s36, %s52
    %p54 = scmp.eq.s32.totalorder %s14, 0
    %p55 = por %p53, %p54
    %s57 = sadd.s32 %s56, 1
    %p60 = scmp.eq.s32.totalorder %s8, 1
    %p61 = scmp.ne.s32.totalorder %s56, %s58
    %p62 = scmp.eq.s32.totalorder %s8, 0
    %p63 = por %p61, %p62
    %p64 = scmp.ne.s32.totalorder %s56, %s58
    %p65 = scmp.eq.s32.totalorder %s13, 1
    %p66 = por %p64, %p65
    %p67 = scmp.ne.s32.totalorder %s58, %s59
    %p68 = scmp.eq.s32.totalorder %s13, 0
    %p69 = por %p67, %p68
    %p70 = scmp.ne.s32.totalorder %s58, %s59
    %p71 = scmp.eq.s32.totalorder %s14, 1
    %p72 = por %p70, %p71
    %p74 = scmp.ne.s32.totalorder %s59, %s73
    %p75 = scmp.eq.s32.totalorder %s14, 0
    %p76 = por %p74, %p75
    %s77 = ssub.s32 %s15, %s27
    %s78 = ssub.s32 %s16, %s23
    %s79 = sor.u32 %s77, %s78
    %p80 = scmp.eq.s32.totalorder %s79, 0
    %s82 = sadd.s32 %s81, 1
    %s83 = scalar_select %p80, %s81, %s82
    %p86 = pneg %p80
    %p87 = scmp.eq.s32.totalorder %s8, 1
    %p88 = por %p86, %p87
    %p89 = scmp.ne.s32.totalorder %s81, %s84
    %p90 = scmp.eq.s32.totalorder %s8, 0
    %p91 = por %p89, %p90
    %p92 = scmp.ne.s32.totalorder %s81, %s84
    %p93 = scmp.eq.s32.totalorder %s13, 1
    %p94 = por %p92, %p93
    %p95 = scmp.ne.s32.totalorder %s84, %s85
    %p96 = scmp.eq.s32.totalorder %s13, 0
    %p97 = por %p95, %p96
    %p98 = scmp.ne.s32.totalorder %s84, %s85
    %p99 = scmp.eq.s32.totalorder %s14, 1
    %p100 = por %p98, %p99
    %p102 = scmp.ne.s32.totalorder %s85, %s101
    %p103 = scmp.eq.s32.totalorder %s14, 0
    %p104 = por %p102, %p103
    %p105 = scmp.le.s32.totalorder 1, %s8
    %p106 = scmp.lt.s32.totalorder %s8, 3
    %p107 = pnand %p105, %p106
    %p108 = pneg %p107
    // Predicated region
    $region9: #{attention_forward.2} parent=5 // pred_check
      _
    $region10: #{attention_forward.2} parent=5 // pred_check_branch
      %110 = sbr.rel (%p107) target = $region12
    $region11: #{attention_forward.2} parent=5 // pred_region
      %s111 = ssub.s32 %s8, 1
      // Predicated region
      $region13: #{attention_forward.2} parent=11 // pred_check
        %p112 = pneg %p69
      $region14: #{attention_forward.2} parent=11 // pred_check_branch
        %114 = sbr.rel (%p112) target = $region16
      $region15: #{attention_forward.2} parent=11 // pred_region
        _
      $region16: #{attention_forward.2} parent=11 // pred_fallthru
        _
    $region12: #{attention_forward.2} parent=5 // pred_fallthru
      _
    %p115 = scmp.lt.s32.totalorder %s8, 2
    // Predicated region
    $region17: #{attention_forward.2} parent=5 // pred_check
      %p116 = pneg %p115
    $region18: #{attention_forward.2} parent=5 // pred_check_branch
      %118 = sbr.rel (%p116) target = $region20
    $region19: #{attention_forward.2} parent=5 // pred_region
      // Predicated region
      $region21: #{attention_forward.2} parent=19 // pred_check
        %p119 = pneg %p42
      $region22: #{attention_forward.2} parent=19 // pred_check_branch
        %121 = sbr.rel (%p119) target = $region24
      $region23: #{attention_forward.2} parent=19 // pred_region
        %s122 = smul.u32 16, %s16
        %p123 = scmp.lt.s32.totalorder %s15, 1
        %s124 = scalar_select %p123, %s15, 1
        %p125 = scmp.lt.s32.totalorder %s122, 15
        %s126 = scalar_select %p125, %s122, 15
        %s127 = smul.addr %s124, 16
        %s128 = sadd.s32 %s126, %s127
        %s129 = smul.addr %s128, 4
        %s130 = scalar_lea.vmem %s0, %s129
        %s131 = smul.u32 16, %s16
      $region24: #{attention_forward.2} parent=19 // pred_fallthru
        _
    $region20: #{attention_forward.2} parent=5 // pred_fallthru
      _
    %p132 = scmp.le.s32.totalorder 1, %s8
    %p133 = scmp.lt.s32.totalorder %s8, 3
    %p134 = pnand %p132, %p133
    %p135 = pneg %p134
    // Predicated region
    $region25: #{attention_forward.2} parent=5 // pred_check
      _
    $region26: #{attention_forward.2} parent=5 // pred_check_branch
      %137 = sbr.rel (%p134) target = $region28
    $region27: #{attention_forward.2} parent=5 // pred_region
      %s138 = ssub.s32 %s8, 1
      %s139 = smul.u32 16, %s18
      %p140 = scmp.lt.s32.totalorder %s17, 1
      %s141 = scalar_select %p140, %s17, 1
      %p142 = scmp.lt.s32.totalorder %s139, 15
      %s143 = scalar_select %p142, %s139, 15
      %s144 = smul.addr %s141, 16
      %s145 = sadd.s32 %s143, %s144
      %s146 = smul.addr %s145, 4
      %s147 = scalar_lea.vmem %s0, %s146
      %p148 = pneg %p48
      %p149 = pneg %p45
      %p150 = pneg %p69
      %p151 = pneg %p66
      %p152 = pneg %p97
      %p153 = pneg %p94
      %s154 = smul.u32 16, %s18
      %p155 = scmp.lt.s32.totalorder %s17, 1
      %s156 = scalar_select %p155, %s17, 1
      %p157 = scmp.lt.s32.totalorder %s154, 15
      %s158 = scalar_select %p157, %s154, 15
      %s159 = smul.addr %s158, 3
      %s160 = smul.addr %s156, 48
      %s161 = sadd.s32 %s159, %s160
      %s162 = smul.addr %s161, 4
      %s163 = scalar_lea.vmem %s2, %s162
      %s164 = smul.u32 16, %s18
      %p165 = scmp.lt.s32.totalorder %s17, 1
      %s166 = scalar_select %p165, %s17, 1
      %p167 = scmp.lt.s32.totalorder %s164, 15
      %s168 = scalar_select %p167, %s164, 15
      %s169 = smul.addr %s166, 16
      %s170 = sadd.s32 %s168, %s169
      %s171 = smul.addr %s170, 4
      %s172 = scalar_lea.vmem %s0, %s171
      %s173 = smul.u32 16, %s18
      %s174 = smul.u32 16, %s18
      %p175 = scmp.lt.s32.totalorder %s17, 1
      %s176 = scalar_select %p175, %s17, 1
      %p177 = scmp.lt.s32.totalorder %s174, 15
      %s178 = scalar_select %p177, %s174, 15
      %s179 = smul.addr %s178, 3
      %s180 = smul.addr %s176, 48
      %s181 = sadd.s32 %s179, %s180
      %s182 = smul.addr %s181, 4
      %s183 = scalar_lea.vmem %s2, %s182
      %s184 = smul.u32 16, %s18
      %v185 = vld [vmem:[%s172] sm:$0xf]
      %v186 = vld [vmem:[%s172 + $0x4] sm:$0xf]
      %v187 = vld [vmem:[%s172 + $0x8] sm:$0xf]
      %v188 = vld [vmem:[%s172 + $0xc] sm:$0xf]
      %v189 = vld [vmem:[%s172 + $0x10] sm:$0xf]
      %v190 = vld [vmem:[%s172 + $0x14] sm:$0xf]
      %v191 = vld [vmem:[%s172 + $0x18] sm:$0xf]
      %v192 = vld [vmem:[%s172 + $0x1c] sm:$0xf]
      %v193 = vld [vmem:[%s172 + $0x20] sm:$0xf]
      %v194 = vld [vmem:[%s172 + $0x24] sm:$0xf]
      %v195 = vld [vmem:[%s172 + $0x28] sm:$0xf]
      %v196 = vld [vmem:[%s172 + $0x2c] sm:$0xf]
      %v197 = vld [vmem:[%s172 + $0x30] sm:$0xf]
      %v198 = vld [vmem:[%s172 + $0x34] sm:$0xf]
      %v199 = vld [vmem:[%s172 + $0x38] sm:$0xf]
      %v200 = vld [vmem:[%s172 + $0x3c] sm:$0xf]
      %v201 = vld [vmem:[%s1] sm:$0xff]
      %v202 = vld [vmem:[%s1 + $0x8] sm:$0xf]
      %v203 = vld [vmem:[%s1 + $0xc] sm:$0xff]
      %v204 = vld [vmem:[%s1 + $0x14] sm:$0xf]
      %v205 = vld [vmem:[%s1 + $0x18] sm:$0xff]
      %v206 = vld [vmem:[%s1 + $0x20] sm:$0xf]
      %v207 = vld [vmem:[%s1 + $0x24] sm:$0xff]
      %v208 = vld [vmem:[%s1 + $0x2c] sm:$0xf]
      %v209 = vld [vmem:[%s1 + $0x30] sm:$0xff]
      %v210 = vld [vmem:[%s1 + $0x38] sm:$0xf]
      %v211 = vld [vmem:[%s1 + $0x3c] sm:$0xff]
      %v212 = vld [vmem:[%s1 + $0x44] sm:$0xf]
      %v213 = vld [vmem:[%s1 + $0x48] sm:$0xff]
      %v214 = vld [vmem:[%s1 + $0x50] sm:$0xf]
      %v215 = vld [vmem:[%s1 + $0x54] sm:$0xff]
      %v216 = vld [vmem:[%s1 + $0x5c] sm:$0xf]
      %v217 = vld [vmem:[%s1 + $0x60] sm:$0xff]
      %v218 = vld [vmem:[%s1 + $0x68] sm:$0xf]
      %v219 = vld [vmem:[%s1 + $0x6c] sm:$0xff]
      %v220 = vld [vmem:[%s1 + $0x74] sm:$0xf]
      %v221 = vld [vmem:[%s1 + $0x78] sm:$0xff]
      %v222 = vld [vmem:[%s1 + $0x80] sm:$0xf]
      %v223 = vld [vmem:[%s1 + $0x84] sm:$0xff]
      %v224 = vld [vmem:[%s1 + $0x8c] sm:$0xf]
      %v225 = vld [vmem:[%s1 + $0x90] sm:$0xff]
      %v226 = vld [vmem:[%s1 + $0x98] sm:$0xf]
      %v227 = vld [vmem:[%s1 + $0x9c] sm:$0xff]
      %v228 = vld [vmem:[%s1 + $0xa4] sm:$0xf]
      %v229 = vld [vmem:[%s1 + $0xa8] sm:$0xff]
      %v230 = vld [vmem:[%s1 + $0xb0] sm:$0xf]
      %v231 = vld [vmem:[%s1 + $0xb4] sm:$0xff]
      %v232 = vld [vmem:[%s1 + $0xbc] sm:$0xf]
      %v249 = vunpack.c.l.b16 %v185
      %v250 = vunpack.c.l.b16 %v186
      %v251 = vunpack.c.l.b16 %v187
      %v252 = vunpack.c.l.b16 %v188
      %v253 = vunpack.c.l.b16 %v189
      %v254 = vunpack.c.l.b16 %v190
      %v255 = vunpack.c.l.b16 %v191
      %v256 = vunpack.c.l.b16 %v192
      %v257 = vunpack.c.l.b16 %v193
      %v258 = vunpack.c.l.b16 %v194
      %v259 = vunpack.c.l.b16 %v195
      %v260 = vunpack.c.l.b16 %v196
      %v261 = vunpack.c.l.b16 %v197
      %v262 = vunpack.c.l.b16 %v198
      %v263 = vunpack.c.l.b16 %v199
      %v264 = vunpack.c.l.b16 %v200
      %v265 = vpack.c.b16 %v250, %v249
      %v266 = vpack.c.b16 %v252, %v251
      %v267 = vpack.c.b16 %v254, %v253
      %v268 = vpack.c.b16 %v256, %v255
      %v269 = vpack.c.b16 %v258, %v257
      %v270 = vpack.c.b16 %v260, %v259
      %v271 = vpack.c.b16 %v262, %v261
      %v272 = vpack.c.b16 %v264, %v263
      %v313 = vunpack.c.l.b16 %v201
      %v314 = vunpack.c.h.b16 %v201
      %v315 = vunpack.c.l.b16 %v202
      %v316 = vunpack.c.l.b16 %v203
      %v317 = vunpack.c.h.b16 %v203
      %v318 = vunpack.c.l.b16 %v204
      %v319 = vunpack.c.l.b16 %v205
      %v320 = vunpack.c.h.b16 %v205
      %v321 = vunpack.c.l.b16 %v206
      %v322 = vunpack.c.l.b16 %v207
      %v323 = vunpack.c.h.b16 %v207
      %v324 = vunpack.c.l.b16 %v208
      %v325 = vunpack.c.l.b16 %v209
      %v326 = vunpack.c.h.b16 %v209
      %v327 = vunpack.c.l.b16 %v210
      %v328 = vunpack.c.l.b16 %v211
      %v329 = vunpack.c.h.b16 %v211
      %v330 = vunpack.c.l.b16 %v212
      %v331 = vunpack.c.l.b16 %v213
      %v332 = vunpack.c.h.b16 %v213
      %v333 = vunpack.c.l.b16 %v214
      %v334 = vunpack.c.l.b16 %v215
      %v335 = vunpack.c.h.b16 %v215
      %v336 = vunpack.c.l.b16 %v216
      %v337 = vunpack.c.l.b16 %v217
      %v338 = vunpack.c.h.b16 %v217
      %v339 = vunpack.c.l.b16 %v218
      %v340 = vunpack.c.l.b16 %v219
      %v341 = vunpack.c.h.b16 %v219
      %v342 = vunpack.c.l.b16 %v220
      %v343 = vunpack.c.l.b16 %v221
      %v344 = vunpack.c.h.b16 %v221
      %v345 = vunpack.c.l.b16 %v222
      %v346 = vunpack.c.l.b16 %v223
      %v347 = vunpack.c.h.b16 %v223
      %v348 = vunpack.c.l.b16 %v224
      %v349 = vunpack.c.l.b16 %v225
      %v350 = vunpack.c.h.b16 %v225
      %v351 = vunpack.c.l.b16 %v226
      %v352 = vunpack.c.l.b16 %v227
      %v353 = vunpack.c.h.b16 %v227
      %v354 = vunpack.c.l.b16 %v228
      %v355 = vunpack.c.l.b16 %v229
      %v356 = vunpack.c.h.b16 %v229
      %v357 = vunpack.c.l.b16 %v230
      %v358 = vunpack.c.l.b16 %v231
      %v359 = vunpack.c.h.b16 %v231
      %v360 = vunpack.c.l.b16 %v232
      %v361 = vpack.c.b16 %v316, %v313
      %v362 = vpack.c.b16 %v317, %v314
      %v363 = vpack.c.b16 %v318, %v315
      %v364 = vpack.c.b16 %v322, %v319
      %v365 = vpack.c.b16 %v323, %v320
      %v366 = vpack.c.b16 %v324, %v321
      %v367 = vpack.c.b16 %v328, %v325
      %v368 = vpack.c.b16 %v329, %v326
      %v369 = vpack.c.b16 %v330, %v327
      %v370 = vpack.c.b16 %v334, %v331
      %v371 = vpack.c.b16 %v335, %v332
      %v372 = vpack.c.b16 %v336, %v333
      %v373 = vpack.c.b16 %v340, %v337
      %v374 = vpack.c.b16 %v341, %v338
      %v375 = vpack.c.b16 %v342, %v339
      %v376 = vpack.c.b16 %v346, %v343
      %v377 = vpack.c.b16 %v347, %v344
      %v378 = vpack.c.b16 %v348, %v345
      %v379 = vpack.c.b16 %v352, %v349
      %v380 = vpack.c.b16 %v353, %v350
      %v381 = vpack.c.b16 %v354, %v351
      %v382 = vpack.c.b16 %v358, %v355
      %v383 = vpack.c.b16 %v359, %v356
      %v384 = vpack.c.b16 %v360, %v357
      %409 = vmatpush.bf16.msra.mxu0 %v382
      %410 = vmatpush.bf16.msra.mxu0 %v379
      %411 = vmatpush.bf16.msra.mxu0 %v376
      %412 = vmatpush.bf16.msra.mxu0 %v373
      %413 = vmatpush.bf16.msra.mxu0 %v370
      %414 = vmatpush.bf16.msra.mxu0 %v367
      %415 = vmatpush.bf16.msra.mxu0 %v364
      %416 = vmatpush.bf16.msra.mxu0 %v361
      %417 = vmatmul.bf16.gmra.mxu0 %v265
      %v418 = vpop.f32.mrf.mxu0
      %v419 = vadd.f32 0.0, %v418
      %v420 = vpop.f32.mrf.mxu0
      %v421 = vadd.f32 0.0, %v420
      %422 = vmatmul.bf16.gmra.mxu0 %v266
      %v423 = vpop.f32.mrf.mxu0
      %v424 = vadd.f32 0.0, %v423
      %v425 = vpop.f32.mrf.mxu0
      %v426 = vadd.f32 0.0, %v425
      %427 = vmatmul.bf16.gmra.mxu0 %v267
      %v428 = vpop.f32.mrf.mxu0
      %v429 = vadd.f32 0.0, %v428
      %v430 = vpop.f32.mrf.mxu0
      %v431 = vadd.f32 0.0, %v430
      %432 = vmatmul.bf16.gmra.mxu0 %v268
      %v433 = vpop.f32.mrf.mxu0
      %v434 = vadd.f32 0.0, %v433
      %v435 = vpop.f32.mrf.mxu0
      %v436 = vadd.f32 0.0, %v435
      %437 = vmatmul.bf16.gmra.mxu0 %v269
      %v438 = vpop.f32.mrf.mxu0
      %v439 = vadd.f32 0.0, %v438
      %v440 = vpop.f32.mrf.mxu0
      %v441 = vadd.f32 0.0, %v440
      %442 = vmatmul.bf16.gmra.mxu0 %v270
      %v443 = vpop.f32.mrf.mxu0
      %v444 = vadd.f32 0.0, %v443
      %v445 = vpop.f32.mrf.mxu0
      %v446 = vadd.f32 0.0, %v445
      %447 = vmatmul.bf16.gmra.mxu0 %v271
      %v448 = vpop.f32.mrf.mxu0
      %v449 = vadd.f32 0.0, %v448
      %v450 = vpop.f32.mrf.mxu0
      %v451 = vadd.f32 0.0, %v450
      %452 = vmatmul.bf16.gmra.mxu0 %v272
      %v453 = vpop.f32.mrf.mxu0
      %v454 = vadd.f32 0.0, %v453
      %v455 = vpop.f32.mrf.mxu0
      %v456 = vadd.f32 0.0, %v455
      %457 = vdwg.mxu0
      %458 = vmatpush.bf16.msra.mxu0 %v383
      %459 = vmatpush.bf16.msra.mxu0 %v380
      %460 = vmatpush.bf16.msra.mxu0 %v377
      %461 = vmatpush.bf16.msra.mxu0 %v374
      %462 = vmatpush.bf16.msra.mxu0 %v371
      %463 = vmatpush.bf16.msra.mxu0 %v368
      %464 = vmatpush.bf16.msra.mxu0 %v365
      %465 = vmatpush.bf16.msra.mxu0 %v362
      %466 = vmatmul.bf16.gmra.mxu0 %v265
      %v467 = vpop.f32.mrf.mxu0
      %v468 = vadd.f32 0.0, %v467
      %v469 = vpop.f32.mrf.mxu0
      %v470 = vadd.f32 0.0, %v469
      %471 = vmatmul.bf16.gmra.mxu0 %v266
      %v472 = vpop.f32.mrf.mxu0
      %v473 = vadd.f32 0.0, %v472
      %v474 = vpop.f32.mrf.mxu0
      %v475 = vadd.f32 0.0, %v474
      %476 = vmatmul.bf16.gmra.mxu0 %v267
      %v477 = vpop.f32.mrf.mxu0
      %v478 = vadd.f32 0.0, %v477
      %v479 = vpop.f32.mrf.mxu0
      %v480 = vadd.f32 0.0, %v479
      %481 = vmatmul.bf16.gmra.mxu0 %v268
      %v482 = vpop.f32.mrf.mxu0
      %v483 = vadd.f32 0.0, %v482
      %v484 = vpop.f32.mrf.mxu0
      %v485 = vadd.f32 0.0, %v484
      %486 = vmatmul.bf16.gmra.mxu0 %v269
      %v487 = vpop.f32.mrf.mxu0
      %v488 = vadd.f32 0.0, %v487
      %v489 = vpop.f32.mrf.mxu0
      %v490 = vadd.f32 0.0, %v489
      %491 = vmatmul.bf16.gmra.mxu0 %v270
      %v492 = vpop.f32.mrf.mxu0
      %v493 = vadd.f32 0.0, %v492
      %v494 = vpop.f32.mrf.mxu0
      %v495 = vadd.f32 0.0, %v494
      %496 = vmatmul.bf16.gmra.mxu0 %v271
      %v497 = vpop.f32.mrf.mxu0
      %v498 = vadd.f32 0.0, %v497
      %v499 = vpop.f32.mrf.mxu0
      %v500 = vadd.f32 0.0, %v499
      %501 = vmatmul.bf16.gmra.mxu0 %v272
      %v502 = vpop.f32.mrf.mxu0
      %v503 = vadd.f32 0.0, %v502
      %v504 = vpop.f32.mrf.mxu0
      %v505 = vadd.f32 0.0, %v504
      %506 = vdwg.mxu0
      %507 = vmatpush.bf16.msra.mxu0 %v384
      %508 = vmatpush.bf16.msra.mxu0 %v381
      %509 = vmatpush.bf16.msra.mxu0 %v378
      %510 = vmatpush.bf16.msra.mxu0 %v375
      %511 = vmatpush.bf16.msra.mxu0 %v372
      %512 = vmatpush.bf16.msra.mxu0 %v369
      %513 = vmatpush.bf16.msra.mxu0 %v366
      %514 = vmatpush.bf16.msra.mxu0 %v363
      %515 = vmatmul.bf16.gmra.mxu0 %v265
      %v516 = vpop.f32.mrf.mxu0
      %v517 = vadd.f32 0.0, %v516
      %v518 = vpop.f32.mrf.mxu0
      %v519 = vadd.f32 0.0, %v518
      %520 = vmatmul.bf16.gmra.mxu0 %v266
      %v521 = vpop.f32.mrf.mxu0
      %v522 = vadd.f32 0.0, %v521
      %v523 = vpop.f32.mrf.mxu0
      %v524 = vadd.f32 0.0, %v523
      %525 = vmatmul.bf16.gmra.mxu0 %v267
      %v526 = vpop.f32.mrf.mxu0
      %v527 = vadd.f32 0.0, %v526
      %v528 = vpop.f32.mrf.mxu0
      %v529 = vadd.f32 0.0, %v528
      %530 = vmatmul.bf16.gmra.mxu0 %v268
      %v531 = vpop.f32.mrf.mxu0
      %v532 = vadd.f32 0.0, %v531
      %v533 = vpop.f32.mrf.mxu0
      %v534 = vadd.f32 0.0, %v533
      %535 = vmatmul.bf16.gmra.mxu0 %v269
      %v536 = vpop.f32.mrf.mxu0
      %v537 = vadd.f32 0.0, %v536
      %v538 = vpop.f32.mrf.mxu0
      %v539 = vadd.f32 0.0, %v538
      %540 = vmatmul.bf16.gmra.mxu0 %v270
      %v541 = vpop.f32.mrf.mxu0
      %v542 = vadd.f32 0.0, %v541
      %v543 = vpop.f32.mrf.mxu0
      %v544 = vadd.f32 0.0, %v543
      %545 = vmatmul.bf16.gmra.mxu0 %v271
      %v546 = vpop.f32.mrf.mxu0
      %v547 = vadd.f32 0.0, %v546
      %v548 = vpop.f32.mrf.mxu0
      %v549 = vadd.f32 0.0, %v548
      %550 = vmatmul.bf16.gmra.mxu0 %v272
      %v551 = vpop.f32.mrf.mxu0
      %v552 = vadd.f32 0.0, %v551
      %v553 = vpop.f32.mrf.mxu0
      %v554 = vadd.f32 0.0, %v553
      %555 = vdwg.mxu0
      %v556 = vpack.c.bf16 %v468, %v419
      %v557 = vpack.c.bf16 %v517, %v517
      %v558 = vpack.c.bf16 %v470, %v421
      %v559 = vpack.c.bf16 %v519, %v519
      %v560 = vpack.c.bf16 %v473, %v424
      %v561 = vpack.c.bf16 %v522, %v522
      %v562 = vpack.c.bf16 %v475, %v426
      %v563 = vpack.c.bf16 %v524, %v524
      %v564 = vpack.c.bf16 %v478, %v429
      %v565 = vpack.c.bf16 %v527, %v527
      %v566 = vpack.c.bf16 %v480, %v431
      %v567 = vpack.c.bf16 %v529, %v529
      %v568 = vpack.c.bf16 %v483, %v434
      %v569 = vpack.c.bf16 %v532, %v532
      %v570 = vpack.c.bf16 %v485, %v436
      %v571 = vpack.c.bf16 %v534, %v534
      %v572 = vpack.c.bf16 %v488, %v439
      %v573 = vpack.c.bf16 %v537, %v537
      %v574 = vpack.c.bf16 %v490, %v441
      %v575 = vpack.c.bf16 %v539, %v539
      %v576 = vpack.c.bf16 %v493, %v444
      %v577 = vpack.c.bf16 %v542, %v542
      %v578 = vpack.c.bf16 %v495, %v446
      %v579 = vpack.c.bf16 %v544, %v544
      %v580 = vpack.c.bf16 %v498, %v449
      %v581 = vpack.c.bf16 %v547, %v547
      %v582 = vpack.c.bf16 %v500, %v451
      %v583 = vpack.c.bf16 %v549, %v549
      %v584 = vpack.c.bf16 %v503, %v454
      %v585 = vpack.c.bf16 %v552, %v552
      %v586 = vpack.c.bf16 %v505, %v456
      %v587 = vpack.c.bf16 %v554, %v554
      %588 = vst [vmem:[%s183] sm:$0xff] %v556
      %589 = vst [vmem:[%s183 + $0x8] sm:$0xf] %v557
      %590 = vst [vmem:[%s183 + $0xc] sm:$0xff] %v558
      %591 = vst [vmem:[%s183 + $0x14] sm:$0xf] %v559
      %592 = vst [vmem:[%s183 + $0x18] sm:$0xff] %v560
      %593 = vst [vmem:[%s183 + $0x20] sm:$0xf] %v561
      %594 = vst [vmem:[%s183 + $0x24] sm:$0xff] %v562
      %595 = vst [vmem:[%s183 + $0x2c] sm:$0xf] %v563
      %596 = vst [vmem:[%s183 + $0x30] sm:$0xff] %v564
      %597 = vst [vmem:[%s183 + $0x38] sm:$0xf] %v565
      %598 = vst [vmem:[%s183 + $0x3c] sm:$0xff] %v566
      %599 = vst [vmem:[%s183 + $0x44] sm:$0xf] %v567
      %600 = vst [vmem:[%s183 + $0x48] sm:$0xff] %v568
      %601 = vst [vmem:[%s183 + $0x50] sm:$0xf] %v569
      %602 = vst [vmem:[%s183 + $0x54] sm:$0xff] %v570
      %603 = vst [vmem:[%s183 + $0x5c] sm:$0xf] %v571
      %604 = vst [vmem:[%s183 + $0x60] sm:$0xff] %v572
      %605 = vst [vmem:[%s183 + $0x68] sm:$0xf] %v573
      %606 = vst [vmem:[%s183 + $0x6c] sm:$0xff] %v574
      %607 = vst [vmem:[%s183 + $0x74] sm:$0xf] %v575
      %608 = vst [vmem:[%s183 + $0x78] sm:$0xff] %v576
      %609 = vst [vmem:[%s183 + $0x80] sm:$0xf] %v577
      %610 = vst [vmem:[%s183 + $0x84] sm:$0xff] %v578
      %611 = vst [vmem:[%s183 + $0x8c] sm:$0xf] %v579
      %612 = vst [vmem:[%s183 + $0x90] sm:$0xff] %v580
      %613 = vst [vmem:[%s183 + $0x98] sm:$0xf] %v581
      %614 = vst [vmem:[%s183 + $0x9c] sm:$0xff] %v582
      %615 = vst [vmem:[%s183 + $0xa4] sm:$0xf] %v583
      %616 = vst [vmem:[%s183 + $0xa8] sm:$0xff] %v584
      %617 = vst [vmem:[%s183 + $0xb0] sm:$0xf] %v585
      %618 = vst [vmem:[%s183 + $0xb4] sm:$0xff] %v586
      %619 = vst [vmem:[%s183 + $0xbc] sm:$0xf] %v587
      %s620 = smul.u32 16, %s18
      %p621 = scmp.lt.s32.totalorder %s17, 1
      %s622 = scalar_select %p621, %s17, 1
      %p623 = scmp.lt.s32.totalorder %s620, 15
      %s624 = scalar_select %p623, %s620, 15
      %s625 = smul.addr %s624, 3
      %s626 = smul.addr %s622, 48
      %s627 = sadd.s32 %s625, %s626
      %s628 = smul.addr %s627, 4
      %s629 = scalar_lea.vmem %s2, %s628
      // Predicated region
      $region29: #{attention_forward.2} parent=27 // pred_check
        %p630 = pneg %p94
      $region30: #{attention_forward.2} parent=27 // pred_check_branch
        %632 = sbr.rel (%p630) target = $region32
      $region31: #{attention_forward.2} parent=27 // pred_region
        %s633 = smul.u32 16, %s18
      $region32: #{attention_forward.2} parent=27 // pred_fallthru
        _
    $region28: #{attention_forward.2} parent=5 // pred_fallthru
      _
    %p634 = scmp.le.s32.totalorder 2, %s8
    // Predicated region
    $region33: #{attention_forward.2} parent=5 // pred_check
      %p635 = pneg %p634
    $region34: #{attention_forward.2} parent=5 // pred_check_branch
      %637 = sbr.rel (%p635) target = $region36
    $region35: #{attention_forward.2} parent=5 // pred_region
      %s638 = ssub.s32 %s8, 2
      // Predicated region
      $region37: #{attention_forward.2} parent=35 // pred_check
        %p639 = pneg %p100
      $region38: #{attention_forward.2} parent=35 // pred_check_branch
        %641 = sbr.rel (%p639) target = $region40
      $region39: #{attention_forward.2} parent=35 // pred_region
        %s642 = smul.u32 16, %s20
        %p643 = scmp.lt.s32.totalorder %s19, 1
        %s644 = scalar_select %p643, %s19, 1
        %p645 = scmp.lt.s32.totalorder %s642, 15
        %s646 = scalar_select %p645, %s642, 15
        %s647 = smul.addr %s646, 3
        %s648 = smul.addr %s644, 48
        %s649 = sadd.s32 %s647, %s648
        %s650 = smul.addr %s649, 4
        %s651 = scalar_lea.vmem %s2, %s650
      $region40: #{attention_forward.2} parent=35 // pred_fallthru
        _
    $region36: #{attention_forward.2} parent=5 // pred_fallthru
      _
  $region6: #{attention_forward.2} parent=0 // loop_footer
    %s12 = sadd.s32 1, %s8
  $region7: #{attention_forward.2} parent=0 // loop_footer_branch
    %7 = sbr.rel target = $region3
  $region8: #{attention_forward.2} parent=0 // loop_exit
    _

// kernel: attention_forward.3
$region0: #{attention_forward.3}
  #allocation0 [shape = 'u32[]', space=smem, size = 0x4, offset = 0x4, fixed_abs, tag = 'smem constant byte address 0x4 - core index']
  #allocation1 [shape = 'u32[72,128]{1,0:T(1,128)}', space=vmem, size = 0x9000, scoped, tag = 'internal scratch']
  %s0 = inlined_call_operand.vmem [shape: bf16[2,4,128,32], index: 0, kind: input, shape index: {}]
  %s1 = inlined_call_operand.vmem [shape: bf16[2,4,128,32], index: 1, kind: input, shape index: {}]
  %s2 = inlined_call_operand.vmem [shape: bf16[2,4,128,32], index: 2, kind: input, shape index: {}]
  %s3 = inlined_call_operand.vmem [shape: bf16[4,32,128], index: 3, kind: input, shape index: {}]
  %s4 = inlined_call_operand.vmem [shape: f32[1,128], index: 4, kind: input, shape index: {}]
  %s5 = inlined_call_operand.hbm [shape: f32[2,128,128], index: 5, kind: output, shape index: {}]
  %s6 = sld [smem:[#allocation0]]
  $region53: #{attention_forward.3} parent=0
    _
  %s8 = ssub.s32 1, %s6
  %s9 = scalar_select 0, %s8, %s6
  $region1: #{attention_forward.3} parent=0
    #allocation2 [shape = 'u8[131072]{0}', space=vmem, size = 0x20000, scoped, tag = 'output window, operand 0']
    #allocation3 [shape = 's32[2]{0}', space=sflag, size = 0x8, scoped, tag = 'scoped memory for attention_forward.3']
    %10 = vsyncpa [#allocation3], 0
    %s11 = scalar_lea.sflag [#allocation3], 1
    %12 = vsyncpa %s11, 0
    loop: start=0, step=1, limit=4
    $region2: #{attention_forward.3} parent=1 // loop_pre_header
      _
    $region3: #{attention_forward.3} parent=1 // loop_header
      %s14 = sphi 0, %s18
      %p15 = scmp.ge.s32.totalorder %s14, 4
      %s21 = sphi 0, %s33
      %s22 = sphi 0, %s29
      %s23 = sphi 0, %s21
      %s24 = sphi 0, %s22
      %s25 = sphi 0, %s23
      %s26 = sphi 0, %s24
      %s38 = sphi 0, %s40
      %s41 = sphi 0, %s38
      %s42 = sphi 0, %s41
      %s58 = sphi 0, %s42
      %s64 = sphi 0, %s66
      %s67 = sphi 0, %s64
      %s68 = sphi 0, %s67
      %s84 = sphi 0, %s68
      %s90 = sphi 0, %s92
      %s93 = sphi 0, %s90
      %s94 = sphi 0, %s93
      %s110 = sphi 0, %s94
      %s114 = sphi 0, %s114
      %s116 = sphi 0, %s114
      %s117 = sphi 0, %s116
      %s131 = sphi 0, %s117
      %s135 = sphi 0, %s135
      %s137 = sphi 0, %s135
      %s138 = sphi 0, %s137
      %s152 = sphi 0, %s138
      %s160 = sphi 0, %s162
      %s163 = sphi 0, %s160
      %s164 = sphi 0, %s163
      %s180 = sphi 0, %s164
    $region4: #{attention_forward.3} parent=1 // loop_header_branch
      %17 = sbr.rel (%p15) target = $region8
    $region5: #{attention_forward.3} parent=1 // loop_body
      %s19 = ssub.s32 %s14, 1
      %s20 = ssub.s32 %s14, 2
      %s27 = sadd.s32 1, %s22
      %p28 = scmp.ge.s32.totalorder %s27, 1
      %s29 = scalar_select %p28, 0, %s27
      %s30 = sadd.s32 1, %s21
      %s31 = scalar_select %p28, %s30, %s21
      %p32 = scmp.ge.s32.totalorder %s31, 2
      %s33 = scalar_select %p32, 0, %s31
      %s34 = ssub.s32 %s21, %s33
      %s35 = ssub.s32 %s22, %s29
      %s36 = sor.u32 %s34, %s35
      %p37 = scmp.eq.s32.totalorder %s36, 0
      %s39 = sadd.s32 %s38, 1
      %s40 = scalar_select %p37, %s38, %s39
      %p43 = pneg %p37
      %p44 = scmp.eq.s32.totalorder %s14, 1
      %p45 = por %p43, %p44
      %p46 = scmp.ne.s32.totalorder %s38, %s41
      %p47 = scmp.eq.s32.totalorder %s14, 0
      %p48 = por %p46, %p47
      %p49 = scmp.ne.s32.totalorder %s38, %s41
      %p50 = scmp.eq.s32.totalorder %s19, 1
      %p51 = por %p49, %p50
      %p52 = scmp.ne.s32.totalorder %s41, %s42
      %p53 = scmp.eq.s32.totalorder %s19, 0
      %p54 = por %p52, %p53
      %p55 = scmp.ne.s32.totalorder %s41, %s42
      %p56 = scmp.eq.s32.totalorder %s20, 1
      %p57 = por %p55, %p56
      %p59 = scmp.ne.s32.totalorder %s42, %s58
      %p60 = scmp.eq.s32.totalorder %s20, 0
      %p61 = por %p59, %p60
      %s62 = ssub.s32 %s21, %s33
      %p63 = scmp.eq.s32.totalorder %s62, 0
      %s65 = sadd.s32 %s64, 1
      %s66 = scalar_select %p63, %s64, %s65
      %p69 = pneg %p63
      %p70 = scmp.eq.s32.totalorder %s14, 1
      %p71 = por %p69, %p70
      %p72 = scmp.ne.s32.totalorder %s64, %s67
      %p73 = scmp.eq.s32.totalorder %s14, 0
      %p74 = por %p72, %p73
      %p75 = scmp.ne.s32.totalorder %s64, %s67
      %p76 = scmp.eq.s32.totalorder %s19, 1
      %p77 = por %p75, %p76
      %p78 = scmp.ne.s32.totalorder %s67, %s68
      %p79 = scmp.eq.s32.totalorder %s19, 0
      %p80 = por %p78, %p79
      %p81 = scmp.ne.s32.totalorder %s67, %s68
      %p82 = scmp.eq.s32.totalorder %s20, 1
      %p83 = por %p81, %p82
      %p85 = scmp.ne.s32.totalorder %s68, %s84
      %p86 = scmp.eq.s32.totalorder %s20, 0
      %p87 = por %p85, %p86
      %s88 = ssub.s32 %s21, %s33
      %p89 = scmp.eq.s32.totalorder %s88, 0
      %s91 = sadd.s32 %s90, 1
      %s92 = scalar_select %p89, %s90, %s91
      %p95 = pneg %p89
      %p96 = scmp.eq.s32.totalorder %s14, 1
      %p97 = por %p95, %p96
      %p98 = scmp.ne.s32.totalorder %s90, %s93
      %p99 = scmp.eq.s32.totalorder %s14, 0
      %p100 = por %p98, %p99
      %p101 = scmp.ne.s32.totalorder %s90, %s93
      %p102 = scmp.eq.s32.totalorder %s19, 1
      %p103 = por %p101, %p102
      %p104 = scmp.ne.s32.totalorder %s93, %s94
      %p105 = scmp.eq.s32.totalorder %s19, 0
      %p106 = por %p104, %p105
      %p107 = scmp.ne.s32.totalorder %s93, %s94
      %p108 = scmp.eq.s32.totalorder %s20, 1
      %p109 = por %p107, %p108
      %p111 = scmp.ne.s32.totalorder %s94, %s110
      %p112 = scmp.eq.s32.totalorder %s20, 0
      %p113 = por %p111, %p112
      %s115 = sadd.s32 %s114, 1
      %p118 = scmp.eq.s32.totalorder %s14, 1
      %p119 = scmp.ne.s32.totalorder %s114, %s116
      %p120 = scmp.eq.s32.totalorder %s14, 0
      %p121 = por %p119, %p120
      %p122 = scmp.ne.s32.totalorder %s114, %s116
      %p123 = scmp.eq.s32.totalorder %s19, 1
      %p124 = por %p122, %p123
      %p125 = scmp.ne.s32.totalorder %s116, %s117
      %p126 = scmp.eq.s32.totalorder %s19, 0
      %p127 = por %p125, %p126
      %p128 = scmp.ne.s32.totalorder %s116, %s117
      %p129 = scmp.eq.s32.totalorder %s20, 1
      %p130 = por %p128, %p129
      %p132 = scmp.ne.s32.totalorder %s117, %s131
      %p133 = scmp.eq.s32.totalorder %s20, 0
      %p134 = por %p132, %p133
      %s136 = sadd.s32 %s135, 1
      %p139 = scmp.eq.s32.totalorder %s14, 1
      %p140 = scmp.ne.s32.totalorder %s135, %s137
      %p141 = scmp.eq.s32.totalorder %s14, 0
      %p142 = por %p140, %p141
      %p143 = scmp.ne.s32.totalorder %s135, %s137
      %p144 = scmp.eq.s32.totalorder %s19, 1
      %p145 = por %p143, %p144
      %p146 = scmp.ne.s32.totalorder %s137, %s138
      %p147 = scmp.eq.s32.totalorder %s19, 0
      %p148 = por %p146, %p147
      %p149 = scmp.ne.s32.totalorder %s137, %s138
      %p150 = scmp.eq.s32.totalorder %s20, 1
      %p151 = por %p149, %p150
      %p153 = scmp.ne.s32.totalorder %s138, %s152
      %p154 = scmp.eq.s32.totalorder %s20, 0
      %p155 = por %p153, %p154
      %s156 = ssub.s32 %s21, %s33
      %s157 = ssub.s32 %s22, %s29
      %s158 = sor.u32 %s156, %s157
      %p159 = scmp.eq.s32.totalorder %s158, 0
      %s161 = sadd.s32 %s160, 1
      %s162 = scalar_select %p159, %s160, %s161
      %p165 = pneg %p159
      %p166 = scmp.eq.s32.totalorder %s14, 1
      %p167 = por %p165, %p166
      %p168 = scmp.ne.s32.totalorder %s160, %s163
      %p169 = scmp.eq.s32.totalorder %s14, 0
      %p170 = por %p168, %p169
      %p171 = scmp.ne.s32.totalorder %s160, %s163
      %p172 = scmp.eq.s32.totalorder %s19, 1
      %p173 = por %p171, %p172
      %p174 = scmp.ne.s32.totalorder %s163, %s164
      %p175 = scmp.eq.s32.totalorder %s19, 0
      %p176 = por %p174, %p175
      %p177 = scmp.ne.s32.totalorder %s163, %s164
      %p178 = scmp.eq.s32.totalorder %s20, 1
      %p179 = por %p177, %p178
      %p181 = scmp.ne.s32.totalorder %s164, %s180
      %p182 = scmp.eq.s32.totalorder %s20, 0
      %p183 = por %p181, %p182
      %p184 = scmp.le.s32.totalorder 1, %s14
      %p185 = scmp.lt.s32.totalorder %s14, 3
      %p186 = pnand %p184, %p185
      %p187 = pneg %p186
      // Predicated region
      $region9: #{attention_forward.3} parent=5 // pred_check
        _
      $region10: #{attention_forward.3} parent=5 // pred_check_branch
        %189 = sbr.rel (%p186) target = $region12
      $region11: #{attention_forward.3} parent=5 // pred_region
        %s190 = ssub.s32 %s14, 1
        // Predicated region
        $region13: #{attention_forward.3} parent=11 // pred_check
          %p191 = pneg %p127
        $region14: #{attention_forward.3} parent=11 // pred_check_branch
          %193 = sbr.rel (%p191) target = $region16
        $region15: #{attention_forward.3} parent=11 // pred_region
          _
        $region16: #{attention_forward.3} parent=11 // pred_fallthru
          _
        // Predicated region
        $region17: #{attention_forward.3} parent=11 // pred_check
          %p194 = pneg %p148
        $region18: #{attention_forward.3} parent=11 // pred_check_branch
          %196 = sbr.rel (%p194) target = $region20
        $region19: #{attention_forward.3} parent=11 // pred_region
          _
        $region20: #{attention_forward.3} parent=11 // pred_fallthru
          _
      $region12: #{attention_forward.3} parent=5 // pred_fallthru
        _
      %p197 = scmp.lt.s32.totalorder %s14, 2
      // Predicated region
      $region21: #{attention_forward.3} parent=5 // pred_check
        %p198 = pneg %p197
      $region22: #{attention_forward.3} parent=5 // pred_check_branch
        %200 = sbr.rel (%p198) target = $region24
      $region23: #{attention_forward.3} parent=5 // pred_region
        // Predicated region
        $region25: #{attention_forward.3} parent=23 // pred_check
          %p201 = pneg %p48
        $region26: #{attention_forward.3} parent=23 // pred_check_branch
          %203 = sbr.rel (%p201) target = $region28
        $region27: #{attention_forward.3} parent=23 // pred_region
          %s204 = smul.u32 16, %s22
          %p205 = scmp.lt.s32.totalorder %s21, 1
          %s206 = scalar_select %p205, %s21, 1
          %p207 = scmp.lt.s32.totalorder %s204, 15
          %s208 = scalar_select %p207, %s204, 15
          %s209 = smul.addr %s206, 64
          %s210 = sadd.s32 %s208, %s209
          %s211 = smul.addr %s210, 4
          %s212 = scalar_lea.vmem %s0, %s211
          %s213 = smul.u32 16, %s22
        $region28: #{attention_forward.3} parent=23 // pred_fallthru
          _
        // Predicated region
        $region29: #{attention_forward.3} parent=23 // pred_check
          %p214 = pneg %p74
        $region30: #{attention_forward.3} parent=23 // pred_check_branch
          %216 = sbr.rel (%p214) target = $region32
        $region31: #{attention_forward.3} parent=23 // pred_region
          %p217 = scmp.lt.s32.totalorder %s21, 1
          %s218 = scalar_select %p217, %s21, 1
          %s219 = smul.addr %s218, 64
          %s220 = smul.addr %s219, 4
          %s221 = scalar_lea.vmem %s1, %s220
        $region32: #{attention_forward.3} parent=23 // pred_fallthru
          _
        // Predicated region
        $region33: #{attention_forward.3} parent=23 // pred_check
          %p222 = pneg %p100
        $region34: #{attention_forward.3} parent=23 // pred_check_branch
          %224 = sbr.rel (%p222) target = $region36
        $region35: #{attention_forward.3} parent=23 // pred_region
          %p225 = scmp.lt.s32.totalorder %s21, 1
          %s226 = scalar_select %p225, %s21, 1
          %s227 = smul.addr %s226, 64
          %s228 = smul.addr %s227, 4
          %s229 = scalar_lea.vmem %s2, %s228
        $region36: #{attention_forward.3} parent=23 // pred_fallthru
          _
      $region24: #{attention_forward.3} parent=5 // pred_fallthru
        _
      %p230 = scmp.le.s32.totalorder 1, %s14
      %p231 = scmp.lt.s32.totalorder %s14, 3
      %p232 = pnand %p230, %p231
      %p233 = pneg %p232
      // Predicated region
      $region37: #{attention_forward.3} parent=5 // pred_check
        _
      $region38: #{attention_forward.3} parent=5 // pred_check_branch
        %235 = sbr.rel (%p232) target = $region40
      $region39: #{attention_forward.3} parent=5 // pred_region
        %s236 = ssub.s32 %s14, 1
        %s237 = smul.u32 16, %s24
        %p238 = scmp.lt.s32.totalorder %s23, 1
        %s239 = scalar_select %p238, %s23, 1
        %p240 = scmp.lt.s32.totalorder %s237, 15
        %s241 = scalar_select %p240, %s237, 15
        %s242 = smul.addr %s239, 64
        %s243 = sadd.s32 %s241, %s242
        %s244 = smul.addr %s243, 4
        %s245 = scalar_lea.vmem %s0, %s244
        %p246 = pneg %p54
        %p247 = pneg %p51
        %p248 = scmp.lt.s32.totalorder %s23, 1
        %s249 = scalar_select %p248, %s23, 1
        %s250 = smul.addr %s249, 64
        %s251 = smul.addr %s250, 4
        %s252 = scalar_lea.vmem %s1, %s251
        %p253 = pneg %p80
        %p254 = pneg %p77
        %p255 = scmp.lt.s32.totalorder %s23, 1
        %s256 = scalar_select %p255, %s23, 1
        %s257 = smul.addr %s256, 64
        %s258 = smul.addr %s257, 4
        %s259 = scalar_lea.vmem %s2, %s258
        %p260 = pneg %p106
        %p261 = pneg %p103
        %p262 = pneg %p127
        %p263 = pneg %p124
        %p264 = pneg %p148
        %p265 = pneg %p145
        %p266 = pneg %p176
        %p267 = pneg %p173
        %s268 = sand.u32 %s163, 1
        %s269 = scalar_lea.sflag [#allocation3], %s268
        %s270 = sand.u32 %s163, 1
        %s271 = smul.addr %s270, 128
        %s272 = scalar_lea.vmem [#allocation2], %s271
        %s273 = smul.u32 16, %s24
        %p274 = scmp.lt.s32.totalorder %s23, 1
        %s275 = scalar_select %p274, %s23, 1
        %p276 = scmp.lt.s32.totalorder %s273, 15
        %s277 = scalar_select %p276, %s273, 15
        %s278 = smul.addr %s275, 64
        %s279 = sadd.s32 %s277, %s278
        %s280 = smul.addr %s279, 4
        %s281 = scalar_lea.vmem %s0, %s280
        %s282 = smul.u32 16, %s24
        %p283 = scmp.lt.s32.totalorder %s23, 1
        %s284 = scalar_select %p283, %s23, 1
        %s285 = smul.addr %s284, 64
        %s286 = smul.addr %s285, 4
        %s287 = scalar_lea.vmem %s1, %s286
        %p288 = scmp.lt.s32.totalorder %s23, 1
        %s289 = scalar_select %p288, %s23, 1
        %s290 = smul.addr %s289, 64
        %s291 = smul.addr %s290, 4
        %s292 = scalar_lea.vmem %s2, %s291
        %s293 = smul.u32 16, %s24
        %v295 = vld [vmem:[%s281] sm:$0xf]
        %v296 = vld [vmem:[%s281 + $0x4] sm:$0xf]
        %v297 = vld [vmem:[%s281 + $0x8] sm:$0xf]
        %v298 = vld [vmem:[%s281 + $0xc] sm:$0xf]
        %v299 = vld [vmem:[%s281 + $0x10] sm:$0xf]
        %v300 = vld [vmem:[%s281 + $0x14] sm:$0xf]
        %v301 = vld [vmem:[%s281 + $0x18] sm:$0xf]
        %v302 = vld [vmem:[%s281 + $0x1c] sm:$0xf]
        %v303 = vld [vmem:[%s281 + $0x20] sm:$0xf]
        %v304 = vld [vmem:[%s281 + $0x24] sm:$0xf]
        %v305 = vld [vmem:[%s281 + $0x28] sm:$0xf]
        %v306 = vld [vmem:[%s281 + $0x2c] sm:$0xf]
        %v307 = vld [vmem:[%s281 + $0x30] sm:$0xf]
        %v308 = vld [vmem:[%s281 + $0x34] sm:$0xf]
        %v309 = vld [vmem:[%s281 + $0x38] sm:$0xf]
        %v310 = vld [vmem:[%s281 + $0x3c] sm:$0xf]
        %v311 = vld [vmem:[%s281 + $0x40] sm:$0xf]
        %v312 = vld [vmem:[%s281 + $0x44] sm:$0xf]
        %v313 = vld [vmem:[%s281 + $0x48] sm:$0xf]
        %v314 = vld [vmem:[%s281 + $0x4c] sm:$0xf]
        %v315 = vld [vmem:[%s281 + $0x50] sm:$0xf]
        %v316 = vld [vmem:[%s281 + $0x54] sm:$0xf]
        %v317 = vld [vmem:[%s281 + $0x58] sm:$0xf]
        %v318 = vld [vmem:[%s281 + $0x5c] sm:$0xf]
        %v319 = vld [vmem:[%s281 + $0x60] sm:$0xf]
        %v320 = vld [vmem:[%s281 + $0x64] sm:$0xf]
        %v321 = vld [vmem:[%s281 + $0x68] sm:$0xf]
        %v322 = vld [vmem:[%s281 + $0x6c] sm:$0xf]
        %v323 = vld [vmem:[%s281 + $0x70] sm:$0xf]
        %v324 = vld [vmem:[%s281 + $0x74] sm:$0xf]
        %v325 = vld [vmem:[%s281 + $0x78] sm:$0xf]
        %v326 = vld [vmem:[%s281 + $0x7c] sm:$0xf]
        %v327 = vld [vmem:[%s281 + $0x80] sm:$0xf]
        %v328 = vld [vmem:[%s281 + $0x84] sm:$0xf]
        %v329 = vld [vmem:[%s281 + $0x88] sm:$0xf]
        %v330 = vld [vmem:[%s281 + $0x8c] sm:$0xf]
        %v331 = vld [vmem:[%s281 + $0x90] sm:$0xf]
        %v332 = vld [vmem:[%s281 + $0x94] sm:$0xf]
        %v333 = vld [vmem:[%s281 + $0x98] sm:$0xf]
        %v334 = vld [vmem:[%s281 + $0x9c] sm:$0xf]
        %v335 = vld [vmem:[%s281 + $0xa0] sm:$0xf]
        %v336 = vld [vmem:[%s281 + $0xa4] sm:$0xf]
        %v337 = vld [vmem:[%s281 + $0xa8] sm:$0xf]
        %v338 = vld [vmem:[%s281 + $0xac] sm:$0xf]
        %v339 = vld [vmem:[%s281 + $0xb0] sm:$0xf]
        %v340 = vld [vmem:[%s281 + $0xb4] sm:$0xf]
        %v341 = vld [vmem:[%s281 + $0xb8] sm:$0xf]
        %v342 = vld [vmem:[%s281 + $0xbc] sm:$0xf]
        %v343 = vld [vmem:[%s281 + $0xc0] sm:$0xf]
        %v344 = vld [vmem:[%s281 + $0xc4] sm:$0xf]
        %v345 = vld [vmem:[%s281 + $0xc8] sm:$0xf]
        %v346 = vld [vmem:[%s281 + $0xcc] sm:$0xf]
        %v347 = vld [vmem:[%s281 + $0xd0] sm:$0xf]
        %v348 = vld [vmem:[%s281 + $0xd4] sm:$0xf]
        %v349 = vld [vmem:[%s281 + $0xd8] sm:$0xf]
        %v350 = vld [vmem:[%s281 + $0xdc] sm:$0xf]
        %v351 = vld [vmem:[%s281 + $0xe0] sm:$0xf]
        %v352 = vld [vmem:[%s281 + $0xe4] sm:$0xf]
        %v353 = vld [vmem:[%s281 + $0xe8] sm:$0xf]
        %v354 = vld [vmem:[%s281 + $0xec] sm:$0xf]
        %v355 = vld [vmem:[%s281 + $0xf0] sm:$0xf]
        %v356 = vld [vmem:[%s281 + $0xf4] sm:$0xf]
        %v357 = vld [vmem:[%s281 + $0xf8] sm:$0xf]
        %v358 = vld [vmem:[%s281 + $0xfc] sm:$0xf]
        %v359 = vld [vmem:[%s287] sm:$0xf]
        %v360 = vld [vmem:[%s287 + $0x4] sm:$0xf]
        %v361 = vld [vmem:[%s287 + $0x8] sm:$0xf]
        %v362 = vld [vmem:[%s287 + $0xc] sm:$0xf]
        %v363 = vld [vmem:[%s287 + $0x10] sm:$0xf]
        %v364 = vld [vmem:[%s287 + $0x14] sm:$0xf]
        %v365 = vld [vmem:[%s287 + $0x18] sm:$0xf]
        %v366 = vld [vmem:[%s287 + $0x1c] sm:$0xf]
        %v367 = vld [vmem:[%s287 + $0x20] sm:$0xf]
        %v368 = vld [vmem:[%s287 + $0x24] sm:$0xf]
        %v369 = vld [vmem:[%s287 + $0x28] sm:$0xf]
        %v370 = vld [vmem:[%s287 + $0x2c] sm:$0xf]
        %v371 = vld [vmem:[%s287 + $0x30] sm:$0xf]
        %v372 = vld [vmem:[%s287 + $0x34] sm:$0xf]
        %v373 = vld [vmem:[%s287 + $0x38] sm:$0xf]
        %v374 = vld [vmem:[%s287 + $0x3c] sm:$0xf]
        %v375 = vld [vmem:[%s287 + $0x40] sm:$0xf]
        %v376 = vld [vmem:[%s287 + $0x44] sm:$0xf]
        %v377 = vld [vmem:[%s287 + $0x48] sm:$0xf]
        %v378 = vld [vmem:[%s287 + $0x4c] sm:$0xf]
        %v379 = vld [vmem:[%s287 + $0x50] sm:$0xf]
        %v380 = vld [vmem:[%s287 + $0x54] sm:$0xf]
        %v381 = vld [vmem:[%s287 + $0x58] sm:$0xf]
        %v382 = vld [vmem:[%s287 + $0x5c] sm:$0xf]
        %v383 = vld [vmem:[%s287 + $0x60] sm:$0xf]
        %v384 = vld [vmem:[%s287 + $0x64] sm:$0xf]
        %v385 = vld [vmem:[%s287 + $0x68] sm:$0xf]
        %v386 = vld [vmem:[%s287 + $0x6c] sm:$0xf]
        %v387 = vld [vmem:[%s287 + $0x70] sm:$0xf]
        %v388 = vld [vmem:[%s287 + $0x74] sm:$0xf]
        %v389 = vld [vmem:[%s287 + $0x78] sm:$0xf]
        %v390 = vld [vmem:[%s287 + $0x7c] sm:$0xf]
        %v391 = vld [vmem:[%s287 + $0x80] sm:$0xf]
        %v392 = vld [vmem:[%s287 + $0x84] sm:$0xf]
        %v393 = vld [vmem:[%s287 + $0x88] sm:$0xf]
        %v394 = vld [vmem:[%s287 + $0x8c] sm:$0xf]
        %v395 = vld [vmem:[%s287 + $0x90] sm:$0xf]
        %v396 = vld [vmem:[%s287 + $0x94] sm:$0xf]
        %v397 = vld [vmem:[%s287 + $0x98] sm:$0xf]
        %v398 = vld [vmem:[%s287 + $0x9c] sm:$0xf]
        %v399 = vld [vmem:[%s287 + $0xa0] sm:$0xf]
        %v400 = vld [vmem:[%s287 + $0xa4] sm:$0xf]
        %v401 = vld [vmem:[%s287 + $0xa8] sm:$0xf]
        %v402 = vld [vmem:[%s287 + $0xac] sm:$0xf]
        %v403 = vld [vmem:[%s287 + $0xb0] sm:$0xf]
        %v404 = vld [vmem:[%s287 + $0xb4] sm:$0xf]
        %v405 = vld [vmem:[%s287 + $0xb8] sm:$0xf]
        %v406 = vld [vmem:[%s287 + $0xbc] sm:$0xf]
        %v407 = vld [vmem:[%s287 + $0xc0] sm:$0xf]
        %v408 = vld [vmem:[%s287 + $0xc4] sm:$0xf]
        %v409 = vld [vmem:[%s287 + $0xc8] sm:$0xf]
        %v410 = vld [vmem:[%s287 + $0xcc] sm:$0xf]
        %v411 = vld [vmem:[%s287 + $0xd0] sm:$0xf]
        %v412 = vld [vmem:[%s287 + $0xd4] sm:$0xf]
        %v413 = vld [vmem:[%s287 + $0xd8] sm:$0xf]
        %v414 = vld [vmem:[%s287 + $0xdc] sm:$0xf]
        %v415 = vld [vmem:[%s287 + $0xe0] sm:$0xf]
        %v416 = vld [vmem:[%s287 + $0xe4] sm:$0xf]
        %v417 = vld [vmem:[%s287 + $0xe8] sm:$0xf]
        %v418 = vld [vmem:[%s287 + $0xec] sm:$0xf]
        %v419 = vld [vmem:[%s287 + $0xf0] sm:$0xf]
        %v420 = vld [vmem:[%s287 + $0xf4] sm:$0xf]
        %v421 = vld [vmem:[%s287 + $0xf8] sm:$0xf]
        %v422 = vld [vmem:[%s287 + $0xfc] sm:$0xf]
        %v423 = vld [vmem:[%s292] sm:$0xf]
        %v424 = vld [vmem:[%s292 + $0x4] sm:$0xf]
        %v425 = vld [vmem:[%s292 + $0x8] sm:$0xf]
        %v426 = vld [vmem:[%s292 + $0xc] sm:$0xf]
        %v427 = vld [vmem:[%s292 + $0x10] sm:$0xf]
        %v428 = vld [vmem:[%s292 + $0x14] sm:$0xf]
        %v429 = vld [vmem:[%s292 + $0x18] sm:$0xf]
        %v430 = vld [vmem:[%s292 + $0x1c] sm:$0xf]
        %v431 = vld [vmem:[%s292 + $0x20] sm:$0xf]
        %v432 = vld [vmem:[%s292 + $0x24] sm:$0xf]
        %v433 = vld [vmem:[%s292 + $0x28] sm:$0xf]
        %v434 = vld [vmem:[%s292 + $0x2c] sm:$0xf]
        %v435 = vld [vmem:[%s292 + $0x30] sm:$0xf]
        %v436 = vld [vmem:[%s292 + $0x34] sm:$0xf]
        %v437 = vld [vmem:[%s292 + $0x38] sm:$0xf]
        %v438 = vld [vmem:[%s292 + $0x3c] sm:$0xf]
        %v439 = vld [vmem:[%s292 + $0x40] sm:$0xf]
        %v440 = vld [vmem:[%s292 + $0x44] sm:$0xf]
        %v441 = vld [vmem:[%s292 + $0x48] sm:$0xf]
        %v442 = vld [vmem:[%s292 + $0x4c] sm:$0xf]
        %v443 = vld [vmem:[%s292 + $0x50] sm:$0xf]
        %v444 = vld [vmem:[%s292 + $0x54] sm:$0xf]
        %v445 = vld [vmem:[%s292 + $0x58] sm:$0xf]
        %v446 = vld [vmem:[%s292 + $0x5c] sm:$0xf]
        %v447 = vld [vmem:[%s292 + $0x60] sm:$0xf]
        %v448 = vld [vmem:[%s292 + $0x64] sm:$0xf]
        %v449 = vld [vmem:[%s292 + $0x68] sm:$0xf]
        %v450 = vld [vmem:[%s292 + $0x6c] sm:$0xf]
        %v451 = vld [vmem:[%s292 + $0x70] sm:$0xf]
        %v452 = vld [vmem:[%s292 + $0x74] sm:$0xf]
        %v453 = vld [vmem:[%s292 + $0x78] sm:$0xf]
        %v454 = vld [vmem:[%s292 + $0x7c] sm:$0xf]
        %v455 = vld [vmem:[%s292 + $0x80] sm:$0xf]
        %v456 = vld [vmem:[%s292 + $0x84] sm:$0xf]
        %v457 = vld [vmem:[%s292 + $0x88] sm:$0xf]
        %v458 = vld [vmem:[%s292 + $0x8c] sm:$0xf]
        %v459 = vld [vmem:[%s292 + $0x90] sm:$0xf]
        %v460 = vld [vmem:[%s292 + $0x94] sm:$0xf]
        %v461 = vld [vmem:[%s292 + $0x98] sm:$0xf]
        %v462 = vld [vmem:[%s292 + $0x9c] sm:$0xf]
        %v463 = vld [vmem:[%s292 + $0xa0] sm:$0xf]
        %v464 = vld [vmem:[%s292 + $0xa4] sm:$0xf]
        %v465 = vld [vmem:[%s292 + $0xa8] sm:$0xf]
        %v466 = vld [vmem:[%s292 + $0xac] sm:$0xf]
        %v467 = vld [vmem:[%s292 + $0xb0] sm:$0xf]
        %v468 = vld [vmem:[%s292 + $0xb4] sm:$0xf]
        %v469 = vld [vmem:[%s292 + $0xb8] sm:$0xf]
        %v470 = vld [vmem:[%s292 + $0xbc] sm:$0xf]
        %v471 = vld [vmem:[%s292 + $0xc0] sm:$0xf]
        %v472 = vld [vmem:[%s292 + $0xc4] sm:$0xf]
        %v473 = vld [vmem:[%s292 + $0xc8] sm:$0xf]
        %v474 = vld [vmem:[%s292 + $0xcc] sm:$0xf]
        %v475 = vld [vmem:[%s292 + $0xd0] sm:$0xf]
        %v476 = vld [vmem:[%s292 + $0xd4] sm:$0xf]
        %v477 = vld [vmem:[%s292 + $0xd8] sm:$0xf]
        %v478 = vld [vmem:[%s292 + $0xdc] sm:$0xf]
        %v479 = vld [vmem:[%s292 + $0xe0] sm:$0xf]
        %v480 = vld [vmem:[%s292 + $0xe4] sm:$0xf]
        %v481 = vld [vmem:[%s292 + $0xe8] sm:$0xf]
        %v482 = vld [vmem:[%s292 + $0xec] sm:$0xf]
        %v483 = vld [vmem:[%s292 + $0xf0] sm:$0xf]
        %v484 = vld [vmem:[%s292 + $0xf4] sm:$0xf]
        %v485 = vld [vmem:[%s292 + $0xf8] sm:$0xf]
        %v486 = vld [vmem:[%s292 + $0xfc] sm:$0xf]
        %v503 = vunpack.c.l.b16 %v295
        %v504 = vunpack.c.l.b16 %v296
        %v505 = vunpack.c.l.b16 %v297
        %v506 = vunpack.c.l.b16 %v298
        %v507 = vunpack.c.l.b16 %v299
        %v508 = vunpack.c.l.b16 %v300
        %v509 = vunpack.c.l.b16 %v301
        %v510 = vunpack.c.l.b16 %v302
        %v511 = vunpack.c.l.b16 %v303
        %v512 = vunpack.c.l.b16 %v304
        %v513 = vunpack.c.l.b16 %v305
        %v514 = vunpack.c.l.b16 %v306
        %v515 = vunpack.c.l.b16 %v307
        %v516 = vunpack.c.l.b16 %v308
        %v517 = vunpack.c.l.b16 %v309
        %v518 = vunpack.c.l.b16 %v310
        %v519 = vpack.c.b16 %v504, %v503
        %v520 = vpack.c.b16 %v506, %v505
        %v521 = vpack.c.b16 %v508, %v507
        %v522 = vpack.c.b16 %v510, %v509
        %v523 = vpack.c.b16 %v512, %v511
        %v524 = vpack.c.b16 %v514, %v513
        %v525 = vpack.c.b16 %v516, %v515
        %v526 = vpack.c.b16 %v518, %v517
        %v543 = vunpack.c.l.b16 %v359
        %v544 = vunpack.c.l.b16 %v360
        %v545 = vunpack.c.l.b16 %v361
        %v546 = vunpack.c.l.b16 %v362
        %v547 = vunpack.c.l.b16 %v363
        %v548 = vunpack.c.l.b16 %v364
        %v549 = vunpack.c.l.b16 %v365
        %v550 = vunpack.c.l.b16 %v366
        %v551 = vunpack.c.l.b16 %v367
        %v552 = vunpack.c.l.b16 %v368
        %v553 = vunpack.c.l.b16 %v369
        %v554 = vunpack.c.l.b16 %v370
        %v555 = vunpack.c.l.b16 %v371
        %v556 = vunpack.c.l.b16 %v372
        %v557 = vunpack.c.l.b16 %v373
        %v558 = vunpack.c.l.b16 %v374
        %v559 = vpack.c.b16 %v544, %v543
        %v560 = vpack.c.b16 %v546, %v545
        %v561 = vpack.c.b16 %v548, %v547
        %v562 = vpack.c.b16 %v550, %v549
        %v563 = vpack.c.b16 %v552, %v551
        %v564 = vpack.c.b16 %v554, %v553
        %v565 = vpack.c.b16 %v556, %v555
        %v566 = vpack.c.b16 %v558, %v557
        %vm567 = vcmask 261120
        %v569 = vsel %vm567, %v519, 0
        %v572 = vsel %vm567, %v520, 0
        %v575 = vsel %vm567, %v521, 0
        %v578 = vsel %vm567, %v522, 0
        %v581 = vsel %vm567, %v523, 0
        %v584 = vsel %vm567, %v524, 0
        %v587 = vsel %vm567, %v525, 0
        %v590 = vsel %vm567, %v526, 0
        %v593 = vsel %vm567, %v559, 0
        %v596 = vsel %vm567, %v560, 0
        %v599 = vsel %vm567, %v561, 0
        %v602 = vsel %vm567, %v562, 0
        %v605 = vsel %vm567, %v563, 0
        %v608 = vsel %vm567, %v564, 0
        %v611 = vsel %vm567, %v565, 0
        %v614 = vsel %vm567, %v566, 0
        %616 = vmatpush.bf16.xpose.msra.mxu0 %v614
        %617 = vmatpush.bf16.xpose.msra.mxu0 %v611
        %618 = vmatpush.bf16.xpose.msra.mxu0 %v608
        %619 = vmatpush.bf16.xpose.msra.mxu0 %v605
        %620 = vmatpush.bf16.xpose.msra.mxu0 %v602
        %621 = vmatpush.bf16.xpose.msra.mxu0 %v599
        %622 = vmatpush.bf16.xpose.msra.mxu0 %v596
        %623 = vmatpush.bf16.xpose.msra.mxu0 %v593
        %624 = vmatmul.bf16.gmra.mxu0 %v569
        %v625 = vpop.f32.mrf.mxu0
        %v626 = vadd.f32 0.0, %v625
        %v627 = vpop.f32.mrf.mxu0
        %v628 = vadd.f32 0.0, %v627
        %629 = vmatmul.bf16.gmra.mxu0 %v572
        %v630 = vpop.f32.mrf.mxu0
        %v631 = vadd.f32 0.0, %v630
        %v632 = vpop.f32.mrf.mxu0
        %v633 = vadd.f32 0.0, %v632
        %634 = vmatmul.bf16.gmra.mxu0 %v575
        %v635 = vpop.f32.mrf.mxu0
        %v636 = vadd.f32 0.0, %v635
        %v637 = vpop.f32.mrf.mxu0
        %v638 = vadd.f32 0.0, %v637
        %639 = vmatmul.bf16.gmra.mxu0 %v578
        %v640 = vpop.f32.mrf.mxu0
        %v641 = vadd.f32 0.0, %v640
        %v642 = vpop.f32.mrf.mxu0
        %v643 = vadd.f32 0.0, %v642
        %644 = vmatmul.bf16.gmra.mxu0 %v581
        %v645 = vpop.f32.mrf.mxu0
        %v646 = vadd.f32 0.0, %v645
        %v647 = vpop.f32.mrf.mxu0
        %v648 = vadd.f32 0.0, %v647
        %649 = vmatmul.bf16.gmra.mxu0 %v584
        %v650 = vpop.f32.mrf.mxu0
        %v651 = vadd.f32 0.0, %v650
        %v652 = vpop.f32.mrf.mxu0
        %v653 = vadd.f32 0.0, %v652
        %654 = vmatmul.bf16.gmra.mxu0 %v587
        %v655 = vpop.f32.mrf.mxu0
        %v656 = vadd.f32 0.0, %v655
        %v657 = vpop.f32.mrf.mxu0
        %v658 = vadd.f32 0.0, %v657
        %659 = vmatmul.bf16.gmra.mxu0 %v590
        %v660 = vpop.f32.mrf.mxu0
        %v661 = vadd.f32 0.0, %v660
        %v662 = vpop.f32.mrf.mxu0
        %v663 = vadd.f32 0.0, %v662
        %664 = vdwg.mxu0
        %v681 = vunpack.c.l.b16 %v311
        %v682 = vunpack.c.l.b16 %v312
        %v683 = vunpack.c.l.b16 %v313
        %v684 = vunpack.c.l.b16 %v314
        %v685 = vunpack.c.l.b16 %v315
        %v686 = vunpack.c.l.b16 %v316
        %v687 = vunpack.c.l.b16 %v317
        %v688 = vunpack.c.l.b16 %v318
        %v689 = vunpack.c.l.b16 %v319
        %v690 = vunpack.c.l.b16 %v320
        %v691 = vunpack.c.l.b16 %v321
        %v692 = vunpack.c.l.b16 %v322
        %v693 = vunpack.c.l.b16 %v323
        %v694 = vunpack.c.l.b16 %v324
        %v695 = vunpack.c.l.b16 %v325
        %v696 = vunpack.c.l.b16 %v326
        %v697 = vpack.c.b16 %v682, %v681
        %v698 = vpack.c.b16 %v684, %v683
        %v699 = vpack.c.b16 %v686, %v685
        %v700 = vpack.c.b16 %v688, %v687
        %v701 = vpack.c.b16 %v690, %v689
        %v702 = vpack.c.b16 %v692, %v691
        %v703 = vpack.c.b16 %v694, %v693
        %v704 = vpack.c.b16 %v696, %v695
        %v721 = vunpack.c.l.b16 %v375
        %v722 = vunpack.c.l.b16 %v376
        %v723 = vunpack.c.l.b16 %v377
        %v724 = vunpack.c.l.b16 %v378
        %v725 = vunpack.c.l.b16 %v379
        %v726 = vunpack.c.l.b16 %v380
        %v727 = vunpack.c.l.b16 %v381
        %v728 = vunpack.c.l.b16 %v382
        %v729 = vunpack.c.l.b16 %v383
        %v730 = vunpack.c.l.b16 %v384
        %v731 = vunpack.c.l.b16 %v385
        %v732 = vunpack.c.l.b16 %v386
        %v733 = vunpack.c.l.b16 %v387
        %v734 = vunpack.c.l.b16 %v388
        %v735 = vunpack.c.l.b16 %v389
        %v736 = vunpack.c.l.b16 %v390
        %v737 = vpack.c.b16 %v722, %v721
        %v738 = vpack.c.b16 %v724, %v723
        %v739 = vpack.c.b16 %v726, %v725
        %v740 = vpack.c.b16 %v728, %v727
        %v741 = vpack.c.b16 %v730, %v729
        %v742 = vpack.c.b16 %v732, %v731
        %v743 = vpack.c.b16 %v734, %v733
        %v744 = vpack.c.b16 %v736, %v735
        %v746 = vsel %vm567, %v697, 0
        %v749 = vsel %vm567, %v698, 0
        %v752 = vsel %vm567, %v699, 0
        %v755 = vsel %vm567, %v700, 0
        %v758 = vsel %vm567, %v701, 0
        %v761 = vsel %vm567, %v702, 0
        %v764 = vsel %vm567, %v703, 0
        %v767 = vsel %vm567, %v704, 0
        %v770 = vsel %vm567, %v737, 0
        %v773 = vsel %vm567, %v738, 0
        %v776 = vsel %vm567, %v739, 0
        %v779 = vsel %vm567, %v740, 0
        %v782 = vsel %vm567, %v741, 0
        %v785 = vsel %vm567, %v742, 0
        %v788 = vsel %vm567, %v743, 0
        %v791 = vsel %vm567, %v744, 0
        %793 = vmatpush.bf16.xpose.msra.mxu0 %v791
        %794 = vmatpush.bf16.xpose.msra.mxu0 %v788
        %795 = vmatpush.bf16.xpose.msra.mxu0 %v785
        %796 = vmatpush.bf16.xpose.msra.mxu0 %v782
        %797 = vmatpush.bf16.xpose.msra.mxu0 %v779
        %798 = vmatpush.bf16.xpose.msra.mxu0 %v776
        %799 = vmatpush.bf16.xpose.msra.mxu0 %v773
        %800 = vmatpush.bf16.xpose.msra.mxu0 %v770
        %801 = vmatmul.bf16.gmra.mxu0 %v746
        %v802 = vpop.f32.mrf.mxu0
        %v803 = vadd.f32 0.0, %v802
        %v804 = vpop.f32.mrf.mxu0
        %v805 = vadd.f32 0.0, %v804
        %806 = vmatmul.bf16.gmra.mxu0 %v749
        %v807 = vpop.f32.mrf.mxu0
        %v808 = vadd.f32 0.0, %v807
        %v809 = vpop.f32.mrf.mxu0
        %v810 = vadd.f32 0.0, %v809
        %811 = vmatmul.bf16.gmra.mxu0 %v752
        %v812 = vpop.f32.mrf.mxu0
        %v813 = vadd.f32 0.0, %v812
        %v814 = vpop.f32.mrf.mxu0
        %v815 = vadd.f32 0.0, %v814
        %816 = vmatmul.bf16.gmra.mxu0 %v755
        %v817 = vpop.f32.mrf.mxu0
        %v818 = vadd.f32 0.0, %v817
        %v819 = vpop.f32.mrf.mxu0
        %v820 = vadd.f32 0.0, %v819
        %821 = vmatmul.bf16.gmra.mxu0 %v758
        %v822 = vpop.f32.mrf.mxu0
        %v823 = vadd.f32 0.0, %v822
        %v824 = vpop.f32.mrf.mxu0
        %v825 = vadd.f32 0.0, %v824
        %826 = vmatmul.bf16.gmra.mxu0 %v761
        %v827 = vpop.f32.mrf.mxu0
        %v828 = vadd.f32 0.0, %v827
        %v829 = vpop.f32.mrf.mxu0
        %v830 = vadd.f32 0.0, %v829
        %831 = vmatmul.bf16.gmra.mxu0 %v764
        %v832 = vpop.f32.mrf.mxu0
        %v833 = vadd.f32 0.0, %v832
        %v834 = vpop.f32.mrf.mxu0
        %v835 = vadd.f32 0.0, %v834
        %836 = vmatmul.bf16.gmra.mxu0 %v767
        %v837 = vpop.f32.mrf.mxu0
        %v838 = vadd.f32 0.0, %v837
        %v839 = vpop.f32.mrf.mxu0
        %v840 = vadd.f32 0.0, %v839
        %841 = vdwg.mxu0
        %v858 = vunpack.c.l.b16 %v327
        %v859 = vunpack.c.l.b16 %v328
        %v860 = vunpack.c.l.b16 %v329
        %v861 = vunpack.c.l.b16 %v330
        %v862 = vunpack.c.l.b16 %v331
        %v863 = vunpack.c.l.b16 %v332
        %v864 = vunpack.c.l.b16 %v333
        %v865 = vunpack.c.l.b16 %v334
        %v866 = vunpack.c.l.b16 %v335
        %v867 = vunpack.c.l.b16 %v336
        %v868 = vunpack.c.l.b16 %v337
        %v869 = vunpack.c.l.b16 %v338
        %v870 = vunpack.c.l.b16 %v339
        %v871 = vunpack.c.l.b16 %v340
        %v872 = vunpack.c.l.b16 %v341
        %v873 = vunpack.c.l.b16 %v342
        %v874 = vpack.c.b16 %v859, %v858
        %v875 = vpack.c.b16 %v861, %v860
        %v876 = vpack.c.b16 %v863, %v862
        %v877 = vpack.c.b16 %v865, %v864
        %v878 = vpack.c.b16 %v867, %v866
        %v879 = vpack.c.b16 %v869, %v868
        %v880 = vpack.c.b16 %v871, %v870
        %v881 = vpack.c.b16 %v873, %v872
        %v898 = vunpack.c.l.b16 %v391
        %v899 = vunpack.c.l.b16 %v392
        %v900 = vunpack.c.l.b16 %v393
        %v901 = vunpack.c.l.b16 %v394
        %v902 = vunpack.c.l.b16 %v395
        %v903 = vunpack.c.l.b16 %v396
        %v904 = vunpack.c.l.b16 %v397
        %v905 = vunpack.c.l.b16 %v398
        %v906 = vunpack.c.l.b16 %v399
        %v907 = vunpack.c.l.b16 %v400
        %v908 = vunpack.c.l.b16 %v401
        %v909 = vunpack.c.l.b16 %v402
        %v910 = vunpack.c.l.b16 %v403
        %v911 = vunpack.c.l.b16 %v404
        %v912 = vunpack.c.l.b16 %v405
        %v913 = vunpack.c.l.b16 %v406
        %v914 = vpack.c.b16 %v899, %v898
        %v915 = vpack.c.b16 %v901, %v900
        %v916 = vpack.c.b16 %v903, %v902
        %v917 = vpack.c.b16 %v905, %v904
        %v918 = vpack.c.b16 %v907, %v906
        %v919 = vpack.c.b16 %v909, %v908
        %v920 = vpack.c.b16 %v911, %v910
        %v921 = vpack.c.b16 %v913, %v912
        %v923 = vsel %vm567, %v874, 0
        %v926 = vsel %vm567, %v875, 0
        %v929 = vsel %vm567, %v876, 0
        %v932 = vsel %vm567, %v877, 0
        %v935 = vsel %vm567, %v878, 0
        %v938 = vsel %vm567, %v879, 0
        %v941 = vsel %vm567, %v880, 0
        %v944 = vsel %vm567, %v881, 0
        %v947 = vsel %vm567, %v914, 0
        %v950 = vsel %vm567, %v915, 0
        %v953 = vsel %vm567, %v916, 0
        %v956 = vsel %vm567, %v917, 0
        %v959 = vsel %vm567, %v918, 0
        %v962 = vsel %vm567, %v919, 0
        %v965 = vsel %vm567, %v920, 0
        %v968 = vsel %vm567, %v921, 0
        %970 = vmatpush.bf16.xpose.msra.mxu0 %v968
        %971 = vmatpush.bf16.xpose.msra.mxu0 %v965
        %972 = vmatpush.bf16.xpose.msra.mxu0 %v962
        %973 = vmatpush.bf16.xpose.msra.mxu0 %v959
        %974 = vmatpush.bf16.xpose.msra.mxu0 %v956
        %975 = vmatpush.bf16.xpose.msra.mxu0 %v953
        %976 = vmatpush.bf16.xpose.msra.mxu0 %v950
        %977 = vmatpush.bf16.xpose.msra.mxu0 %v947
        %978 = vmatmul.bf16.gmra.mxu0 %v923
        %v979 = vpop.f32.mrf.mxu0
        %v980 = vadd.f32 0.0, %v979
        %v981 = vpop.f32.mrf.mxu0
        %v982 = vadd.f32 0.0, %v981
        %983 = vmatmul.bf16.gmra.mxu0 %v926
        %v984 = vpop.f32.mrf.mxu0
        %v985 = vadd.f32 0.0, %v984
        %v986 = vpop.f32.mrf.mxu0
        %v987 = vadd.f32 0.0, %v986
        %988 = vmatmul.bf16.gmra.mxu0 %v929
        %v989 = vpop.f32.mrf.mxu0
        %v990 = vadd.f32 0.0, %v989
        %v991 = vpop.f32.mrf.mxu0
        %v992 = vadd.f32 0.0, %v991
        %993 = vmatmul.bf16.gmra.mxu0 %v932
        %v994 = vpop.f32.mrf.mxu0
        %v995 = vadd.f32 0.0, %v994
        %v996 = vpop.f32.mrf.mxu0
        %v997 = vadd.f32 0.0, %v996
        %998 = vmatmul.bf16.gmra.mxu0 %v935
        %v999 = vpop.f32.mrf.mxu0
        %v1000 = vadd.f32 0.0, %v999
        %v1001 = vpop.f32.mrf.mxu0
        %v1002 = vadd.f32 0.0, %v1001
        %1003 = vmatmul.bf16.gmra.mxu0 %v938
        %v1004 = vpop.f32.mrf.mxu0
        %v1005 = vadd.f32 0.0, %v1004
        %v1006 = vpop.f32.mrf.mxu0
        %v1007 = vadd.f32 0.0, %v1006
        %1008 = vmatmul.bf16.gmra.mxu0 %v941
        %v1009 = vpop.f32.mrf.mxu0
        %v1010 = vadd.f32 0.0, %v1009
        %v1011 = vpop.f32.mrf.mxu0
        %v1012 = vadd.f32 0.0, %v1011
        %1013 = vmatmul.bf16.gmra.mxu0 %v944
        %v1014 = vpop.f32.mrf.mxu0
        %v1015 = vadd.f32 0.0, %v1014
        %v1016 = vpop.f32.mrf.mxu0
        %v1017 = vadd.f32 0.0, %v1016
        %1018 = vdwg.mxu0
        %v1035 = vunpack.c.l.b16 %v343
        %v1036 = vunpack.c.l.b16 %v344
        %v1037 = vunpack.c.l.b16 %v345
        %v1038 = vunpack.c.l.b16 %v346
        %v1039 = vunpack.c.l.b16 %v347
        %v1040 = vunpack.c.l.b16 %v348
        %v1041 = vunpack.c.l.b16 %v349
        %v1042 = vunpack.c.l.b16 %v350
        %v1043 = vunpack.c.l.b16 %v351
        %v1044 = vunpack.c.l.b16 %v352
        %v1045 = vunpack.c.l.b16 %v353
        %v1046 = vunpack.c.l.b16 %v354
        %v1047 = vunpack.c.l.b16 %v355
        %v1048 = vunpack.c.l.b16 %v356
        %v1049 = vunpack.c.l.b16 %v357
        %v1050 = vunpack.c.l.b16 %v358
        %v1051 = vpack.c.b16 %v1036, %v1035
        %v1052 = vpack.c.b16 %v1038, %v1037
        %v1053 = vpack.c.b16 %v1040, %v1039
        %v1054 = vpack.c.b16 %v1042, %v1041
        %v1055 = vpack.c.b16 %v1044, %v1043
        %v1056 = vpack.c.b16 %v1046, %v1045
        %v1057 = vpack.c.b16 %v1048, %v1047
        %v1058 = vpack.c.b16 %v1050, %v1049
        %v1075 = vunpack.c.l.b16 %v407
        %v1076 = vunpack.c.l.b16 %v408
        %v1077 = vunpack.c.l.b16 %v409
        %v1078 = vunpack.c.l.b16 %v410
        %v1079 = vunpack.c.l.b16 %v411
        %v1080 = vunpack.c.l.b16 %v412
        %v1081 = vunpack.c.l.b16 %v413
        %v1082 = vunpack.c.l.b16 %v414
        %v1083 = vunpack.c.l.b16 %v415
        %v1084 = vunpack.c.l.b16 %v416
        %v1085 = vunpack.c.l.b16 %v417
        %v1086 = vunpack.c.l.b16 %v418
        %v1087 = vunpack.c.l.b16 %v419
        %v1088 = vunpack.c.l.b16 %v420
        %v1089 = vunpack.c.l.b16 %v421
        %v1090 = vunpack.c.l.b16 %v422
        %v1091 = vpack.c.b16 %v1076, %v1075
        %v1092 = vpack.c.b16 %v1078, %v1077
        %v1093 = vpack.c.b16 %v1080, %v1079
        %v1094 = vpack.c.b16 %v1082, %v1081
        %v1095 = vpack.c.b16 %v1084, %v1083
        %v1096 = vpack.c.b16 %v1086, %v1085
        %v1097 = vpack.c.b16 %v1088, %v1087
        %v1098 = vpack.c.b16 %v1090, %v1089
        %v1100 = vsel %vm567, %v1051, 0
        %v1103 = vsel %vm567, %v1052, 0
        %v1106 = vsel %vm567, %v1053, 0
        %v1109 = vsel %vm567, %v1054, 0
        %v1112 = vsel %vm567, %v1055, 0
        %v1115 = vsel %vm567, %v1056, 0
        %v1118 = vsel %vm567, %v1057, 0
        %v1121 = vsel %vm567, %v1058, 0
        %v1124 = vsel %vm567, %v1091, 0
        %v1127 = vsel %vm567, %v1092, 0
        %v1130 = vsel %vm567, %v1093, 0
        %v1133 = vsel %vm567, %v1094, 0
        %v1136 = vsel %vm567, %v1095, 0
        %v1139 = vsel %vm567, %v1096, 0
        %v1142 = vsel %vm567, %v1097, 0
        %v1145 = vsel %vm567, %v1098, 0
        %1147 = vmatpush.bf16.xpose.msra.mxu0 %v1145
        %1148 = vmatpush.bf16.xpose.msra.mxu0 %v1142
        %1149 = vmatpush.bf16.xpose.msra.mxu0 %v1139
        %1150 = vmatpush.bf16.xpose.msra.mxu0 %v1136
        %1151 = vmatpush.bf16.xpose.msra.mxu0 %v1133
        %1152 = vmatpush.bf16.xpose.msra.mxu0 %v1130
        %1153 = vmatpush.bf16.xpose.msra.mxu0 %v1127
        %1154 = vmatpush.bf16.xpose.msra.mxu0 %v1124
        %1155 = vmatmul.bf16.gmra.mxu0 %v1100
        %v1156 = vpop.f32.mrf.mxu0
        %v1157 = vadd.f32 0.0, %v1156
        %v1158 = vpop.f32.mrf.mxu0
        %v1159 = vadd.f32 0.0, %v1158
        %1160 = vmatmul.bf16.gmra.mxu0 %v1103
        %v1161 = vpop.f32.mrf.mxu0
        %v1162 = vadd.f32 0.0, %v1161
        %v1163 = vpop.f32.mrf.mxu0
        %v1164 = vadd.f32 0.0, %v1163
        %1165 = vmatmul.bf16.gmra.mxu0 %v1106
        %v1166 = vpop.f32.mrf.mxu0
        %v1167 = vadd.f32 0.0, %v1166
        %v1168 = vpop.f32.mrf.mxu0
        %v1169 = vadd.f32 0.0, %v1168
        %1170 = vmatmul.bf16.gmra.mxu0 %v1109
        %v1171 = vpop.f32.mrf.mxu0
        %v1172 = vadd.f32 0.0, %v1171
        %v1173 = vpop.f32.mrf.mxu0
        %v1174 = vadd.f32 0.0, %v1173
        %1175 = vmatmul.bf16.gmra.mxu0 %v1112
        %v1176 = vpop.f32.mrf.mxu0
        %v1177 = vadd.f32 0.0, %v1176
        %v1178 = vpop.f32.mrf.mxu0
        %v1179 = vadd.f32 0.0, %v1178
        %1180 = vmatmul.bf16.gmra.mxu0 %v1115
        %v1181 = vpop.f32.mrf.mxu0
        %v1182 = vadd.f32 0.0, %v1181
        %v1183 = vpop.f32.mrf.mxu0
        %v1184 = vadd.f32 0.0, %v1183
        %1185 = vmatmul.bf16.gmra.mxu0 %v1118
        %v1186 = vpop.f32.mrf.mxu0
        %v1187 = vadd.f32 0.0, %v1186
        %v1188 = vpop.f32.mrf.mxu0
        %v1189 = vadd.f32 0.0, %v1188
        %1190 = vmatmul.bf16.gmra.mxu0 %v1121
        %v1191 = vpop.f32.mrf.mxu0
        %v1192 = vadd.f32 0.0, %v1191
        %v1193 = vpop.f32.mrf.mxu0
        %v1194 = vadd.f32 0.0, %v1193
        %1195 = vdwg.mxu0
        %1196 = vmax.xlane.f32.xlu0 %v626
        %v1197 = vpop.xlane.xlu0 %1196
        %1198 = vmax.xlane.f32.xlu0 %v628
        %v1199 = vpop.xlane.xlu0 %1198
        %1200 = vmax.xlane.f32.xlu0 %v631
        %v1201 = vpop.xlane.xlu0 %1200
        %1202 = vmax.xlane.f32.xlu0 %v633
        %v1203 = vpop.xlane.xlu0 %1202
        %1204 = vmax.xlane.f32.xlu0 %v636
        %v1205 = vpop.xlane.xlu0 %1204
        %1206 = vmax.xlane.f32.xlu0 %v638
        %v1207 = vpop.xlane.xlu0 %1206
        %1208 = vmax.xlane.f32.xlu0 %v641
        %v1209 = vpop.xlane.xlu0 %1208
        %1210 = vmax.xlane.f32.xlu0 %v643
        %v1211 = vpop.xlane.xlu0 %1210
        %1212 = vmax.xlane.f32.xlu0 %v646
        %v1213 = vpop.xlane.xlu0 %1212
        %1214 = vmax.xlane.f32.xlu0 %v648
        %v1215 = vpop.xlane.xlu0 %1214
        %1216 = vmax.xlane.f32.xlu0 %v651
        %v1217 = vpop.xlane.xlu0 %1216
        %1218 = vmax.xlane.f32.xlu0 %v653
        %v1219 = vpop.xlane.xlu0 %1218
        %1220 = vmax.xlane.f32.xlu0 %v656
        %v1221 = vpop.xlane.xlu0 %1220
        %1222 = vmax.xlane.f32.xlu0 %v658
        %v1223 = vpop.xlane.xlu0 %1222
        %1224 = vmax.xlane.f32.xlu0 %v661
        %v1225 = vpop.xlane.xlu0 %1224
        %1226 = vmax.xlane.f32.xlu0 %v663
        %v1227 = vpop.xlane.xlu0 %1226
        %1228 = vmax.xlane.f32.xlu0 %v803
        %v1229 = vpop.xlane.xlu0 %1228
        %1230 = vmax.xlane.f32.xlu0 %v805
        %v1231 = vpop.xlane.xlu0 %1230
        %1232 = vmax.xlane.f32.xlu0 %v808
        %v1233 = vpop.xlane.xlu0 %1232
        %1234 = vmax.xlane.f32.xlu0 %v810
        %v1235 = vpop.xlane.xlu0 %1234
        %1236 = vmax.xlane.f32.xlu0 %v813
        %v1237 = vpop.xlane.xlu0 %1236
        %1238 = vmax.xlane.f32.xlu0 %v815
        %v1239 = vpop.xlane.xlu0 %1238
        %1240 = vmax.xlane.f32.xlu0 %v818
        %v1241 = vpop.xlane.xlu0 %1240
        %1242 = vmax.xlane.f32.xlu0 %v820
        %v1243 = vpop.xlane.xlu0 %1242
        %1244 = vmax.xlane.f32.xlu0 %v823
        %v1245 = vpop.xlane.xlu0 %1244
        %1246 = vmax.xlane.f32.xlu0 %v825
        %v1247 = vpop.xlane.xlu0 %1246
        %1248 = vmax.xlane.f32.xlu0 %v828
        %v1249 = vpop.xlane.xlu0 %1248
        %1250 = vmax.xlane.f32.xlu0 %v830
        %v1251 = vpop.xlane.xlu0 %1250
        %1252 = vmax.xlane.f32.xlu0 %v833
        %v1253 = vpop.xlane.xlu0 %1252
        %1254 = vmax.xlane.f32.xlu0 %v835
        %v1255 = vpop.xlane.xlu0 %1254
        %1256 = vmax.xlane.f32.xlu0 %v838
        %v1257 = vpop.xlane.xlu0 %1256
        %1258 = vmax.xlane.f32.xlu0 %v840
        %v1259 = vpop.xlane.xlu0 %1258
        %1260 = vmax.xlane.f32.xlu0 %v980
        %v1261 = vpop.xlane.xlu0 %1260
        %1262 = vmax.xlane.f32.xlu0 %v982
        %v1263 = vpop.xlane.xlu0 %1262
        %1264 = vmax.xlane.f32.xlu0 %v985
        %v1265 = vpop.xlane.xlu0 %1264
        %1266 = vmax.xlane.f32.xlu0 %v987
        %v1267 = vpop.xlane.xlu0 %1266
        %1268 = vmax.xlane.f32.xlu0 %v990
        %v1269 = vpop.xlane.xlu0 %1268
        %1270 = vmax.xlane.f32.xlu0 %v992
        %v1271 = vpop.xlane.xlu0 %1270
        %1272 = vmax.xlane.f32.xlu0 %v995
        %v1273 = vpop.xlane.xlu0 %1272
        %1274 = vmax.xlane.f32.xlu0 %v997
        %v1275 = vpop.xlane.xlu0 %1274
        %1276 = vmax.xlane.f32.xlu0 %v1000
        %v1277 = vpop.xlane.xlu0 %1276
        %1278 = vmax.xlane.f32.xlu0 %v1002
        %v1279 = vpop.xlane.xlu0 %1278
        %1280 = vmax.xlane.f32.xlu0 %v1005
        %v1281 = vpop.xlane.xlu0 %1280
        %1282 = vmax.xlane.f32.xlu0 %v1007
        %v1283 = vpop.xlane.xlu0 %1282
        %1284 = vmax.xlane.f32.xlu0 %v1010
        %v1285 = vpop.xlane.xlu0 %1284
        %1286 = vmax.xlane.f32.xlu0 %v1012
        %v1287 = vpop.xlane.xlu0 %1286
        %1288 = vmax.xlane.f32.xlu0 %v1015
        %v1289 = vpop.xlane.xlu0 %1288
        %1290 = vmax.xlane.f32.xlu0 %v1017
        %v1291 = vpop.xlane.xlu0 %1290
        %1292 = vmax.xlane.f32.xlu0 %v1157
        %v1293 = vpop.xlane.xlu0 %1292
        %1294 = vmax.xlane.f32.xlu0 %v1159
        %v1295 = vpop.xlane.xlu0 %1294
        %1296 = vmax.xlane.f32.xlu0 %v1162
        %v1297 = vpop.xlane.xlu0 %1296
        %1298 = vmax.xlane.f32.xlu0 %v1164
        %v1299 = vpop.xlane.xlu0 %1298
        %1300 = vmax.xlane.f32.xlu0 %v1167
        %v1301 = vpop.xlane.xlu0 %1300
        %1302 = vmax.xlane.f32.xlu0 %v1169
        %v1303 = vpop.xlane.xlu0 %1302
        %1304 = vmax.xlane.f32.xlu0 %v1172
        %v1305 = vpop.xlane.xlu0 %1304
        %1306 = vmax.xlane.f32.xlu0 %v1174
        %v1307 = vpop.xlane.xlu0 %1306
        %1308 = vmax.xlane.f32.xlu0 %v1177
        %v1309 = vpop.xlane.xlu0 %1308
        %1310 = vmax.xlane.f32.xlu0 %v1179
        %v1311 = vpop.xlane.xlu0 %1310
        %1312 = vmax.xlane.f32.xlu0 %v1182
        %v1313 = vpop.xlane.xlu0 %1312
        %1314 = vmax.xlane.f32.xlu0 %v1184
        %v1315 = vpop.xlane.xlu0 %1314
        %1316 = vmax.xlane.f32.xlu0 %v1187
        %v1317 = vpop.xlane.xlu0 %1316
        %1318 = vmax.xlane.f32.xlu0 %v1189
        %v1319 = vpop.xlane.xlu0 %1318
        %1320 = vmax.xlane.f32.xlu0 %v1192
        %v1321 = vpop.xlane.xlu0 %1320
        %1322 = vmax.xlane.f32.xlu0 %v1194
        %v1323 = vpop.xlane.xlu0 %1322
        %v1324 = vsub.f32 %v626, %v1197
        %v1325 = vsub.f32 %v628, %v1199
        %v1326 = vsub.f32 %v631, %v1201
        %v1327 = vsub.f32 %v633, %v1203
        %v1328 = vsub.f32 %v636, %v1205
        %v1329 = vsub.f32 %v638, %v1207
        %v1330 = vsub.f32 %v641, %v1209
        %v1331 = vsub.f32 %v643, %v1211
        %v1332 = vsub.f32 %v646, %v1213
        %v1333 = vsub.f32 %v648, %v1215
        %v1334 = vsub.f32 %v651, %v1217
        %v1335 = vsub.f32 %v653, %v1219
        %v1336 = vsub.f32 %v656, %v1221
        %v1337 = vsub.f32 %v658, %v1223
        %v1338 = vsub.f32 %v661, %v1225
        %v1339 = vsub.f32 %v663, %v1227
        %v1340 = vsub.f32 %v803, %v1229
        %v1341 = vsub.f32 %v805, %v1231
        %v1342 = vsub.f32 %v808, %v1233
        %v1343 = vsub.f32 %v810, %v1235
        %v1344 = vsub.f32 %v813, %v1237
        %v1345 = vsub.f32 %v815, %v1239
        %v1346 = vsub.f32 %v818, %v1241
        %v1347 = vsub.f32 %v820, %v1243
        %v1348 = vsub.f32 %v823, %v1245
        %v1349 = vsub.f32 %v825, %v1247
        %v1350 = vsub.f32 %v828, %v1249
        %v1351 = vsub.f32 %v830, %v1251
        %v1352 = vsub.f32 %v833, %v1253
        %v1353 = vsub.f32 %v835, %v1255
        %v1354 = vsub.f32 %v838, %v1257
        %v1355 = vsub.f32 %v840, %v1259
        %v1356 = vsub.f32 %v980, %v1261
        %v1357 = vsub.f32 %v982, %v1263
        %v1358 = vsub.f32 %v985, %v1265
        %v1359 = vsub.f32 %v987, %v1267
        %v1360 = vsub.f32 %v990, %v1269
        %v1361 = vsub.f32 %v992, %v1271
        %v1362 = vsub.f32 %v995, %v1273
        %v1363 = vsub.f32 %v997, %v1275
        %v1364 = vsub.f32 %v1000, %v1277
        %v1365 = vsub.f32 %v1002, %v1279
        %v1366 = vsub.f32 %v1005, %v1281
        %v1367 = vsub.f32 %v1007, %v1283
        %v1368 = vsub.f32 %v1010, %v1285
        %v1369 = vsub.f32 %v1012, %v1287
        %v1370 = vsub.f32 %v1015, %v1289
        %v1371 = vsub.f32 %v1017, %v1291
        %v1372 = vsub.f32 %v1157, %v1293
        %v1373 = vsub.f32 %v1159, %v1295
        %v1374 = vsub.f32 %v1162, %v1297
        %v1375 = vsub.f32 %v1164, %v1299
        %v1376 = vsub.f32 %v1167, %v1301
        %v1377 = vsub.f32 %v1169, %v1303
        %v1378 = vsub.f32 %v1172, %v1305
        %v1379 = vsub.f32 %v1174, %v1307
        %v1380 = vsub.f32 %v1177, %v1309
        %v1381 = vsub.f32 %v1179, %v1311
        %v1382 = vsub.f32 %v1182, %v1313
        %v1383 = vsub.f32 %v1184, %v1315
        %v1384 = vsub.f32 %v1187, %v1317
        %v1385 = vsub.f32 %v1189, %v1319
        %v1386 = vsub.f32 %v1192, %v1321
        %v1387 = vsub.f32 %v1194, %v1323
        %v1388 = vmul.f32 %v1324, 1.442695
        %v1389 = vpow.pop %v1388
        %v1390 = vmul.f32 %v1325, 1.442695
        %v1391 = vpow.pop %v1390
        %v1392 = vmul.f32 %v1326, 1.442695
        %v1393 = vpow.pop %v1392
        %v1394 = vmul.f32 %v1327, 1.442695
        %v1395 = vpow.pop %v1394
        %v1396 = vmul.f32 %v1328, 1.442695
        %v1397 = vpow.pop %v1396
        %v1398 = vmul.f32 %v1329, 1.442695
        %v1399 = vpow.pop %v1398
        %v1400 = vmul.f32 %v1330, 1.442695
        %v1401 = vpow.pop %v1400
        %v1402 = vmul.f32 %v1331, 1.442695
        %v1403 = vpow.pop %v1402
        %v1404 = vmul.f32 %v1332, 1.442695
        %v1405 = vpow.pop %v1404
        %v1406 = vmul.f32 %v1333, 1.442695
        %v1407 = vpow.pop %v1406
        %v1408 = vmul.f32 %v1334, 1.442695
        %v1409 = vpow.pop %v1408
        %v1410 = vmul.f32 %v1335, 1.442695
        %v1411 = vpow.pop %v1410
        %v1412 = vmul.f32 %v1336, 1.442695
        %v1413 = vpow.pop %v1412
        %v1414 = vmul.f32 %v1337, 1.442695
        %v1415 = vpow.pop %v1414
        %v1416 = vmul.f32 %v1338, 1.442695
        %v1417 = vpow.pop %v1416
        %v1418 = vmul.f32 %v1339, 1.442695
        %v1419 = vpow.pop %v1418
        %v1420 = vmul.f32 %v1340, 1.442695
        %v1421 = vpow.pop %v1420
        %v1422 = vmul.f32 %v1341, 1.442695
        %v1423 = vpow.pop %v1422
        %v1424 = vmul.f32 %v1342, 1.442695
        %v1425 = vpow.pop %v1424
        %v1426 = vmul.f32 %v1343, 1.442695
        %v1427 = vpow.pop %v1426
        %v1428 = vmul.f32 %v1344, 1.442695
        %v1429 = vpow.pop %v1428
        %v1430 = vmul.f32 %v1345, 1.442695
        %v1431 = vpow.pop %v1430
        %v1432 = vmul.f32 %v1346, 1.442695
        %v1433 = vpow.pop %v1432
        %v1434 = vmul.f32 %v1347, 1.442695
        %v1435 = vpow.pop %v1434
        %v1436 = vmul.f32 %v1348, 1.442695
        %v1437 = vpow.pop %v1436
        %v1438 = vmul.f32 %v1349, 1.442695
        %v1439 = vpow.pop %v1438
        %v1440 = vmul.f32 %v1350, 1.442695
        %v1441 = vpow.pop %v1440
        %v1442 = vmul.f32 %v1351, 1.442695
        %v1443 = vpow.pop %v1442
        %v1444 = vmul.f32 %v1352, 1.442695
        %v1445 = vpow.pop %v1444
        %v1446 = vmul.f32 %v1353, 1.442695
        %v1447 = vpow.pop %v1446
        %v1448 = vmul.f32 %v1354, 1.442695
        %v1449 = vpow.pop %v1448
        %v1450 = vmul.f32 %v1355, 1.442695
        %v1451 = vpow.pop %v1450
        %v1452 = vmul.f32 %v1356, 1.442695
        %v1453 = vpow.pop %v1452
        %v1454 = vmul.f32 %v1357, 1.442695
        %v1455 = vpow.pop %v1454
        %v1456 = vmul.f32 %v1358, 1.442695
        %v1457 = vpow.pop %v1456
        %v1458 = vmul.f32 %v1359, 1.442695
        %v1459 = vpow.pop %v1458
        %v1460 = vmul.f32 %v1360, 1.442695
        %v1461 = vpow.pop %v1460
        %v1462 = vmul.f32 %v1361, 1.442695
        %v1463 = vpow.pop %v1462
        %v1464 = vmul.f32 %v1362, 1.442695
        %v1465 = vpow.pop %v1464
        %v1466 = vmul.f32 %v1363, 1.442695
        %v1467 = vpow.pop %v1466
        %v1468 = vmul.f32 %v1364, 1.442695
        %v1469 = vpow.pop %v1468
        %v1470 = vmul.f32 %v1365, 1.442695
        %v1471 = vpow.pop %v1470
        %v1472 = vmul.f32 %v1366, 1.442695
        %v1473 = vpow.pop %v1472
        %v1474 = vmul.f32 %v1367, 1.442695
        %v1475 = vpow.pop %v1474
        %v1476 = vmul.f32 %v1368, 1.442695
        %v1477 = vpow.pop %v1476
        %v1478 = vmul.f32 %v1369, 1.442695
        %v1479 = vpow.pop %v1478
        %v1480 = vmul.f32 %v1370, 1.442695
        %v1481 = vpow.pop %v1480
        %v1482 = vmul.f32 %v1371, 1.442695
        %v1483 = vpow.pop %v1482
        %v1484 = vmul.f32 %v1372, 1.442695
        %v1485 = vpow.pop %v1484
        %v1486 = vmul.f32 %v1373, 1.442695
        %v1487 = vpow.pop %v1486
        %v1488 = vmul.f32 %v1374, 1.442695
        %v1489 = vpow.pop %v1488
        %v1490 = vmul.f32 %v1375, 1.442695
        %v1491 = vpow.pop %v1490
        %v1492 = vmul.f32 %v1376, 1.442695
        %v1493 = vpow.pop %v1492
        %v1494 = vmul.f32 %v1377, 1.442695
        %v1495 = vpow.pop %v1494
        %v1496 = vmul.f32 %v1378, 1.442695
        %v1497 = vpow.pop %v1496
        %v1498 = vmul.f32 %v1379, 1.442695
        %v1499 = vpow.pop %v1498
        %v1500 = vmul.f32 %v1380, 1.442695
        %v1501 = vpow.pop %v1500
        %v1502 = vmul.f32 %v1381, 1.442695
        %v1503 = vpow.pop %v1502
        %v1504 = vmul.f32 %v1382, 1.442695
        %v1505 = vpow.pop %v1504
        %v1506 = vmul.f32 %v1383, 1.442695
        %v1507 = vpow.pop %v1506
        %v1508 = vmul.f32 %v1384, 1.442695
        %v1509 = vpow.pop %v1508
        %v1510 = vmul.f32 %v1385, 1.442695
        %v1511 = vpow.pop %v1510
        %v1512 = vmul.f32 %v1386, 1.442695
        %v1513 = vpow.pop %v1512
        %v1514 = vmul.f32 %v1387, 1.442695
        %v1515 = vpow.pop %v1514
        %1516 = vadd.xlane.f32.xlu0 %v1389
        %v1517 = vpop.xlane.xlu0 %1516
        %1518 = vadd.xlane.f32.xlu0 %v1391
        %v1519 = vpop.xlane.xlu0 %1518
        %1520 = vadd.xlane.f32.xlu0 %v1393
        %v1521 = vpop.xlane.xlu0 %1520
        %1522 = vadd.xlane.f32.xlu0 %v1395
        %v1523 = vpop.xlane.xlu0 %1522
        %1524 = vadd.xlane.f32.xlu0 %v1397
        %v1525 = vpop.xlane.xlu0 %1524
        %1526 = vadd.xlane.f32.xlu0 %v1399
        %v1527 = vpop.xlane.xlu0 %1526
        %1528 = vadd.xlane.f32.xlu0 %v1401
        %v1529 = vpop.xlane.xlu0 %1528
        %1530 = vadd.xlane.f32.xlu0 %v1403
        %v1531 = vpop.xlane.xlu0 %1530
        %1532 = vadd.xlane.f32.xlu0 %v1405
        %v1533 = vpop.xlane.xlu0 %1532
        %1534 = vadd.xlane.f32.xlu0 %v1407
        %v1535 = vpop.xlane.xlu0 %1534
        %1536 = vadd.xlane.f32.xlu0 %v1409
        %v1537 = vpop.xlane.xlu0 %1536
        %1538 = vadd.xlane.f32.xlu0 %v1411
        %v1539 = vpop.xlane.xlu0 %1538
        %1540 = vadd.xlane.f32.xlu0 %v1413
        %v1541 = vpop.xlane.xlu0 %1540
        %1542 = vadd.xlane.f32.xlu0 %v1415
        %v1543 = vpop.xlane.xlu0 %1542
        %1544 = vadd.xlane.f32.xlu0 %v1417
        %v1545 = vpop.xlane.xlu0 %1544
        %1546 = vadd.xlane.f32.xlu0 %v1419
        %v1547 = vpop.xlane.xlu0 %1546
        %1548 = vadd.xlane.f32.xlu0 %v1421
        %v1549 = vpop.xlane.xlu0 %1548
        %1550 = vadd.xlane.f32.xlu0 %v1423
        %v1551 = vpop.xlane.xlu0 %1550
        %1552 = vadd.xlane.f32.xlu0 %v1425
        %v1553 = vpop.xlane.xlu0 %1552
        %1554 = vadd.xlane.f32.xlu0 %v1427
        %v1555 = vpop.xlane.xlu0 %1554
        %1556 = vadd.xlane.f32.xlu0 %v1429
        %v1557 = vpop.xlane.xlu0 %1556
        %1558 = vadd.xlane.f32.xlu0 %v1431
        %v1559 = vpop.xlane.xlu0 %1558
        %1560 = vadd.xlane.f32.xlu0 %v1433
        %v1561 = vpop.xlane.xlu0 %1560
        %1562 = vadd.xlane.f32.xlu0 %v1435
        %v1563 = vpop.xlane.xlu0 %1562
        %1564 = vadd.xlane.f32.xlu0 %v1437
        %v1565 = vpop.xlane.xlu0 %1564
        %1566 = vadd.xlane.f32.xlu0 %v1439
        %v1567 = vpop.xlane.xlu0 %1566
        %1568 = vadd.xlane.f32.xlu0 %v1441
        %v1569 = vpop.xlane.xlu0 %1568
        %1570 = vadd.xlane.f32.xlu0 %v1443
        %v1571 = vpop.xlane.xlu0 %1570
        %1572 = vadd.xlane.f32.xlu0 %v1445
        %v1573 = vpop.xlane.xlu0 %1572
        %1574 = vadd.xlane.f32.xlu0 %v1447
        %v1575 = vpop.xlane.xlu0 %1574
        %1576 = vadd.xlane.f32.xlu0 %v1449
        %v1577 = vpop.xlane.xlu0 %1576
        %1578 = vadd.xlane.f32.xlu0 %v1451
        %v1579 = vpop.xlane.xlu0 %1578
        %1580 = vadd.xlane.f32.xlu0 %v1453
        %v1581 = vpop.xlane.xlu0 %1580
        %1582 = vadd.xlane.f32.xlu0 %v1455
        %v1583 = vpop.xlane.xlu0 %1582
        %1584 = vadd.xlane.f32.xlu0 %v1457
        %v1585 = vpop.xlane.xlu0 %1584
        %1586 = vadd.xlane.f32.xlu0 %v1459
        %v1587 = vpop.xlane.xlu0 %1586
        %1588 = vadd.xlane.f32.xlu0 %v1461
        %v1589 = vpop.xlane.xlu0 %1588
        %1590 = vadd.xlane.f32.xlu0 %v1463
        %v1591 = vpop.xlane.xlu0 %1590
        %1592 = vadd.xlane.f32.xlu0 %v1465
        %v1593 = vpop.xlane.xlu0 %1592
        %1594 = vadd.xlane.f32.xlu0 %v1467
        %v1595 = vpop.xlane.xlu0 %1594
        %1596 = vadd.xlane.f32.xlu0 %v1469
        %v1597 = vpop.xlane.xlu0 %1596
        %1598 = vadd.xlane.f32.xlu0 %v1471
        %v1599 = vpop.xlane.xlu0 %1598
        %1600 = vadd.xlane.f32.xlu0 %v1473
        %v1601 = vpop.xlane.xlu0 %1600
        %1602 = vadd.xlane.f32.xlu0 %v1475
        %v1603 = vpop.xlane.xlu0 %1602
        %1604 = vadd.xlane.f32.xlu0 %v1477
        %v1605 = vpop.xlane.xlu0 %1604
        %1606 = vadd.xlane.f32.xlu0 %v1479
        %v1607 = vpop.xlane.xlu0 %1606
        %1608 = vadd.xlane.f32.xlu0 %v1481
        %v1609 = vpop.xlane.xlu0 %1608
        %1610 = vadd.xlane.f32.xlu0 %v1483
        %v1611 = vpop.xlane.xlu0 %1610
        %1612 = vadd.xlane.f32.xlu0 %v1485
        %v1613 = vpop.xlane.xlu0 %1612
        %1614 = vadd.xlane.f32.xlu0 %v1487
        %v1615 = vpop.xlane.xlu0 %1614
        %1616 = vadd.xlane.f32.xlu0 %v1489
        %v1617 = vpop.xlane.xlu0 %1616
        %1618 = vadd.xlane.f32.xlu0 %v1491
        %v1619 = vpop.xlane.xlu0 %1618
        %1620 = vadd.xlane.f32.xlu0 %v1493
        %v1621 = vpop.xlane.xlu0 %1620
        %1622 = vadd.xlane.f32.xlu0 %v1495
        %v1623 = vpop.xlane.xlu0 %1622
        %1624 = vadd.xlane.f32.xlu0 %v1497
        %v1625 = vpop.xlane.xlu0 %1624
        %1626 = vadd.xlane.f32.xlu0 %v1499
        %v1627 = vpop.xlane.xlu0 %1626
        %1628 = vadd.xlane.f32.xlu0 %v1501
        %v1629 = vpop.xlane.xlu0 %1628
        %1630 = vadd.xlane.f32.xlu0 %v1503
        %v1631 = vpop.xlane.xlu0 %1630
        %1632 = vadd.xlane.f32.xlu0 %v1505
        %v1633 = vpop.xlane.xlu0 %1632
        %1634 = vadd.xlane.f32.xlu0 %v1507
        %v1635 = vpop.xlane.xlu0 %1634
        %1636 = vadd.xlane.f32.xlu0 %v1509
        %v1637 = vpop.xlane.xlu0 %1636
        %1638 = vadd.xlane.f32.xlu0 %v1511
        %v1639 = vpop.xlane.xlu0 %1638
        %1640 = vadd.xlane.f32.xlu0 %v1513
        %v1641 = vpop.xlane.xlu0 %1640
        %1642 = vadd.xlane.f32.xlu0 %v1515
        %v1643 = vpop.xlane.xlu0 %1642
        %v1644 = vrcp.pop %v1517
        %v1645 = vrcp.pop %v1519
        %v1646 = vrcp.pop %v1521
        %v1647 = vrcp.pop %v1523
        %v1648 = vrcp.pop %v1525
        %v1649 = vrcp.pop %v1527
        %v1650 = vrcp.pop %v1529
        %v1651 = vrcp.pop %v1531
        %v1652 = vrcp.pop %v1533
        %v1653 = vrcp.pop %v1535
        %v1654 = vrcp.pop %v1537
        %v1655 = vrcp.pop %v1539
        %v1656 = vrcp.pop %v1541
        %v1657 = vrcp.pop %v1543
        %v1658 = vrcp.pop %v1545
        %v1659 = vrcp.pop %v1547
        %v1660 = vrcp.pop %v1549
        %v1661 = vrcp.pop %v1551
        %v1662 = vrcp.pop %v1553
        %v1663 = vrcp.pop %v1555
        %v1664 = vrcp.pop %v1557
        %v1665 = vrcp.pop %v1559
        %v1666 = vrcp.pop %v1561
        %v1667 = vrcp.pop %v1563
        %v1668 = vrcp.pop %v1565
        %v1669 = vrcp.pop %v1567
        %v1670 = vrcp.pop %v1569
        %v1671 = vrcp.pop %v1571
        %v1672 = vrcp.pop %v1573
        %v1673 = vrcp.pop %v1575
        %v1674 = vrcp.pop %v1577
        %v1675 = vrcp.pop %v1579
        %v1676 = vrcp.pop %v1581
        %v1677 = vrcp.pop %v1583
        %v1678 = vrcp.pop %v1585
        %v1679 = vrcp.pop %v1587
        %v1680 = vrcp.pop %v1589
        %v1681 = vrcp.pop %v1591
        %v1682 = vrcp.pop %v1593
        %v1683 = vrcp.pop %v1595
        %v1684 = vrcp.pop %v1597
        %v1685 = vrcp.pop %v1599
        %v1686 = vrcp.pop %v1601
        %v1687 = vrcp.pop %v1603
        %v1688 = vrcp.pop %v1605
        %v1689 = vrcp.pop %v1607
        %v1690 = vrcp.pop %v1609
        %v1691 = vrcp.pop %v1611
        %v1692 = vrcp.pop %v1613
        %v1693 = vrcp.pop %v1615
        %v1694 = vrcp.pop %v1617
        %v1695 = vrcp.pop %v1619
        %v1696 = vrcp.pop %v1621
        %v1697 = vrcp.pop %v1623
        %v1698 = vrcp.pop %v1625
        %v1699 = vrcp.pop %v1627
        %v1700 = vrcp.pop %v1629
        %v1701 = vrcp.pop %v1631
        %v1702 = vrcp.pop %v1633
        %v1703 = vrcp.pop %v1635
        %v1704 = vrcp.pop %v1637
        %v1705 = vrcp.pop %v1639
        %v1706 = vrcp.pop %v1641
        %v1707 = vrcp.pop %v1643
        %v1708 = vmul.f32 %v1389, %v1644
        %v1709 = vmul.f32 %v1391, %v1645
        %v1710 = vmul.f32 %v1393, %v1646
        %v1711 = vmul.f32 %v1395, %v1647
        %v1712 = vmul.f32 %v1397, %v1648
        %v1713 = vmul.f32 %v1399, %v1649
        %v1714 = vmul.f32 %v1401, %v1650
        %v1715 = vmul.f32 %v1403, %v1651
        %v1716 = vmul.f32 %v1405, %v1652
        %v1717 = vmul.f32 %v1407, %v1653
        %v1718 = vmul.f32 %v1409, %v1654
        %v1719 = vmul.f32 %v1411, %v1655
        %v1720 = vmul.f32 %v1413, %v1656
        %v1721 = vmul.f32 %v1415, %v1657
        %v1722 = vmul.f32 %v1417, %v1658
        %v1723 = vmul.f32 %v1419, %v1659
        %v1724 = vmul.f32 %v1421, %v1660
        %v1725 = vmul.f32 %v1423, %v1661
        %v1726 = vmul.f32 %v1425, %v1662
        %v1727 = vmul.f32 %v1427, %v1663
        %v1728 = vmul.f32 %v1429, %v1664
        %v1729 = vmul.f32 %v1431, %v1665
        %v1730 = vmul.f32 %v1433, %v1666
        %v1731 = vmul.f32 %v1435, %v1667
        %v1732 = vmul.f32 %v1437, %v1668
        %v1733 = vmul.f32 %v1439, %v1669
        %v1734 = vmul.f32 %v1441, %v1670
        %v1735 = vmul.f32 %v1443, %v1671
        %v1736 = vmul.f32 %v1445, %v1672
        %v1737 = vmul.f32 %v1447, %v1673
        %v1738 = vmul.f32 %v1449, %v1674
        %v1739 = vmul.f32 %v1451, %v1675
        %v1740 = vmul.f32 %v1453, %v1676
        %v1741 = vmul.f32 %v1455, %v1677
        %v1742 = vmul.f32 %v1457, %v1678
        %v1743 = vmul.f32 %v1459, %v1679
        %v1744 = vmul.f32 %v1461, %v1680
        %v1745 = vmul.f32 %v1463, %v1681
        %v1746 = vmul.f32 %v1465, %v1682
        %v1747 = vmul.f32 %v1467, %v1683
        %v1748 = vmul.f32 %v1469, %v1684
        %v1749 = vmul.f32 %v1471, %v1685
        %v1750 = vmul.f32 %v1473, %v1686
        %v1751 = vmul.f32 %v1475, %v1687
        %v1752 = vmul.f32 %v1477, %v1688
        %v1753 = vmul.f32 %v1479, %v1689
        %v1754 = vmul.f32 %v1481, %v1690
        %v1755 = vmul.f32 %v1483, %v1691
        %v1756 = vmul.f32 %v1485, %v1692
        %v1757 = vmul.f32 %v1487, %v1693
        %v1758 = vmul.f32 %v1489, %v1694
        %v1759 = vmul.f32 %v1491, %v1695
        %v1760 = vmul.f32 %v1493, %v1696
        %v1761 = vmul.f32 %v1495, %v1697
        %v1762 = vmul.f32 %v1497, %v1698
        %v1763 = vmul.f32 %v1499, %v1699
        %v1764 = vmul.f32 %v1501, %v1700
        %v1765 = vmul.f32 %v1503, %v1701
        %v1766 = vmul.f32 %v1505, %v1702
        %v1767 = vmul.f32 %v1507, %v1703
        %v1768 = vmul.f32 %v1509, %v1704
        %v1769 = vmul.f32 %v1511, %v1705
        %v1770 = vmul.f32 %v1513, %v1706
        %v1771 = vmul.f32 %v1515, %v1707
        %v1772 = vpack.c.bf16 %v1708, %v1708
        %v1773 = vpack.c.bf16 %v1709, %v1709
        %v1774 = vpack.c.bf16 %v1710, %v1710
        %v1775 = vpack.c.bf16 %v1711, %v1711
        %v1776 = vpack.c.bf16 %v1712, %v1712
        %v1777 = vpack.c.bf16 %v1713, %v1713
        %v1778 = vpack.c.bf16 %v1714, %v1714
        %v1779 = vpack.c.bf16 %v1715, %v1715
        %v1780 = vpack.c.bf16 %v1716, %v1716
        %v1781 = vpack.c.bf16 %v1717, %v1717
        %v1782 = vpack.c.bf16 %v1718, %v1718
        %v1783 = vpack.c.bf16 %v1719, %v1719
        %v1784 = vpack.c.bf16 %v1720, %v1720
        %v1785 = vpack.c.bf16 %v1721, %v1721
        %v1786 = vpack.c.bf16 %v1722, %v1722
        %v1787 = vpack.c.bf16 %v1723, %v1723
        %v1788 = vpack.c.bf16 %v1724, %v1724
        %v1789 = vpack.c.bf16 %v1725, %v1725
        %v1790 = vpack.c.bf16 %v1726, %v1726
        %v1791 = vpack.c.bf16 %v1727, %v1727
        %v1792 = vpack.c.bf16 %v1728, %v1728
        %v1793 = vpack.c.bf16 %v1729, %v1729
        %v1794 = vpack.c.bf16 %v1730, %v1730
        %v1795 = vpack.c.bf16 %v1731, %v1731
        %v1796 = vpack.c.bf16 %v1732, %v1732
        %v1797 = vpack.c.bf16 %v1733, %v1733
        %v1798 = vpack.c.bf16 %v1734, %v1734
        %v1799 = vpack.c.bf16 %v1735, %v1735
        %v1800 = vpack.c.bf16 %v1736, %v1736
        %v1801 = vpack.c.bf16 %v1737, %v1737
        %v1802 = vpack.c.bf16 %v1738, %v1738
        %v1803 = vpack.c.bf16 %v1739, %v1739
        %v1804 = vpack.c.bf16 %v1740, %v1740
        %v1805 = vpack.c.bf16 %v1741, %v1741
        %v1806 = vpack.c.bf16 %v1742, %v1742
        %v1807 = vpack.c.bf16 %v1743, %v1743
        %v1808 = vpack.c.bf16 %v1744, %v1744
        %v1809 = vpack.c.bf16 %v1745, %v1745
        %v1810 = vpack.c.bf16 %v1746, %v1746
        %v1811 = vpack.c.bf16 %v1747, %v1747
        %v1812 = vpack.c.bf16 %v1748, %v1748
        %v1813 = vpack.c.bf16 %v1749, %v1749
        %v1814 = vpack.c.bf16 %v1750, %v1750
        %v1815 = vpack.c.bf16 %v1751, %v1751
        %v1816 = vpack.c.bf16 %v1752, %v1752
        %v1817 = vpack.c.bf16 %v1753, %v1753
        %v1818 = vpack.c.bf16 %v1754, %v1754
        %v1819 = vpack.c.bf16 %v1755, %v1755
        %v1820 = vpack.c.bf16 %v1756, %v1756
        %v1821 = vpack.c.bf16 %v1757, %v1757
        %v1822 = vpack.c.bf16 %v1758, %v1758
        %v1823 = vpack.c.bf16 %v1759, %v1759
        %v1824 = vpack.c.bf16 %v1760, %v1760
        %v1825 = vpack.c.bf16 %v1761, %v1761
        %v1826 = vpack.c.bf16 %v1762, %v1762
        %v1827 = vpack.c.bf16 %v1763, %v1763
        %v1828 = vpack.c.bf16 %v1764, %v1764
        %v1829 = vpack.c.bf16 %v1765, %v1765
        %v1830 = vpack.c.bf16 %v1766, %v1766
        %v1831 = vpack.c.bf16 %v1767, %v1767
        %v1832 = vpack.c.bf16 %v1768, %v1768
        %v1833 = vpack.c.bf16 %v1769, %v1769
        %v1834 = vpack.c.bf16 %v1770, %v1770
        %v1835 = vpack.c.bf16 %v1771, %v1771
        %v1852 = vunpack.c.l.b16 %v1772
        %v1853 = vunpack.c.l.b16 %v1773
        %v1854 = vunpack.c.l.b16 %v1774
        %v1855 = vunpack.c.l.b16 %v1775
        %v1856 = vunpack.c.l.b16 %v1776
        %v1857 = vunpack.c.l.b16 %v1777
        %v1858 = vunpack.c.l.b16 %v1778
        %v1859 = vunpack.c.l.b16 %v1779
        %v1860 = vunpack.c.l.b16 %v1780
        %v1861 = vunpack.c.l.b16 %v1781
        %v1862 = vunpack.c.l.b16 %v1782
        %v1863 = vunpack.c.l.b16 %v1783
        %v1864 = vunpack.c.l.b16 %v1784
        %v1865 = vunpack.c.l.b16 %v1785
        %v1866 = vunpack.c.l.b16 %v1786
        %v1867 = vunpack.c.l.b16 %v1787
        %v1868 = vpack.c.b16 %v1853, %v1852
        %v1869 = vpack.c.b16 %v1855, %v1854
        %v1870 = vpack.c.b16 %v1857, %v1856
        %v1871 = vpack.c.b16 %v1859, %v1858
        %v1872 = vpack.c.b16 %v1861, %v1860
        %v1873 = vpack.c.b16 %v1863, %v1862
        %v1874 = vpack.c.b16 %v1865, %v1864
        %v1875 = vpack.c.b16 %v1867, %v1866
        %v1900 = vunpack.c.l.b16 %v423
        %v1901 = vunpack.c.l.b16 %v424
        %v1902 = vunpack.c.l.b16 %v425
        %v1903 = vunpack.c.l.b16 %v426
        %v1904 = vunpack.c.l.b16 %v427
        %v1905 = vunpack.c.l.b16 %v428
        %v1906 = vunpack.c.l.b16 %v429
        %v1907 = vunpack.c.l.b16 %v430
        %v1908 = vunpack.c.l.b16 %v431
        %v1909 = vunpack.c.l.b16 %v432
        %v1910 = vunpack.c.l.b16 %v433
        %v1911 = vunpack.c.l.b16 %v434
        %v1912 = vunpack.c.l.b16 %v435
        %v1913 = vunpack.c.l.b16 %v436
        %v1914 = vunpack.c.l.b16 %v437
        %v1915 = vunpack.c.l.b16 %v438
        %v1916 = vpack.c.b16 %v1901, %v1900
        %v1917 = vpack.c.b16 %v1903, %v1902
        %v1918 = vpack.c.b16 %v1905, %v1904
        %v1919 = vpack.c.b16 %v1907, %v1906
        %v1920 = vpack.c.b16 %v1909, %v1908
        %v1921 = vpack.c.b16 %v1911, %v1910
        %v1922 = vpack.c.b16 %v1913, %v1912
        %v1923 = vpack.c.b16 %v1915, %v1914
        %1932 = vmatpush.bf16.msra.mxu0 %v1923
        %1933 = vmatpush.bf16.msra.mxu0 %v1922
        %1934 = vmatpush.bf16.msra.mxu0 %v1921
        %1935 = vmatpush.bf16.msra.mxu0 %v1920
        %1936 = vmatpush.bf16.msra.mxu0 %v1919
        %1937 = vmatpush.bf16.msra.mxu0 %v1918
        %1938 = vmatpush.bf16.msra.mxu0 %v1917
        %1939 = vmatpush.bf16.msra.mxu0 %v1916
        %1940 = vmatmul.bf16.gmra.mxu0 %v1868
        %v1941 = vpop.f32.mrf.mxu0
        %v1942 = vadd.f32 0.0, %v1941
        %v1943 = vpop.f32.mrf.mxu0
        %v1944 = vadd.f32 0.0, %v1943
        %1945 = vmatmul.bf16.gmra.mxu0 %v1869
        %v1946 = vpop.f32.mrf.mxu0
        %v1947 = vadd.f32 0.0, %v1946
        %v1948 = vpop.f32.mrf.mxu0
        %v1949 = vadd.f32 0.0, %v1948
        %1950 = vmatmul.bf16.gmra.mxu0 %v1870
        %v1951 = vpop.f32.mrf.mxu0
        %v1952 = vadd.f32 0.0, %v1951
        %v1953 = vpop.f32.mrf.mxu0
        %v1954 = vadd.f32 0.0, %v1953
        %1955 = vmatmul.bf16.gmra.mxu0 %v1871
        %v1956 = vpop.f32.mrf.mxu0
        %v1957 = vadd.f32 0.0, %v1956
        %v1958 = vpop.f32.mrf.mxu0
        %v1959 = vadd.f32 0.0, %v1958
        %1960 = vmatmul.bf16.gmra.mxu0 %v1872
        %v1961 = vpop.f32.mrf.mxu0
        %v1962 = vadd.f32 0.0, %v1961
        %v1963 = vpop.f32.mrf.mxu0
        %v1964 = vadd.f32 0.0, %v1963
        %1965 = vmatmul.bf16.gmra.mxu0 %v1873
        %v1966 = vpop.f32.mrf.mxu0
        %v1967 = vadd.f32 0.0, %v1966
        %v1968 = vpop.f32.mrf.mxu0
        %v1969 = vadd.f32 0.0, %v1968
        %1970 = vmatmul.bf16.gmra.mxu0 %v1874
        %v1971 = vpop.f32.mrf.mxu0
        %v1972 = vadd.f32 0.0, %v1971
        %v1973 = vpop.f32.mrf.mxu0
        %v1974 = vadd.f32 0.0, %v1973
        %1975 = vmatmul.bf16.gmra.mxu0 %v1875
        %v1976 = vpop.f32.mrf.mxu0
        %v1977 = vadd.f32 0.0, %v1976
        %v1978 = vpop.f32.mrf.mxu0
        %v1979 = vadd.f32 0.0, %v1978
        %1980 = vdwg.mxu0
        %v1997 = vunpack.c.l.b16 %v1788
        %v1998 = vunpack.c.l.b16 %v1789
        %v1999 = vunpack.c.l.b16 %v1790
        %v2000 = vunpack.c.l.b16 %v1791
        %v2001 = vunpack.c.l.b16 %v1792
        %v2002 = vunpack.c.l.b16 %v1793
        %v2003 = vunpack.c.l.b16 %v1794
        %v2004 = vunpack.c.l.b16 %v1795
        %v2005 = vunpack.c.l.b16 %v1796
        %v2006 = vunpack.c.l.b16 %v1797
        %v2007 = vunpack.c.l.b16 %v1798
        %v2008 = vunpack.c.l.b16 %v1799
        %v2009 = vunpack.c.l.b16 %v1800
        %v2010 = vunpack.c.l.b16 %v1801
        %v2011 = vunpack.c.l.b16 %v1802
        %v2012 = vunpack.c.l.b16 %v1803
        %v2013 = vpack.c.b16 %v1998, %v1997
        %v2014 = vpack.c.b16 %v2000, %v1999
        %v2015 = vpack.c.b16 %v2002, %v2001
        %v2016 = vpack.c.b16 %v2004, %v2003
        %v2017 = vpack.c.b16 %v2006, %v2005
        %v2018 = vpack.c.b16 %v2008, %v2007
        %v2019 = vpack.c.b16 %v2010, %v2009
        %v2020 = vpack.c.b16 %v2012, %v2011
        %v2045 = vunpack.c.l.b16 %v439
        %v2046 = vunpack.c.l.b16 %v440
        %v2047 = vunpack.c.l.b16 %v441
        %v2048 = vunpack.c.l.b16 %v442
        %v2049 = vunpack.c.l.b16 %v443
        %v2050 = vunpack.c.l.b16 %v444
        %v2051 = vunpack.c.l.b16 %v445
        %v2052 = vunpack.c.l.b16 %v446
        %v2053 = vunpack.c.l.b16 %v447
        %v2054 = vunpack.c.l.b16 %v448
        %v2055 = vunpack.c.l.b16 %v449
        %v2056 = vunpack.c.l.b16 %v450
        %v2057 = vunpack.c.l.b16 %v451
        %v2058 = vunpack.c.l.b16 %v452
        %v2059 = vunpack.c.l.b16 %v453
        %v2060 = vunpack.c.l.b16 %v454
        %v2061 = vpack.c.b16 %v2046, %v2045
        %v2062 = vpack.c.b16 %v2048, %v2047
        %v2063 = vpack.c.b16 %v2050, %v2049
        %v2064 = vpack.c.b16 %v2052, %v2051
        %v2065 = vpack.c.b16 %v2054, %v2053
        %v2066 = vpack.c.b16 %v2056, %v2055
        %v2067 = vpack.c.b16 %v2058, %v2057
        %v2068 = vpack.c.b16 %v2060, %v2059
        %2077 = vmatpush.bf16.msra.mxu0 %v2068
        %2078 = vmatpush.bf16.msra.mxu0 %v2067
        %2079 = vmatpush.bf16.msra.mxu0 %v2066
        %2080 = vmatpush.bf16.msra.mxu0 %v2065
        %2081 = vmatpush.bf16.msra.mxu0 %v2064
        %2082 = vmatpush.bf16.msra.mxu0 %v2063
        %2083 = vmatpush.bf16.msra.mxu0 %v2062
        %2084 = vmatpush.bf16.msra.mxu0 %v2061
        %2085 = vmatmul.bf16.gmra.mxu0 %v2013
        %v2086 = vpop.f32.mrf.mxu0
        %v2087 = vadd.f32 0.0, %v2086
        %v2088 = vpop.f32.mrf.mxu0
        %v2089 = vadd.f32 0.0, %v2088
        %2090 = vmatmul.bf16.gmra.mxu0 %v2014
        %v2091 = vpop.f32.mrf.mxu0
        %v2092 = vadd.f32 0.0, %v2091
        %v2093 = vpop.f32.mrf.mxu0
        %v2094 = vadd.f32 0.0, %v2093
        %2095 = vmatmul.bf16.gmra.mxu0 %v2015
        %v2096 = vpop.f32.mrf.mxu0
        %v2097 = vadd.f32 0.0, %v2096
        %v2098 = vpop.f32.mrf.mxu0
        %v2099 = vadd.f32 0.0, %v2098
        %2100 = vmatmul.bf16.gmra.mxu0 %v2016
        %v2101 = vpop.f32.mrf.mxu0
        %v2102 = vadd.f32 0.0, %v2101
        %v2103 = vpop.f32.mrf.mxu0
        %v2104 = vadd.f32 0.0, %v2103
        %2105 = vmatmul.bf16.gmra.mxu0 %v2017
        %v2106 = vpop.f32.mrf.mxu0
        %v2107 = vadd.f32 0.0, %v2106
        %v2108 = vpop.f32.mrf.mxu0
        %v2109 = vadd.f32 0.0, %v2108
        %2110 = vmatmul.bf16.gmra.mxu0 %v2018
        %v2111 = vpop.f32.mrf.mxu0
        %v2112 = vadd.f32 0.0, %v2111
        %v2113 = vpop.f32.mrf.mxu0
        %v2114 = vadd.f32 0.0, %v2113
        %2115 = vmatmul.bf16.gmra.mxu0 %v2019
        %v2116 = vpop.f32.mrf.mxu0
        %v2117 = vadd.f32 0.0, %v2116
        %v2118 = vpop.f32.mrf.mxu0
        %v2119 = vadd.f32 0.0, %v2118
        %2120 = vmatmul.bf16.gmra.mxu0 %v2020
        %v2121 = vpop.f32.mrf.mxu0
        %v2122 = vadd.f32 0.0, %v2121
        %v2123 = vpop.f32.mrf.mxu0
        %v2124 = vadd.f32 0.0, %v2123
        %2125 = vdwg.mxu0
        %v2142 = vunpack.c.l.b16 %v1804
        %v2143 = vunpack.c.l.b16 %v1805
        %v2144 = vunpack.c.l.b16 %v1806
        %v2145 = vunpack.c.l.b16 %v1807
        %v2146 = vunpack.c.l.b16 %v1808
        %v2147 = vunpack.c.l.b16 %v1809
        %v2148 = vunpack.c.l.b16 %v1810
        %v2149 = vunpack.c.l.b16 %v1811
        %v2150 = vunpack.c.l.b16 %v1812
        %v2151 = vunpack.c.l.b16 %v1813
        %v2152 = vunpack.c.l.b16 %v1814
        %v2153 = vunpack.c.l.b16 %v1815
        %v2154 = vunpack.c.l.b16 %v1816
        %v2155 = vunpack.c.l.b16 %v1817
        %v2156 = vunpack.c.l.b16 %v1818
        %v2157 = vunpack.c.l.b16 %v1819
        %v2158 = vpack.c.b16 %v2143, %v2142
        %v2159 = vpack.c.b16 %v2145, %v2144
        %v2160 = vpack.c.b16 %v2147, %v2146
        %v2161 = vpack.c.b16 %v2149, %v2148
        %v2162 = vpack.c.b16 %v2151, %v2150
        %v2163 = vpack.c.b16 %v2153, %v2152
        %v2164 = vpack.c.b16 %v2155, %v2154
        %v2165 = vpack.c.b16 %v2157, %v2156
        %v2190 = vunpack.c.l.b16 %v455
        %v2191 = vunpack.c.l.b16 %v456
        %v2192 = vunpack.c.l.b16 %v457
        %v2193 = vunpack.c.l.b16 %v458
        %v2194 = vunpack.c.l.b16 %v459
        %v2195 = vunpack.c.l.b16 %v460
        %v2196 = vunpack.c.l.b16 %v461
        %v2197 = vunpack.c.l.b16 %v462
        %v2198 = vunpack.c.l.b16 %v463
        %v2199 = vunpack.c.l.b16 %v464
        %v2200 = vunpack.c.l.b16 %v465
        %v2201 = vunpack.c.l.b16 %v466
        %v2202 = vunpack.c.l.b16 %v467
        %v2203 = vunpack.c.l.b16 %v468
        %v2204 = vunpack.c.l.b16 %v469
        %v2205 = vunpack.c.l.b16 %v470
        %v2206 = vpack.c.b16 %v2191, %v2190
        %v2207 = vpack.c.b16 %v2193, %v2192
        %v2208 = vpack.c.b16 %v2195, %v2194
        %v2209 = vpack.c.b16 %v2197, %v2196
        %v2210 = vpack.c.b16 %v2199, %v2198
        %v2211 = vpack.c.b16 %v2201, %v2200
        %v2212 = vpack.c.b16 %v2203, %v2202
        %v2213 = vpack.c.b16 %v2205, %v2204
        %2222 = vmatpush.bf16.msra.mxu0 %v2213
        %2223 = vmatpush.bf16.msra.mxu0 %v2212
        %2224 = vmatpush.bf16.msra.mxu0 %v2211
        %2225 = vmatpush.bf16.msra.mxu0 %v2210
        %2226 = vmatpush.bf16.msra.mxu0 %v2209
        %2227 = vmatpush.bf16.msra.mxu0 %v2208
        %2228 = vmatpush.bf16.msra.mxu0 %v2207
        %2229 = vmatpush.bf16.msra.mxu0 %v2206
        %2230 = vmatmul.bf16.gmra.mxu0 %v2158
        %v2231 = vpop.f32.mrf.mxu0
        %v2232 = vadd.f32 0.0, %v2231
        %v2233 = vpop.f32.mrf.mxu0
        %v2234 = vadd.f32 0.0, %v2233
        %2235 = vmatmul.bf16.gmra.mxu0 %v2159
        %v2236 = vpop.f32.mrf.mxu0
        %v2237 = vadd.f32 0.0, %v2236
        %v2238 = vpop.f32.mrf.mxu0
        %v2239 = vadd.f32 0.0, %v2238
        %2240 = vmatmul.bf16.gmra.mxu0 %v2160
        %v2241 = vpop.f32.mrf.mxu0
        %v2242 = vadd.f32 0.0, %v2241
        %v2243 = vpop.f32.mrf.mxu0
        %v2244 = vadd.f32 0.0, %v2243
        %2245 = vmatmul.bf16.gmra.mxu0 %v2161
        %v2246 = vpop.f32.mrf.mxu0
        %v2247 = vadd.f32 0.0, %v2246
        %v2248 = vpop.f32.mrf.mxu0
        %v2249 = vadd.f32 0.0, %v2248
        %2250 = vmatmul.bf16.gmra.mxu0 %v2162
        %v2251 = vpop.f32.mrf.mxu0
        %v2252 = vadd.f32 0.0, %v2251
        %v2253 = vpop.f32.mrf.mxu0
        %v2254 = vadd.f32 0.0, %v2253
        %2255 = vmatmul.bf16.gmra.mxu0 %v2163
        %v2256 = vpop.f32.mrf.mxu0
        %v2257 = vadd.f32 0.0, %v2256
        %v2258 = vpop.f32.mrf.mxu0
        %v2259 = vadd.f32 0.0, %v2258
        %2260 = vmatmul.bf16.gmra.mxu0 %v2164
        %v2261 = vpop.f32.mrf.mxu0
        %v2262 = vadd.f32 0.0, %v2261
        %v2263 = vpop.f32.mrf.mxu0
        %v2264 = vadd.f32 0.0, %v2263
        %2265 = vmatmul.bf16.gmra.mxu0 %v2165
        %v2266 = vpop.f32.mrf.mxu0
        %v2267 = vadd.f32 0.0, %v2266
        %v2268 = vpop.f32.mrf.mxu0
        %v2269 = vadd.f32 0.0, %v2268
        %2270 = vdwg.mxu0
        %v2287 = vunpack.c.l.b16 %v1820
        %v2288 = vunpack.c.l.b16 %v1821
        %v2289 = vunpack.c.l.b16 %v1822
        %v2290 = vunpack.c.l.b16 %v1823
        %v2291 = vunpack.c.l.b16 %v1824
        %v2292 = vunpack.c.l.b16 %v1825
        %v2293 = vunpack.c.l.b16 %v1826
        %v2294 = vunpack.c.l.b16 %v1827
        %v2295 = vunpack.c.l.b16 %v1828
        %v2296 = vunpack.c.l.b16 %v1829
        %v2297 = vunpack.c.l.b16 %v1830
        %v2298 = vunpack.c.l.b16 %v1831
        %v2299 = vunpack.c.l.b16 %v1832
        %v2300 = vunpack.c.l.b16 %v1833
        %v2301 = vunpack.c.l.b16 %v1834
        %v2302 = vunpack.c.l.b16 %v1835
        %v2303 = vpack.c.b16 %v2288, %v2287
        %v2304 = vpack.c.b16 %v2290, %v2289
        %v2305 = vpack.c.b16 %v2292, %v2291
        %v2306 = vpack.c.b16 %v2294, %v2293
        %v2307 = vpack.c.b16 %v2296, %v2295
        %v2308 = vpack.c.b16 %v2298, %v2297
        %v2309 = vpack.c.b16 %v2300, %v2299
        %v2310 = vpack.c.b16 %v2302, %v2301
        %v2335 = vunpack.c.l.b16 %v471
        %v2336 = vunpack.c.l.b16 %v472
        %v2337 = vunpack.c.l.b16 %v473
        %v2338 = vunpack.c.l.b16 %v474
        %v2339 = vunpack.c.l.b16 %v475
        %v2340 = vunpack.c.l.b16 %v476
        %v2341 = vunpack.c.l.b16 %v477
        %v2342 = vunpack.c.l.b16 %v478
        %v2343 = vunpack.c.l.b16 %v479
        %v2344 = vunpack.c.l.b16 %v480
        %v2345 = vunpack.c.l.b16 %v481
        %v2346 = vunpack.c.l.b16 %v482
        %v2347 = vunpack.c.l.b16 %v483
        %v2348 = vunpack.c.l.b16 %v484
        %v2349 = vunpack.c.l.b16 %v485
        %v2350 = vunpack.c.l.b16 %v486
        %v2351 = vpack.c.b16 %v2336, %v2335
        %v2352 = vpack.c.b16 %v2338, %v2337
        %v2353 = vpack.c.b16 %v2340, %v2339
        %v2354 = vpack.c.b16 %v2342, %v2341
        %v2355 = vpack.c.b16 %v2344, %v2343
        %v2356 = vpack.c.b16 %v2346, %v2345
        %v2357 = vpack.c.b16 %v2348, %v2347
        %v2358 = vpack.c.b16 %v2350, %v2349
        %2367 = vmatpush.bf16.msra.mxu0 %v2358
        %2368 = vmatpush.bf16.msra.mxu0 %v2357
        %2369 = vmatpush.bf16.msra.mxu0 %v2356
        %2370 = vmatpush.bf16.msra.mxu0 %v2355
        %2371 = vmatpush.bf16.msra.mxu0 %v2354
        %2372 = vmatpush.bf16.msra.mxu0 %v2353
        %2373 = vmatpush.bf16.msra.mxu0 %v2352
        %2374 = vmatpush.bf16.msra.mxu0 %v2351
        %2375 = vmatmul.bf16.gmra.mxu0 %v2303
        %v2376 = vpop.f32.mrf.mxu0
        %v2377 = vadd.f32 0.0, %v2376
        %v2378 = vpop.f32.mrf.mxu0
        %v2379 = vadd.f32 0.0, %v2378
        %2380 = vmatmul.bf16.gmra.mxu0 %v2304
        %v2381 = vpop.f32.mrf.mxu0
        %v2382 = vadd.f32 0.0, %v2381
        %v2383 = vpop.f32.mrf.mxu0
        %v2384 = vadd.f32 0.0, %v2383
        %2385 = vmatmul.bf16.gmra.mxu0 %v2305
        %v2386 = vpop.f32.mrf.mxu0
        %v2387 = vadd.f32 0.0, %v2386
        %v2388 = vpop.f32.mrf.mxu0
        %v2389 = vadd.f32 0.0, %v2388
        %2390 = vmatmul.bf16.gmra.mxu0 %v2306
        %v2391 = vpop.f32.mrf.mxu0
        %v2392 = vadd.f32 0.0, %v2391
        %v2393 = vpop.f32.mrf.mxu0
        %v2394 = vadd.f32 0.0, %v2393
        %2395 = vmatmul.bf16.gmra.mxu0 %v2307
        %v2396 = vpop.f32.mrf.mxu0
        %v2397 = vadd.f32 0.0, %v2396
        %v2398 = vpop.f32.mrf.mxu0
        %v2399 = vadd.f32 0.0, %v2398
        %2400 = vmatmul.bf16.gmra.mxu0 %v2308
        %v2401 = vpop.f32.mrf.mxu0
        %v2402 = vadd.f32 0.0, %v2401
        %v2403 = vpop.f32.mrf.mxu0
        %v2404 = vadd.f32 0.0, %v2403
        %2405 = vmatmul.bf16.gmra.mxu0 %v2309
        %v2406 = vpop.f32.mrf.mxu0
        %v2407 = vadd.f32 0.0, %v2406
        %v2408 = vpop.f32.mrf.mxu0
        %v2409 = vadd.f32 0.0, %v2408
        %2410 = vmatmul.bf16.gmra.mxu0 %v2310
        %v2411 = vpop.f32.mrf.mxu0
        %v2412 = vadd.f32 0.0, %v2411
        %v2413 = vpop.f32.mrf.mxu0
        %v2414 = vadd.f32 0.0, %v2413
        %2415 = vdwg.mxu0
        %v2416 = vpack.c.bf16 %v1942, %v1942
        %v2417 = vpack.c.bf16 %v1944, %v1944
        %v2418 = vpack.c.bf16 %v1947, %v1947
        %v2419 = vpack.c.bf16 %v1949, %v1949
        %v2420 = vpack.c.bf16 %v1952, %v1952
        %v2421 = vpack.c.bf16 %v1954, %v1954
        %v2422 = vpack.c.bf16 %v1957, %v1957
        %v2423 = vpack.c.bf16 %v1959, %v1959
        %v2424 = vpack.c.bf16 %v1962, %v1962
        %v2425 = vpack.c.bf16 %v1964, %v1964
        %v2426 = vpack.c.bf16 %v1967, %v1967
        %v2427 = vpack.c.bf16 %v1969, %v1969
        %v2428 = vpack.c.bf16 %v1972, %v1972
        %v2429 = vpack.c.bf16 %v1974, %v1974
        %v2430 = vpack.c.bf16 %v1977, %v1977
        %v2431 = vpack.c.bf16 %v1979, %v1979
        %v2432 = vpack.c.bf16 %v2087, %v2087
        %v2433 = vpack.c.bf16 %v2089, %v2089
        %v2434 = vpack.c.bf16 %v2092, %v2092
        %v2435 = vpack.c.bf16 %v2094, %v2094
        %v2436 = vpack.c.bf16 %v2097, %v2097
        %v2437 = vpack.c.bf16 %v2099, %v2099
        %v2438 = vpack.c.bf16 %v2102, %v2102
        %v2439 = vpack.c.bf16 %v2104, %v2104
        %v2440 = vpack.c.bf16 %v2107, %v2107
        %v2441 = vpack.c.bf16 %v2109, %v2109
        %v2442 = vpack.c.bf16 %v2112, %v2112
        %v2443 = vpack.c.bf16 %v2114, %v2114
        %v2444 = vpack.c.bf16 %v2117, %v2117
        %v2445 = vpack.c.bf16 %v2119, %v2119
        %v2446 = vpack.c.bf16 %v2122, %v2122
        %v2447 = vpack.c.bf16 %v2124, %v2124
        %v2448 = vpack.c.bf16 %v2232, %v2232
        %v2449 = vpack.c.bf16 %v2234, %v2234
        %v2450 = vpack.c.bf16 %v2237, %v2237
        %v2451 = vpack.c.bf16 %v2239, %v2239
        %v2452 = vpack.c.bf16 %v2242, %v2242
        %v2453 = vpack.c.bf16 %v2244, %v2244
        %v2454 = vpack.c.bf16 %v2247, %v2247
        %v2455 = vpack.c.bf16 %v2249, %v2249
        %v2456 = vpack.c.bf16 %v2252, %v2252
        %v2457 = vpack.c.bf16 %v2254, %v2254
        %v2458 = vpack.c.bf16 %v2257, %v2257
        %v2459 = vpack.c.bf16 %v2259, %v2259
        %v2460 = vpack.c.bf16 %v2262, %v2262
        %v2461 = vpack.c.bf16 %v2264, %v2264
        %v2462 = vpack.c.bf16 %v2267, %v2267
        %v2463 = vpack.c.bf16 %v2269, %v2269
        %v2464 = vpack.c.bf16 %v2377, %v2377
        %v2465 = vpack.c.bf16 %v2379, %v2379
        %v2466 = vpack.c.bf16 %v2382, %v2382
        %v2467 = vpack.c.bf16 %v2384, %v2384
        %v2468 = vpack.c.bf16 %v2387, %v2387
        %v2469 = vpack.c.bf16 %v2389, %v2389
        %v2470 = vpack.c.bf16 %v2392, %v2392
        %v2471 = vpack.c.bf16 %v2394, %v2394
        %v2472 = vpack.c.bf16 %v2397, %v2397
        %v2473 = vpack.c.bf16 %v2399, %v2399
        %v2474 = vpack.c.bf16 %v2402, %v2402
        %v2475 = vpack.c.bf16 %v2404, %v2404
        %v2476 = vpack.c.bf16 %v2407, %v2407
        %v2477 = vpack.c.bf16 %v2409, %v2409
        %v2478 = vpack.c.bf16 %v2412, %v2412
        %v2479 = vpack.c.bf16 %v2414, %v2414
        %v2480 = vld [vmem:[%s3] sm:$0xf]
        %v2481 = vld [vmem:[%s3 + $0x4] sm:$0xf]
        %v2482 = vld [vmem:[%s3 + $0x8] sm:$0xf]
        %v2483 = vld [vmem:[%s3 + $0xc] sm:$0xf]
        %s2484 = scalar_lea.vmem %s3, 16
        %v2485 = vld [vmem:[%s2484] sm:$0xf]
        %v2486 = vld [vmem:[%s2484 + $0x4] sm:$0xf]
        %v2487 = vld [vmem:[%s2484 + $0x8] sm:$0xf]
        %v2488 = vld [vmem:[%s2484 + $0xc] sm:$0xf]
        %v2505 = vunpack.c.l.b16 %v2432
        %v2506 = vunpack.c.l.b16 %v2433
        %v2507 = vunpack.c.l.b16 %v2434
        %v2508 = vunpack.c.l.b16 %v2435
        %v2509 = vunpack.c.l.b16 %v2436
        %v2510 = vunpack.c.l.b16 %v2437
        %v2511 = vunpack.c.l.b16 %v2438
        %v2512 = vunpack.c.l.b16 %v2439
        %v2513 = vunpack.c.l.b16 %v2440
        %v2514 = vunpack.c.l.b16 %v2441
        %v2515 = vunpack.c.l.b16 %v2442
        %v2516 = vunpack.c.l.b16 %v2443
        %v2517 = vunpack.c.l.b16 %v2444
        %v2518 = vunpack.c.l.b16 %v2445
        %v2519 = vunpack.c.l.b16 %v2446
        %v2520 = vunpack.c.l.b16 %v2447
        %v2521 = vpack.c.b16 %v2506, %v2505
        %v2522 = vpack.c.b16 %v2508, %v2507
        %v2523 = vpack.c.b16 %v2510, %v2509
        %v2524 = vpack.c.b16 %v2512, %v2511
        %v2525 = vpack.c.b16 %v2514, %v2513
        %v2526 = vpack.c.b16 %v2516, %v2515
        %v2527 = vpack.c.b16 %v2518, %v2517
        %v2528 = vpack.c.b16 %v2520, %v2519
        %v2533 = vunpack.c.l.b16 %v2485
        %v2534 = vunpack.c.l.b16 %v2486
        %v2535 = vunpack.c.l.b16 %v2487
        %v2536 = vunpack.c.l.b16 %v2488
        %v2537 = vpack.c.b16 %v2534, %v2533
        %v2538 = vpack.c.b16 %v2536, %v2535
        %v2542 = vsel %vm567, %v2521, 0
        %v2545 = vsel %vm567, %v2522, 0
        %v2548 = vsel %vm567, %v2523, 0
        %v2551 = vsel %vm567, %v2524, 0
        %v2554 = vsel %vm567, %v2525, 0
        %v2557 = vsel %vm567, %v2526, 0
        %v2560 = vsel %vm567, %v2527, 0
        %v2563 = vsel %vm567, %v2528, 0
        %2565 = vmatpush.bf16.msra.mxu0 0
        %2566 = vmatpush.bf16.msra.mxu0 0
        %2567 = vmatpush.bf16.msra.mxu0 0
        %2568 = vmatpush.bf16.msra.mxu0 0
        %2569 = vmatpush.bf16.msra.mxu0 0
        %2570 = vmatpush.bf16.msra.mxu0 0
        %2571 = vmatpush.bf16.msra.mxu0 %v2538
        %2572 = vmatpush.bf16.msra.mxu0 %v2537
        %2573 = vmatmul.bf16.gmra.mxu0 %v2542
        %v2574 = vpop.f32.mrf.mxu0
        %v2575 = vadd.f32 0.0, %v2574
        %v2576 = vpop.f32.mrf.mxu0
        %v2577 = vadd.f32 0.0, %v2576
        %2578 = vmatmul.bf16.gmra.mxu0 %v2545
        %v2579 = vpop.f32.mrf.mxu0
        %v2580 = vadd.f32 0.0, %v2579
        %v2581 = vpop.f32.mrf.mxu0
        %v2582 = vadd.f32 0.0, %v2581
        %2583 = vmatmul.bf16.gmra.mxu0 %v2548
        %v2584 = vpop.f32.mrf.mxu0
        %v2585 = vadd.f32 0.0, %v2584
        %v2586 = vpop.f32.mrf.mxu0
        %v2587 = vadd.f32 0.0, %v2586
        %2588 = vmatmul.bf16.gmra.mxu0 %v2551
        %v2589 = vpop.f32.mrf.mxu0
        %v2590 = vadd.f32 0.0, %v2589
        %v2591 = vpop.f32.mrf.mxu0
        %v2592 = vadd.f32 0.0, %v2591
        %2593 = vmatmul.bf16.gmra.mxu0 %v2554
        %v2594 = vpop.f32.mrf.mxu0
        %v2595 = vadd.f32 0.0, %v2594
        %v2596 = vpop.f32.mrf.mxu0
        %v2597 = vadd.f32 0.0, %v2596
        %2598 = vmatmul.bf16.gmra.mxu0 %v2557
        %v2599 = vpop.f32.mrf.mxu0
        %v2600 = vadd.f32 0.0, %v2599
        %v2601 = vpop.f32.mrf.mxu0
        %v2602 = vadd.f32 0.0, %v2601
        %2603 = vmatmul.bf16.gmra.mxu0 %v2560
        %v2604 = vpop.f32.mrf.mxu0
        %v2605 = vadd.f32 0.0, %v2604
        %v2606 = vpop.f32.mrf.mxu0
        %v2607 = vadd.f32 0.0, %v2606
        %2608 = vmatmul.bf16.gmra.mxu0 %v2563
        %v2609 = vpop.f32.mrf.mxu0
        %v2610 = vadd.f32 0.0, %v2609
        %v2611 = vpop.f32.mrf.mxu0
        %v2612 = vadd.f32 0.0, %v2611
        %2613 = vdwg.mxu0
        %v2630 = vunpack.c.l.b16 %v2416
        %v2631 = vunpack.c.l.b16 %v2417
        %v2632 = vunpack.c.l.b16 %v2418
        %v2633 = vunpack.c.l.b16 %v2419
        %v2634 = vunpack.c.l.b16 %v2420
        %v2635 = vunpack.c.l.b16 %v2421
        %v2636 = vunpack.c.l.b16 %v2422
        %v2637 = vunpack.c.l.b16 %v2423
        %v2638 = vunpack.c.l.b16 %v2424
        %v2639 = vunpack.c.l.b16 %v2425
        %v2640 = vunpack.c.l.b16 %v2426
        %v2641 = vunpack.c.l.b16 %v2427
        %v2642 = vunpack.c.l.b16 %v2428
        %v2643 = vunpack.c.l.b16 %v2429
        %v2644 = vunpack.c.l.b16 %v2430
        %v2645 = vunpack.c.l.b16 %v2431
        %v2646 = vpack.c.b16 %v2631, %v2630
        %v2647 = vpack.c.b16 %v2633, %v2632
        %v2648 = vpack.c.b16 %v2635, %v2634
        %v2649 = vpack.c.b16 %v2637, %v2636
        %v2650 = vpack.c.b16 %v2639, %v2638
        %v2651 = vpack.c.b16 %v2641, %v2640
        %v2652 = vpack.c.b16 %v2643, %v2642
        %v2653 = vpack.c.b16 %v2645, %v2644
        %v2658 = vunpack.c.l.b16 %v2480
        %v2659 = vunpack.c.l.b16 %v2481
        %v2660 = vunpack.c.l.b16 %v2482
        %v2661 = vunpack.c.l.b16 %v2483
        %v2662 = vpack.c.b16 %v2659, %v2658
        %v2663 = vpack.c.b16 %v2661, %v2660
        %v2667 = vsel %vm567, %v2646, 0
        %v2670 = vsel %vm567, %v2647, 0
        %v2673 = vsel %vm567, %v2648, 0
        %v2676 = vsel %vm567, %v2649, 0
        %v2679 = vsel %vm567, %v2650, 0
        %v2682 = vsel %vm567, %v2651, 0
        %v2685 = vsel %vm567, %v2652, 0
        %v2688 = vsel %vm567, %v2653, 0
        %2690 = vmatpush.bf16.msra.mxu0 0
        %2691 = vmatpush.bf16.msra.mxu0 0
        %2692 = vmatpush.bf16.msra.mxu0 0
        %2693 = vmatpush.bf16.msra.mxu0 0
        %2694 = vmatpush.bf16.msra.mxu0 0
        %2695 = vmatpush.bf16.msra.mxu0 0
        %2696 = vmatpush.bf16.msra.mxu0 %v2663
        %2697 = vmatpush.bf16.msra.mxu0 %v2662
        %2698 = vmatmul.bf16.gmra.mxu0 %v2667
        %v2699 = vpop.f32.mrf.mxu0
        %v2700 = vadd.f32 %v2575, %v2699
        %v2701 = vpop.f32.mrf.mxu0
        %v2702 = vadd.f32 %v2577, %v2701
        %2703 = vmatmul.bf16.gmra.mxu0 %v2670
        %v2704 = vpop.f32.mrf.mxu0
        %v2705 = vadd.f32 %v2580, %v2704
        %v2706 = vpop.f32.mrf.mxu0
        %v2707 = vadd.f32 %v2582, %v2706
        %2708 = vmatmul.bf16.gmra.mxu0 %v2673
        %v2709 = vpop.f32.mrf.mxu0
        %v2710 = vadd.f32 %v2585, %v2709
        %v2711 = vpop.f32.mrf.mxu0
        %v2712 = vadd.f32 %v2587, %v2711
        %2713 = vmatmul.bf16.gmra.mxu0 %v2676
        %v2714 = vpop.f32.mrf.mxu0
        %v2715 = vadd.f32 %v2590, %v2714
        %v2716 = vpop.f32.mrf.mxu0
        %v2717 = vadd.f32 %v2592, %v2716
        %2718 = vmatmul.bf16.gmra.mxu0 %v2679
        %v2719 = vpop.f32.mrf.mxu0
        %v2720 = vadd.f32 %v2595, %v2719
        %v2721 = vpop.f32.mrf.mxu0
        %v2722 = vadd.f32 %v2597, %v2721
        %2723 = vmatmul.bf16.gmra.mxu0 %v2682
        %v2724 = vpop.f32.mrf.mxu0
        %v2725 = vadd.f32 %v2600, %v2724
        %v2726 = vpop.f32.mrf.mxu0
        %v2727 = vadd.f32 %v2602, %v2726
        %2728 = vmatmul.bf16.gmra.mxu0 %v2685
        %v2729 = vpop.f32.mrf.mxu0
        %v2730 = vadd.f32 %v2605, %v2729
        %v2731 = vpop.f32.mrf.mxu0
        %v2732 = vadd.f32 %v2607, %v2731
        %2733 = vmatmul.bf16.gmra.mxu0 %v2688
        %v2734 = vpop.f32.mrf.mxu0
        %v2735 = vadd.f32 %v2610, %v2734
        %v2736 = vpop.f32.mrf.mxu0
        %v2737 = vadd.f32 %v2612, %v2736
        %2738 = vdwg.mxu0
        %s2739 = scalar_lea.vmem %s3, 32
        %v2740 = vld [vmem:[%s2739] sm:$0xf]
        %v2741 = vld [vmem:[%s2739 + $0x4] sm:$0xf]
        %v2742 = vld [vmem:[%s2739 + $0x8] sm:$0xf]
        %v2743 = vld [vmem:[%s2739 + $0xc] sm:$0xf]
        %v2760 = vunpack.c.l.b16 %v2448
        %v2761 = vunpack.c.l.b16 %v2449
        %v2762 = vunpack.c.l.b16 %v2450
        %v2763 = vunpack.c.l.b16 %v2451
        %v2764 = vunpack.c.l.b16 %v2452
        %v2765 = vunpack.c.l.b16 %v2453
        %v2766 = vunpack.c.l.b16 %v2454
        %v2767 = vunpack.c.l.b16 %v2455
        %v2768 = vunpack.c.l.b16 %v2456
        %v2769 = vunpack.c.l.b16 %v2457
        %v2770 = vunpack.c.l.b16 %v2458
        %v2771 = vunpack.c.l.b16 %v2459
        %v2772 = vunpack.c.l.b16 %v2460
        %v2773 = vunpack.c.l.b16 %v2461
        %v2774 = vunpack.c.l.b16 %v2462
        %v2775 = vunpack.c.l.b16 %v2463
        %v2776 = vpack.c.b16 %v2761, %v2760
        %v2777 = vpack.c.b16 %v2763, %v2762
        %v2778 = vpack.c.b16 %v2765, %v2764
        %v2779 = vpack.c.b16 %v2767, %v2766
        %v2780 = vpack.c.b16 %v2769, %v2768
        %v2781 = vpack.c.b16 %v2771, %v2770
        %v2782 = vpack.c.b16 %v2773, %v2772
        %v2783 = vpack.c.b16 %v2775, %v2774
        %v2788 = vunpack.c.l.b16 %v2740
        %v2789 = vunpack.c.l.b16 %v2741
        %v2790 = vunpack.c.l.b16 %v2742
        %v2791 = vunpack.c.l.b16 %v2743
        %v2792 = vpack.c.b16 %v2789, %v2788
        %v2793 = vpack.c.b16 %v2791, %v2790
        %v2797 = vsel %vm567, %v2776, 0
        %v2800 = vsel %vm567, %v2777, 0
        %v2803 = vsel %vm567, %v2778, 0
        %v2806 = vsel %vm567, %v2779, 0
        %v2809 = vsel %vm567, %v2780, 0
        %v2812 = vsel %vm567, %v2781, 0
        %v2815 = vsel %vm567, %v2782, 0
        %v2818 = vsel %vm567, %v2783, 0
        %2820 = vmatpush.bf16.msra.mxu0 0
        %2821 = vmatpush.bf16.msra.mxu0 0
        %2822 = vmatpush.bf16.msra.mxu0 0
        %2823 = vmatpush.bf16.msra.mxu0 0
        %2824 = vmatpush.bf16.msra.mxu0 0
        %2825 = vmatpush.bf16.msra.mxu0 0
        %2826 = vmatpush.bf16.msra.mxu0 %v2793
        %2827 = vmatpush.bf16.msra.mxu0 %v2792
        %2828 = vmatmul.bf16.gmra.mxu0 %v2797
        %v2829 = vpop.f32.mrf.mxu0
        %v2830 = vadd.f32 0.0, %v2829
        %v2831 = vpop.f32.mrf.mxu0
        %v2832 = vadd.f32 0.0, %v2831
        %2833 = vmatmul.bf16.gmra.mxu0 %v2800
        %v2834 = vpop.f32.mrf.mxu0
        %v2835 = vadd.f32 0.0, %v2834
        %v2836 = vpop.f32.mrf.mxu0
        %v2837 = vadd.f32 0.0, %v2836
        %2838 = vmatmul.bf16.gmra.mxu0 %v2803
        %v2839 = vpop.f32.mrf.mxu0
        %v2840 = vadd.f32 0.0, %v2839
        %v2841 = vpop.f32.mrf.mxu0
        %v2842 = vadd.f32 0.0, %v2841
        %2843 = vmatmul.bf16.gmra.mxu0 %v2806
        %v2844 = vpop.f32.mrf.mxu0
        %v2845 = vadd.f32 0.0, %v2844
        %v2846 = vpop.f32.mrf.mxu0
        %v2847 = vadd.f32 0.0, %v2846
        %2848 = vmatmul.bf16.gmra.mxu0 %v2809
        %v2849 = vpop.f32.mrf.mxu0
        %v2850 = vadd.f32 0.0, %v2849
        %v2851 = vpop.f32.mrf.mxu0
        %v2852 = vadd.f32 0.0, %v2851
        %2853 = vmatmul.bf16.gmra.mxu0 %v2812
        %v2854 = vpop.f32.mrf.mxu0
        %v2855 = vadd.f32 0.0, %v2854
        %v2856 = vpop.f32.mrf.mxu0
        %v2857 = vadd.f32 0.0, %v2856
        %2858 = vmatmul.bf16.gmra.mxu0 %v2815
        %v2859 = vpop.f32.mrf.mxu0
        %v2860 = vadd.f32 0.0, %v2859
        %v2861 = vpop.f32.mrf.mxu0
        %v2862 = vadd.f32 0.0, %v2861
        %2863 = vmatmul.bf16.gmra.mxu0 %v2818
        %v2864 = vpop.f32.mrf.mxu0
        %v2865 = vadd.f32 0.0, %v2864
        %v2866 = vpop.f32.mrf.mxu0
        %v2867 = vadd.f32 0.0, %v2866
        %2868 = vdwg.mxu0
        %v2869 = vadd.f32 %v2700, %v2830
        %v2870 = vadd.f32 %v2702, %v2832
        %v2871 = vadd.f32 %v2705, %v2835
        %v2872 = vadd.f32 %v2707, %v2837
        %v2873 = vadd.f32 %v2710, %v2840
        %v2874 = vadd.f32 %v2712, %v2842
        %v2875 = vadd.f32 %v2715, %v2845
        %v2876 = vadd.f32 %v2717, %v2847
        %v2877 = vadd.f32 %v2720, %v2850
        %v2878 = vadd.f32 %v2722, %v2852
        %v2879 = vadd.f32 %v2725, %v2855
        %v2880 = vadd.f32 %v2727, %v2857
        %v2881 = vadd.f32 %v2730, %v2860
        %v2882 = vadd.f32 %v2732, %v2862
        %v2883 = vadd.f32 %v2735, %v2865
        %v2884 = vadd.f32 %v2737, %v2867
        %s2885 = scalar_lea.vmem %s3, 48
        %v2886 = vld [vmem:[%s2885] sm:$0xf]
        %v2887 = vld [vmem:[%s2885 + $0x4] sm:$0xf]
        %v2888 = vld [vmem:[%s2885 + $0x8] sm:$0xf]
        %v2889 = vld [vmem:[%s2885 + $0xc] sm:$0xf]
        %v2906 = vunpack.c.l.b16 %v2464
        %v2907 = vunpack.c.l.b16 %v2465
        %v2908 = vunpack.c.l.b16 %v2466
        %v2909 = vunpack.c.l.b16 %v2467
        %v2910 = vunpack.c.l.b16 %v2468
        %v2911 = vunpack.c.l.b16 %v2469
        %v2912 = vunpack.c.l.b16 %v2470
        %v2913 = vunpack.c.l.b16 %v2471
        %v2914 = vunpack.c.l.b16 %v2472
        %v2915 = vunpack.c.l.b16 %v2473
        %v2916 = vunpack.c.l.b16 %v2474
        %v2917 = vunpack.c.l.b16 %v2475
        %v2918 = vunpack.c.l.b16 %v2476
        %v2919 = vunpack.c.l.b16 %v2477
        %v2920 = vunpack.c.l.b16 %v2478
        %v2921 = vunpack.c.l.b16 %v2479
        %v2922 = vpack.c.b16 %v2907, %v2906
        %v2923 = vpack.c.b16 %v2909, %v2908
        %v2924 = vpack.c.b16 %v2911, %v2910
        %v2925 = vpack.c.b16 %v2913, %v2912
        %v2926 = vpack.c.b16 %v2915, %v2914
        %v2927 = vpack.c.b16 %v2917, %v2916
        %v2928 = vpack.c.b16 %v2919, %v2918
        %v2929 = vpack.c.b16 %v2921, %v2920
        %v2934 = vunpack.c.l.b16 %v2886
        %v2935 = vunpack.c.l.b16 %v2887
        %v2936 = vunpack.c.l.b16 %v2888
        %v2937 = vunpack.c.l.b16 %v2889
        %v2938 = vpack.c.b16 %v2935, %v2934
        %v2939 = vpack.c.b16 %v2937, %v2936
        %v2943 = vsel %vm567, %v2922, 0
        %v2946 = vsel %vm567, %v2923, 0
        %v2949 = vsel %vm567, %v2924, 0
        %v2952 = vsel %vm567, %v2925, 0
        %v2955 = vsel %vm567, %v2926, 0
        %v2958 = vsel %vm567, %v2927, 0
        %v2961 = vsel %vm567, %v2928, 0
        %v2964 = vsel %vm567, %v2929, 0
        %2966 = vmatpush.bf16.msra.mxu0 0
        %2967 = vmatpush.bf16.msra.mxu0 0
        %2968 = vmatpush.bf16.msra.mxu0 0
        %2969 = vmatpush.bf16.msra.mxu0 0
        %2970 = vmatpush.bf16.msra.mxu0 0
        %2971 = vmatpush.bf16.msra.mxu0 0
        %2972 = vmatpush.bf16.msra.mxu0 %v2939
        %2973 = vmatpush.bf16.msra.mxu0 %v2938
        %2974 = vmatmul.bf16.gmra.mxu0 %v2943
        %v2975 = vpop.f32.mrf.mxu0
        %v2976 = vadd.f32 0.0, %v2975
        %v2977 = vpop.f32.mrf.mxu0
        %v2978 = vadd.f32 0.0, %v2977
        %2979 = vmatmul.bf16.gmra.mxu0 %v2946
        %v2980 = vpop.f32.mrf.mxu0
        %v2981 = vadd.f32 0.0, %v2980
        %v2982 = vpop.f32.mrf.mxu0
        %v2983 = vadd.f32 0.0, %v2982
        %2984 = vmatmul.bf16.gmra.mxu0 %v2949
        %v2985 = vpop.f32.mrf.mxu0
        %v2986 = vadd.f32 0.0, %v2985
        %v2987 = vpop.f32.mrf.mxu0
        %v2988 = vadd.f32 0.0, %v2987
        %2989 = vmatmul.bf16.gmra.mxu0 %v2952
        %v2990 = vpop.f32.mrf.mxu0
        %v2991 = vadd.f32 0.0, %v2990
        %v2992 = vpop.f32.mrf.mxu0
        %v2993 = vadd.f32 0.0, %v2992
        %2994 = vmatmul.bf16.gmra.mxu0 %v2955
        %v2995 = vpop.f32.mrf.mxu0
        %v2996 = vadd.f32 0.0, %v2995
        %v2997 = vpop.f32.mrf.mxu0
        %v2998 = vadd.f32 0.0, %v2997
        %2999 = vmatmul.bf16.gmra.mxu0 %v2958
        %v3000 = vpop.f32.mrf.mxu0
        %v3001 = vadd.f32 0.0, %v3000
        %v3002 = vpop.f32.mrf.mxu0
        %v3003 = vadd.f32 0.0, %v3002
        %3004 = vmatmul.bf16.gmra.mxu0 %v2961
        %v3005 = vpop.f32.mrf.mxu0
        %v3006 = vadd.f32 0.0, %v3005
        %v3007 = vpop.f32.mrf.mxu0
        %v3008 = vadd.f32 0.0, %v3007
        %3009 = vmatmul.bf16.gmra.mxu0 %v2964
        %v3010 = vpop.f32.mrf.mxu0
        %v3011 = vadd.f32 0.0, %v3010
        %v3012 = vpop.f32.mrf.mxu0
        %v3013 = vadd.f32 0.0, %v3012
        %3014 = vdwg.mxu0
        %v3015 = vadd.f32 %v2869, %v2976
        %v3016 = vadd.f32 %v2870, %v2978
        %v3017 = vadd.f32 %v2871, %v2981
        %v3018 = vadd.f32 %v2872, %v2983
        %v3019 = vadd.f32 %v2873, %v2986
        %v3020 = vadd.f32 %v2874, %v2988
        %v3021 = vadd.f32 %v2875, %v2991
        %v3022 = vadd.f32 %v2876, %v2993
        %v3023 = vadd.f32 %v2877, %v2996
        %v3024 = vadd.f32 %v2878, %v2998
        %v3025 = vadd.f32 %v2879, %v3001
        %v3026 = vadd.f32 %v2880, %v3003
        %v3027 = vadd.f32 %v2881, %v3006
        %v3028 = vadd.f32 %v2882, %v3008
        %v3029 = vadd.f32 %v2883, %v3011
        %v3030 = vadd.f32 %v2884, %v3013
        %v3031 = vld [vmem:[%s4] sm:$0x1]
        %v3033 = vperm.slane %v3031, 0
        %v3035 = vadd.f32 %v3015, %v3033
        %v3036 = vadd.f32 %v3016, %v3033
        %v3037 = vadd.f32 %v3017, %v3033
        %v3038 = vadd.f32 %v3018, %v3033
        %v3039 = vadd.f32 %v3019, %v3033
        %v3040 = vadd.f32 %v3020, %v3033
        %v3041 = vadd.f32 %v3021, %v3033
        %v3042 = vadd.f32 %v3022, %v3033
        %v3043 = vadd.f32 %v3023, %v3033
        %v3044 = vadd.f32 %v3024, %v3033
        %v3045 = vadd.f32 %v3025, %v3033
        %v3046 = vadd.f32 %v3026, %v3033
        %v3047 = vadd.f32 %v3027, %v3033
        %v3048 = vadd.f32 %v3028, %v3033
        %v3049 = vadd.f32 %v3029, %v3033
        %v3050 = vadd.f32 %v3030, %v3033
        %3051 = vst [vmem:[%s272] sm:$0xff] %v3035
        %3052 = vst [vmem:[%s272 + $0x8] sm:$0xff] %v3036
        %3053 = vst [vmem:[%s272 + $0x10] sm:$0xff] %v3037
        %3054 = vst [vmem:[%s272 + $0x18] sm:$0xff] %v3038
        %3055 = vst [vmem:[%s272 + $0x20] sm:$0xff] %v3039
        %3056 = vst [vmem:[%s272 + $0x28] sm:$0xff] %v3040
        %3057 = vst [vmem:[%s272 + $0x30] sm:$0xff] %v3041
        %3058 = vst [vmem:[%s272 + $0x38] sm:$0xff] %v3042
        %3059 = vst [vmem:[%s272 + $0x40] sm:$0xff] %v3043
        %3060 = vst [vmem:[%s272 + $0x48] sm:$0xff] %v3044
        %3061 = vst [vmem:[%s272 + $0x50] sm:$0xff] %v3045
        %3062 = vst [vmem:[%s272 + $0x58] sm:$0xff] %v3046
        %3063 = vst [vmem:[%s272 + $0x60] sm:$0xff] %v3047
        %3064 = vst [vmem:[%s272 + $0x68] sm:$0xff] %v3048
        %3065 = vst [vmem:[%s272 + $0x70] sm:$0xff] %v3049
        %3066 = vst [vmem:[%s272 + $0x78] sm:$0xff] %v3050
        %s3067 = sand.u32 %s163, 1
        %s3068 = scalar_lea.sflag [#allocation3], %s3067
        %s3069 = sand.u32 %s163, 1
        %s3070 = smul.addr %s3069, 128
        %s3071 = scalar_lea.vmem [#allocation2], %s3070
        // Predicated region
        $region41: #{attention_forward.3} parent=39 // pred_check
          %p3072 = pneg %p173
        $region42: #{attention_forward.3} parent=39 // pred_check_branch
          %3074 = sbr.rel (%p3072) target = $region44
        $region43: #{attention_forward.3} parent=39 // pred_region
          %s3075 = smul.u32 16, %s24
          %3077 = vsyncadd %s3068, 0
          %s3078 = smul.addr %s23, 16
          %s3079 = sadd.s32 %s3075, %s3078
          %s3080 = smul.addr %s3079, 8
          %s3081 = scalar_lea.hbm %s5, %s3080
          %s3082 = sshll.u32 %s3071, 4
          %s3083 = int_to_ptr.vmem [resolvable:$true] %s3082
          %s3084 = sshll.u32 %s3081, 4
          %s3085 = int_to_ptr.hbm [resolvable:$true] %s3084
          %3090 = dma.vmem_to_hbm [thread:$0]  %s3083, 2048, %s3085, %s3068, 128, 128, 8
        $region44: #{attention_forward.3} parent=39 // pred_fallthru
          _
      $region40: #{attention_forward.3} parent=5 // pred_fallthru
        _
      %p3091 = scmp.le.s32.totalorder 2, %s14
      // Predicated region
      $region45: #{attention_forward.3} parent=5 // pred_check
        %p3092 = pneg %p3091
      $region46: #{attention_forward.3} parent=5 // pred_check_branch
        %3094 = sbr.rel (%p3092) target = $region48
      $region47: #{attention_forward.3} parent=5 // pred_region
        %s3095 = ssub.s32 %s14, 2
        // Predicated region
        $region49: #{attention_forward.3} parent=47 // pred_check
          %p3096 = pneg %p179
        $region50: #{attention_forward.3} parent=47 // pred_check_branch
          %3098 = sbr.rel (%p3096) target = $region52
        $region51: #{attention_forward.3} parent=47 // pred_region
          %s3099 = sand.u32 %s164, 1
          %s3100 = scalar_lea.sflag [#allocation3], %s3099
          %s3101 = sand.u32 %s164, 1
          %s3102 = smul.addr %s3101, 128
          %s3103 = scalar_lea.vmem [#allocation2], %s3102
          %3105 = dma.done %s3100, 2048
        $region52: #{attention_forward.3} parent=47 // pred_fallthru
          _
      $region48: #{attention_forward.3} parent=5 // pred_fallthru
        _
    $region6: #{attention_forward.3} parent=1 // loop_footer
      %s18 = sadd.s32 1, %s14
    $region7: #{attention_forward.3} parent=1 // loop_footer_branch
      %13 = sbr.rel target = $region3
    $region8: #{attention_forward.3} parent=1 // loop_exit
      _
    %3106 = vsyncpa [#allocation3], 1
    %s3107 = scalar_lea.sflag [#allocation3], 1
    %3108 = vsyncpa %s3107, 1

</llo_original>
